<compile_context>
chip_gen: v5e
topology: v5e:2x2
jax: 0.10.0
libtpu: 0.0.40
codegen_flags: <defaults>
</compile_context>

<pallas_src>
import functools

import jax
import jax.numpy as jnp
from jax import lax
from jax.experimental import pallas as pl
from jax.experimental.pallas import tpu as pltpu


# ----------------------------------------------------------------------------
# Fused kernel: one (batch_group, seq_chunk) grid cell runs `chunk_len` timesteps
# of the full net1+net2 recurrence with everything VMEM-resident.
# ----------------------------------------------------------------------------
def _fused_rnn_kernel(*refs, seq_len, chunk_len, n1_rest, n2_rest, h1_dim,
                      neg_slope, compute_dtype):
    n_w = 4 + 2 * (n1_rest + n2_rest)
    xs_ref, prev0_ref, state0_ref = refs[:3]
    w_refs = refs[3:3 + n_w]
    ys_ref, prev_out_ref, state_out_ref = refs[3 + n_w:6 + n_w]
    prev_sc, state_sc = refs[6 + n_w:]

    c = pl.program_id(1)                     # sequence-chunk index ("arbitrary")

    @pl.when(c == 0)
    def _init():
        prev_sc[...] = prev0_ref[...]
        state_sc[...] = state0_ref[...]

    # ---- Hoist all weight/bias loads out of the time loop (loop-invariant). ----
    wx = w_refs[0][...]                      # (inputs,  h1+h2)  bf16
    wp = w_refs[1][...]                      # (outputs, h1+h2)  bf16
    ws = w_refs[2][...]                      # (state,   h1+h2)  bf16
    bc = w_refs[3][...]                      # (1, h1+h2)        f32
    pos = 4
    net1_rest = []
    for _ in range(n1_rest):
        net1_rest.append((w_refs[pos][...], w_refs[pos + 1][...]))
        pos += 2
    net2_rest = []
    for _ in range(n2_rest):
        net2_rest.append((w_refs[pos][...], w_refs[pos + 1][...]))
        pos += 2

    def leaky(h):
        return jnp.where(h >= 0, h, neg_slope * h)

    def run_rest(h, rest):
        n = len(rest)
        for i, (w, b) in enumerate(rest):
            h = jnp.dot(h.astype(compute_dtype), w,
                        preferred_element_type=jnp.float32) + b
            if i != n - 1:                   # no activation after the last layer
                h = leaky(h)
        return h

    def step(t, carry):
        prev, state = carry                  # f32 carries
        x = xs_ref[t]                        # (B, inputs), compute_dtype
        # Fused first layers of net1 & net2: inpt@[W01||W02] == 3 dots, no concat.
        h = (jnp.dot(x, wx, preferred_element_type=jnp.float32)
             + jnp.dot(prev.astype(compute_dtype), wp,
                       preferred_element_type=jnp.float32)
             + jnp.dot(state.astype(compute_dtype), ws,
                       preferred_element_type=jnp.float32)
             + bc)
        h1 = h[:, :h1_dim]                   # net1 first hidden
        h2 = h[:, h1_dim:]                   # net2 first hidden
        if n1_rest > 0:
            h1 = leaky(h1)
        if n2_rest > 0:
            h2 = leaky(h2)
        new_out = run_rest(h1, net1_rest)    # (B, outputs)  f32
        new_state = run_rest(h2, net2_rest)  # (B, state)    f32

        ys_ref[t] = new_out.astype(ys_ref.dtype)

        # Padded tail steps (beyond the true seq_len) must not touch the carries.
        valid = (c * chunk_len + t) < seq_len
        prev = jnp.where(valid, new_out, prev)
        state = jnp.where(valid, new_state, state)
        return prev, state

    prev_f, state_f = lax.fori_loop(
        0, chunk_len, step, (prev_sc[...], state_sc[...]),
        unroll=min(chunk_len, 8))

    prev_sc[...] = prev_f
    state_sc[...] = state_f

    @pl.when(c == pl.num_programs(1) - 1)
    def _finalize():
        prev_out_ref[...] = prev_f.astype(prev_out_ref.dtype)
        state_out_ref[...] = state_f.astype(state_out_ref.dtype)


# ----------------------------------------------------------------------------
# Jitted wrapper: one pallas_call per (batched) sequence.
#   xs:     (SEQ, B, inputs)   prev0: (B, outputs)   state0: (B, state)
# ----------------------------------------------------------------------------
@functools.partial(jax.jit,
                   static_argnames=("num_batch_groups", "chunk_size",
                                    "compute_dtype"))
def rnn_forward_sequence(xs, prev0, state0, net1_params, net2_params, *,
                         num_batch_groups=1, chunk_size=256,
                         compute_dtype=jnp.bfloat16):
    seq_len, batch, n_inputs = xs.shape
    outputs = prev0.shape[-1]
    state_size = state0.shape[-1]
    assert batch % num_batch_groups == 0
    b_group = batch // num_batch_groups

    # Sequence chunking (streams xs/ys through VMEM instead of whole-array residency).
    chunk_len = min(seq_len, chunk_size)
    num_chunks = pl.cdiv(seq_len, chunk_len)
    seq_pad = num_chunks * chunk_len
    if seq_pad != seq_len:
        xs = jnp.pad(xs, ((0, seq_pad - seq_len), (0, 0), (0, 0)))

    cdt = compute_dtype
    h1_dim = net1_params[0][0].shape[1]

    # Split each net's first-layer weight into x / prev / state row-blocks and fuse
    # net1+net2 first layers by concatenating along the output dim.
    def first_blocks(params):
        w0, b0 = params[0]
        return (w0[:n_inputs],
                w0[n_inputs:n_inputs + outputs],
                w0[n_inputs + outputs:],
                b0)

    wx1, wp1, ws1, b1 = first_blocks(net1_params)
    wx2, wp2, ws2, b2 = first_blocks(net2_params)
    weight_ops = [
        jnp.concatenate([wx1, wx2], axis=1).astype(cdt),
        jnp.concatenate([wp1, wp2], axis=1).astype(cdt),
        jnp.concatenate([ws1, ws2], axis=1).astype(cdt),
        jnp.concatenate([b1, b2], axis=1).astype(jnp.float32),
    ]
    for w, b in net1_params[1:]:
        weight_ops += [w.astype(cdt), b.astype(jnp.float32)]
    for w, b in net2_params[1:]:
        weight_ops += [w.astype(cdt), b.astype(jnp.float32)]

    operands = [xs.astype(cdt),
                prev0.astype(jnp.float32),
                state0.astype(jnp.float32)] + weight_ops

    kernel = functools.partial(
        _fused_rnn_kernel,
        seq_len=seq_len, chunk_len=chunk_len,
        n1_rest=len(net1_params) - 1, n2_rest=len(net2_params) - 1,
        h1_dim=h1_dim, neg_slope=0.01, compute_dtype=cdt)

    in_specs = [
        pl.BlockSpec((chunk_len, b_group, n_inputs), lambda b, c: (c, b, 0)),
        pl.BlockSpec((b_group, outputs), lambda b, c: (b, 0)),
        pl.BlockSpec((b_group, state_size), lambda b, c: (b, 0)),
    ] + [pl.BlockSpec(w.shape, lambda b, c: (0, 0)) for w in weight_ops]

    out_specs = (
        pl.BlockSpec((chunk_len, b_group, outputs), lambda b, c: (c, b, 0)),
        pl.BlockSpec((b_group, outputs), lambda b, c: (b, 0)),
        pl.BlockSpec((b_group, state_size), lambda b, c: (b, 0)),
    )
    out_shape = (
        jax.ShapeDtypeStruct((seq_pad, batch, outputs), jnp.float32),
        jax.ShapeDtypeStruct((batch, outputs), jnp.float32),
        jax.ShapeDtypeStruct((batch, state_size), jnp.float32),
    )

    # Explicit VMEM budget (headroom for (8,128) padding + double-buffering),
    # clamped below v7x's 64 MiB physical VMEM.
    cdt_bytes = jnp.dtype(cdt).itemsize
    vmem_est = (2 * chunk_len * b_group * (n_inputs * cdt_bytes + outputs * 4)
                + 2 * sum(int(w.size) * jnp.dtype(w.dtype).itemsize
                          for w in weight_ops)
                + 4 * b_group * (outputs + state_size) * 4)
    vmem_limit = int(min(48 * 2 ** 20, max(4 * vmem_est, 16 * 2 ** 20)))

    ys, prev_f, state_f = pl.pallas_call(
        kernel,
        out_shape=out_shape,
        grid=(num_batch_groups, num_chunks),
        in_specs=in_specs,
        out_specs=out_specs,
        scratch_shapes=[pltpu.VMEM((b_group, outputs), jnp.float32),
                        pltpu.VMEM((b_group, state_size), jnp.float32)],
        compiler_params=pltpu.CompilerParams(
            dimension_semantics=("parallel", "arbitrary"),
            vmem_limit_bytes=vmem_limit),
    )(*operands)

    if seq_pad != seq_len:
        ys = ys[:seq_len]
    return ys, prev_f, state_f


# ----------------------------------------------------------------------------
# Parameter init (PyTorch-Linear-style uniform(-1/sqrt(fan_in), +1/sqrt(fan_in)))
# Weights stored (in_dim, out_dim) so y = x @ W + b; biases stored (1, out_dim).
# ----------------------------------------------------------------------------
def init_mlp(key, topology):
    params = []
    for i in range(len(topology) - 1):
        key, kw, kb = jax.random.split(key, 3)
        in_dim, out_dim = topology[i], topology[i + 1]
        bound = 1.0 / (in_dim ** 0.5)
        w = jax.random.uniform(kw, (in_dim, out_dim), jnp.float32, -bound, bound)
        b = jax.random.uniform(kb, (1, out_dim), jnp.float32, -bound, bound)
        params.append((w, b))
    return params, key


# ----------------------------------------------------------------------------
# RNN module mirroring the PyTorch class semantics (single sequence, B = 1).
# ----------------------------------------------------------------------------
class RNNPallas:
    def __init__(self, inputs, outputs, inner_state_size,
                 net1_inner_topology, net2_inner_topology, key):
        self.inputs = inputs
        self.outputs = outputs
        self.inner_state_size = inner_state_size
        d_in = inputs + outputs + inner_state_size
        net1_topo = [d_in] + list(net1_inner_topology) + [outputs]
        # NOTE: matches the PyTorch code exactly — net2 reuses the *extended* net1
        # topology; the net2_inner_topology argument is accepted but ignored there too.
        net2_topo = [d_in] + net1_topo + [inner_state_size]
        self.net1_params, key = init_mlp(key, net1_topo)
        self.net2_params, key = init_mlp(key, net2_topo)
        self.state = jnp.zeros((1, inner_state_size), jnp.float32)
        self.prev_output = jnp.zeros((1, outputs), jnp.float32)

    def forward_sequence(self, xs):
        """Process a whole (SEQ, inputs) sequence in ONE fused Pallas kernel."""
        ys, prev_f, state_f = rnn_forward_sequence(
            xs.reshape(xs.shape[0], 1, -1), self.prev_output, self.state,
            self.net1_params, self.net2_params)
        self.prev_output = prev_f
        self.state = state_f
        return ys[:, 0, :]

    def forward(self, x):
        """Single-step forward (same signature/semantics as the PyTorch module)."""
        ys = self.forward_sequence(x.reshape(1, -1))
        return ys[0]

    def clean(self):
        self.state = self.state * 0
        self.prev_output = self.prev_output * 0


# ----------------------------------------------------------------------------
# Pure-JAX reference (no Pallas) emulating the same bf16 rounding as the kernel.
# Operates on batched inputs: xs (SEQ, B, inputs), prev0 (B, outputs), state0 (B, S).
# ----------------------------------------------------------------------------
def reference_forward_sequence(xs, prev0, state0, net1_params, net2_params,
                               neg_slope=0.01, compute_dtype=jnp.bfloat16):
    cdt = compute_dtype

    def mlp(params, v):
        h = v
        n = len(params)
        for i, (w, b) in enumerate(params):
            h = (jnp.dot(h.astype(cdt), w.astype(cdt),
                         preferred_element_type=jnp.float32)
                 + b.astype(jnp.float32))
            if i != n - 1:
                h = jnp.where(h >= 0, h, neg_slope * h)
        return h

    prev = prev0.astype(jnp.float32)
    state = state0.astype(jnp.float32)
    ys = []
    for t in range(xs.shape[0]):
        x = xs[t].astype(cdt).astype(jnp.float32)    # same input rounding as kernel
        inpt = jnp.concatenate([x, prev, state], axis=-1)
        new_state = mlp(net2_params, inpt)
        new_out = mlp(net1_params, inpt)
        prev, state = new_out, new_state
        ys.append(new_out)
    return jnp.stack(ys), prev, state


# ----------------------------------------------------------------------------
# Demo
# ----------------------------------------------------------------------------
if __name__ == "__main__":
    key = jax.random.PRNGKey(0)
    key, pkey, xkey = jax.random.split(key, 3)

    INPUTS, OUTPUTS, STATE = 4, 3, 5
    NET1_INNER = [16, 8]
    NET2_INNER = [16, 8]       # ignored, exactly like the reference PyTorch module
    SEQ, BATCH = 8, 16

    rnn = RNNPallas(INPUTS, OUTPUTS, STATE, NET1_INNER, NET2_INNER, pkey)

    # ---- Batched path: BATCH independent sequences in one fused kernel ----
    xs_b = jax.random.normal(xkey, (SEQ, BATCH, INPUTS), jnp.float32)
    prev0 = jnp.zeros((BATCH, OUTPUTS), jnp.float32)
    state0 = jnp.zeros((BATCH, STATE), jnp.float32)

    ys_b, prev_b, state_b = rnn_forward_sequence(
        xs_b, prev0, state0, rnn.net1_params, rnn.net2_params,
        num_batch_groups=2)    # "parallel" grid axis (dual-TC on v7x, harmless elsewhere)
    ys_b = jax.block_until_ready(ys_b)

    ys_ref, prev_ref, state_ref = reference_forward_sequence(
        xs_b, prev0, state0, rnn.net1_params, rnn.net2_params)

    assert ys_b.shape == (SEQ, BATCH, OUTPUTS)
    assert jnp.allclose(ys_b, ys_ref, rtol=1e-2, atol=1e-3)
    assert jnp.allclose(prev_b, prev_ref, rtol=1e-2, atol=1e-3)
    assert jnp.allclose(state_b, state_ref, rtol=1e-2, atol=1e-3)

    # ---- Module-style single-sequence interface (B = 1), fresh zero state ----
    xs_1 = xs_b[:, 0, :]
    ys_1 = rnn.forward_sequence(xs_1)
    ys_1 = jax.block_until_ready(ys_1)
    assert ys_1.shape == (SEQ, OUTPUTS)
    assert jnp.allclose(ys_1, ys_ref[:, 0, :], rtol=1e-2, atol=1e-3)
    assert jnp.allclose(rnn.prev_output, prev_ref[0:1], rtol=1e-2, atol=1e-3)
    assert jnp.allclose(rnn.state, state_ref[0:1], rtol=1e-2, atol=1e-3)

    # Single-step forward (original PyTorch-style interface), continuing from the
    # carried state.
    out = rnn.forward(xs_1[0])
    out = jax.block_until_ready(out)
    assert out.shape == (OUTPUTS,)

    print("KERNEL_OK")
</pallas_src>

<mosaic_0001>
module attributes {stable_mosaic.version = 11 : i64} {
  func.func @_fused_rnn_kernel(%arg0: i32, %arg1: i32, %arg2: memref<8x8x4xbf16, #tpu.memory_space<vmem>>, %arg3: memref<8x3xf32, #tpu.memory_space<vmem>>, %arg4: memref<8x5xf32, #tpu.memory_space<vmem>>, %arg5: memref<4x28xbf16, #tpu.memory_space<vmem>>, %arg6: memref<3x28xbf16, #tpu.memory_space<vmem>>, %arg7: memref<5x28xbf16, #tpu.memory_space<vmem>>, %arg8: memref<1x28xf32, #tpu.memory_space<vmem>>, %arg9: memref<16x8xbf16, #tpu.memory_space<vmem>>, %arg10: memref<1x8xf32, #tpu.memory_space<vmem>>, %arg11: memref<8x3xbf16, #tpu.memory_space<vmem>>, %arg12: memref<1x3xf32, #tpu.memory_space<vmem>>, %arg13: memref<12x16xbf16, #tpu.memory_space<vmem>>, %arg14: memref<1x16xf32, #tpu.memory_space<vmem>>, %arg15: memref<16x8xbf16, #tpu.memory_space<vmem>>, %arg16: memref<1x8xf32, #tpu.memory_space<vmem>>, %arg17: memref<8x3xbf16, #tpu.memory_space<vmem>>, %arg18: memref<1x3xf32, #tpu.memory_space<vmem>>, %arg19: memref<3x5xbf16, #tpu.memory_space<vmem>>, %arg20: memref<1x5xf32, #tpu.memory_space<vmem>>, %arg21: memref<8x8x3xf32, #tpu.memory_space<vmem>>, %arg22: memref<8x3xf32, #tpu.memory_space<vmem>>, %arg23: memref<8x5xf32, #tpu.memory_space<vmem>>, %arg24: memref<8x3xf32, #tpu.memory_space<vmem>>, %arg25: memref<8x5xf32, #tpu.memory_space<vmem>>) attributes {dimension_semantics = [#tpu.dimension_semantics<parallel>, #tpu.dimension_semantics<arbitrary>], iteration_bounds = array<i64: 2, 1>, scalar_prefetch = 0 : i64, scratch_operands = 2 : i64, tpu.core_type = #tpu.core_type<tc>, window_params = [{transform_indices = @transform_0, window_bounds = array<i64: 8, 8, 4>}, {transform_indices = @transform_1, window_bounds = array<i64: 8, 3>}, {transform_indices = @transform_2, window_bounds = array<i64: 8, 5>}, {pipeline_mode = #tpu.pipeline_mode<synchronous>, transform_indices = @transform_3, window_bounds = array<i64: 4, 28>}, {pipeline_mode = #tpu.pipeline_mode<synchronous>, transform_indices = @transform_4, window_bounds = array<i64: 3, 28>}, {pipeline_mode = #tpu.pipeline_mode<synchronous>, transform_indices = @transform_5, window_bounds = array<i64: 5, 28>}, {pipeline_mode = #tpu.pipeline_mode<synchronous>, transform_indices = @transform_6, window_bounds = array<i64: 1, 28>}, {pipeline_mode = #tpu.pipeline_mode<synchronous>, transform_indices = @transform_7, window_bounds = array<i64: 16, 8>}, {pipeline_mode = #tpu.pipeline_mode<synchronous>, transform_indices = @transform_8, window_bounds = array<i64: 1, 8>}, {pipeline_mode = #tpu.pipeline_mode<synchronous>, transform_indices = @transform_9, window_bounds = array<i64: 8, 3>}, {pipeline_mode = #tpu.pipeline_mode<synchronous>, transform_indices = @transform_10, window_bounds = array<i64: 1, 3>}, {pipeline_mode = #tpu.pipeline_mode<synchronous>, transform_indices = @transform_11, window_bounds = array<i64: 12, 16>}, {pipeline_mode = #tpu.pipeline_mode<synchronous>, transform_indices = @transform_12, window_bounds = array<i64: 1, 16>}, {pipeline_mode = #tpu.pipeline_mode<synchronous>, transform_indices = @transform_13, window_bounds = array<i64: 16, 8>}, {pipeline_mode = #tpu.pipeline_mode<synchronous>, transform_indices = @transform_14, window_bounds = array<i64: 1, 8>}, {pipeline_mode = #tpu.pipeline_mode<synchronous>, transform_indices = @transform_15, window_bounds = array<i64: 8, 3>}, {pipeline_mode = #tpu.pipeline_mode<synchronous>, transform_indices = @transform_16, window_bounds = array<i64: 1, 3>}, {pipeline_mode = #tpu.pipeline_mode<synchronous>, transform_indices = @transform_17, window_bounds = array<i64: 3, 5>}, {pipeline_mode = #tpu.pipeline_mode<synchronous>, transform_indices = @transform_18, window_bounds = array<i64: 1, 5>}, {transform_indices = @transform_19, window_bounds = array<i64: 8, 8, 3>}, {transform_indices = @transform_20, window_bounds = array<i64: 8, 3>}, {transform_indices = @transform_21, window_bounds = array<i64: 8, 5>}]} {
    %c0_i32 = arith.constant 0 : i32
    %0 = arith.cmpi eq, %arg1, %c0_i32 : i32
    %1 = arith.extui %0 : i1 to i32
    %c0_i32_0 = arith.constant 0 : i32
    %2 = arith.cmpi ne, %1, %c0_i32_0 : i32
    scf.if %2 {
      %c0_258 = arith.constant 0 : index
      %c0_259 = arith.constant 0 : index
      %642 = vector.load %arg3[%c0_258, %c0_259] : memref<8x3xf32, #tpu.memory_space<vmem>>, vector<8x3xf32>
      %c0_260 = arith.constant 0 : index
      %c0_261 = arith.constant 0 : index
      %643 = vector.load %arg24[%c0_260, %c0_261] : memref<8x3xf32, #tpu.memory_space<vmem>>, vector<8x3xf32>
      tpu.vector_store %arg24[%c0_260, %c0_261], %642 {strides = array<i32>} : memref<8x3xf32, #tpu.memory_space<vmem>>, vector<8x3xf32>,
      %c0_262 = arith.constant 0 : index
      %c0_263 = arith.constant 0 : index
      %644 = vector.load %arg4[%c0_262, %c0_263] : memref<8x5xf32, #tpu.memory_space<vmem>>, vector<8x5xf32>
      %c0_264 = arith.constant 0 : index
      %c0_265 = arith.constant 0 : index
      %645 = vector.load %arg25[%c0_264, %c0_265] : memref<8x5xf32, #tpu.memory_space<vmem>>, vector<8x5xf32>
      tpu.vector_store %arg25[%c0_264, %c0_265], %644 {strides = array<i32>} : memref<8x5xf32, #tpu.memory_space<vmem>>, vector<8x5xf32>,
    } else {
    }
    %c0 = arith.constant 0 : index
    %c0_1 = arith.constant 0 : index
    %3 = vector.load %arg5[%c0, %c0_1] : memref<4x28xbf16, #tpu.memory_space<vmem>>, vector<4x28xbf16>
    %c0_2 = arith.constant 0 : index
    %c0_3 = arith.constant 0 : index
    %4 = vector.load %arg6[%c0_2, %c0_3] : memref<3x28xbf16, #tpu.memory_space<vmem>>, vector<3x28xbf16>
    %c0_4 = arith.constant 0 : index
    %c0_5 = arith.constant 0 : index
    %5 = vector.load %arg7[%c0_4, %c0_5] : memref<5x28xbf16, #tpu.memory_space<vmem>>, vector<5x28xbf16>
    %c0_6 = arith.constant 0 : index
    %c0_7 = arith.constant 0 : index
    %6 = vector.load %arg8[%c0_6, %c0_7] : memref<1x28xf32, #tpu.memory_space<vmem>>, vector<1x28xf32>
    %c0_8 = arith.constant 0 : index
    %c0_9 = arith.constant 0 : index
    %7 = vector.load %arg9[%c0_8, %c0_9] : memref<16x8xbf16, #tpu.memory_space<vmem>>, vector<16x8xbf16>
    %c0_10 = arith.constant 0 : index
    %c0_11 = arith.constant 0 : index
    %8 = vector.load %arg10[%c0_10, %c0_11] : memref<1x8xf32, #tpu.memory_space<vmem>>, vector<1x8xf32>
    %c0_12 = arith.constant 0 : index
    %c0_13 = arith.constant 0 : index
    %9 = vector.load %arg11[%c0_12, %c0_13] : memref<8x3xbf16, #tpu.memory_space<vmem>>, vector<8x3xbf16>
    %c0_14 = arith.constant 0 : index
    %c0_15 = arith.constant 0 : index
    %10 = vector.load %arg12[%c0_14, %c0_15] : memref<1x3xf32, #tpu.memory_space<vmem>>, vector<1x3xf32>
    %c0_16 = arith.constant 0 : index
    %c0_17 = arith.constant 0 : index
    %11 = vector.load %arg13[%c0_16, %c0_17] : memref<12x16xbf16, #tpu.memory_space<vmem>>, vector<12x16xbf16>
    %c0_18 = arith.constant 0 : index
    %c0_19 = arith.constant 0 : index
    %12 = vector.load %arg14[%c0_18, %c0_19] : memref<1x16xf32, #tpu.memory_space<vmem>>, vector<1x16xf32>
    %c0_20 = arith.constant 0 : index
    %c0_21 = arith.constant 0 : index
    %13 = vector.load %arg15[%c0_20, %c0_21] : memref<16x8xbf16, #tpu.memory_space<vmem>>, vector<16x8xbf16>
    %c0_22 = arith.constant 0 : index
    %c0_23 = arith.constant 0 : index
    %14 = vector.load %arg16[%c0_22, %c0_23] : memref<1x8xf32, #tpu.memory_space<vmem>>, vector<1x8xf32>
    %c0_24 = arith.constant 0 : index
    %c0_25 = arith.constant 0 : index
    %15 = vector.load %arg17[%c0_24, %c0_25] : memref<8x3xbf16, #tpu.memory_space<vmem>>, vector<8x3xbf16>
    %c0_26 = arith.constant 0 : index
    %c0_27 = arith.constant 0 : index
    %16 = vector.load %arg18[%c0_26, %c0_27] : memref<1x3xf32, #tpu.memory_space<vmem>>, vector<1x3xf32>
    %c0_28 = arith.constant 0 : index
    %c0_29 = arith.constant 0 : index
    %17 = vector.load %arg19[%c0_28, %c0_29] : memref<3x5xbf16, #tpu.memory_space<vmem>>, vector<3x5xbf16>
    %c0_30 = arith.constant 0 : index
    %c0_31 = arith.constant 0 : index
    %18 = vector.load %arg20[%c0_30, %c0_31] : memref<1x5xf32, #tpu.memory_space<vmem>>, vector<1x5xf32>
    %c0_32 = arith.constant 0 : index
    %c0_33 = arith.constant 0 : index
    %19 = vector.load %arg24[%c0_32, %c0_33] : memref<8x3xf32, #tpu.memory_space<vmem>>, vector<8x3xf32>
    %c0_34 = arith.constant 0 : index
    %c0_35 = arith.constant 0 : index
    %20 = vector.load %arg25[%c0_34, %c0_35] : memref<8x5xf32, #tpu.memory_space<vmem>>, vector<8x5xf32>
    %c0_i32_36 = arith.constant 0 : i32
    %21 = arith.index_cast %c0_i32_36 : i32 to index
    %c0_37 = arith.constant 0 : index
    %c0_38 = arith.constant 0 : index
    %22 = vector.load %arg2[%21, %c0_37, %c0_38] : memref<8x8x4xbf16, #tpu.memory_space<vmem>>, vector<1x8x4xbf16>
    %23 = vector.shape_cast %22 : vector<1x8x4xbf16> to vector<8x4xbf16>
    %cst = arith.constant dense<0.000000e+00> : vector<8x28xf32>
    %24 = tpu.matmul %23, %3, %cst {dimension_numbers = #tpu.dot_dimension_numbers<[1], [0], [0], [1], [0, 0, 1, 1], [], []>} : vector<8x4xbf16>, vector<4x28xbf16>, vector<8x28xf32> -> vector<8x28xf32>
    %25 = arith.truncf %19 : vector<8x3xf32> to vector<8x3xbf16>
    %cst_39 = arith.constant dense<0.000000e+00> : vector<8x28xf32>
    %26 = tpu.matmul %25, %4, %cst_39 {dimension_numbers = #tpu.dot_dimension_numbers<[1], [0], [0], [1], [0, 0, 1, 1], [], []>} : vector<8x3xbf16>, vector<3x28xbf16>, vector<8x28xf32> -> vector<8x28xf32>
    %27 = arith.addf %24, %26 : vector<8x28xf32>
    %28 = arith.truncf %20 : vector<8x5xf32> to vector<8x5xbf16>
    %cst_40 = arith.constant dense<0.000000e+00> : vector<8x28xf32>
    %29 = tpu.matmul %28, %5, %cst_40 {dimension_numbers = #tpu.dot_dimension_numbers<[1], [0], [0], [1], [0, 0, 1, 1], [], []>} : vector<8x5xbf16>, vector<5x28xbf16>, vector<8x28xf32> -> vector<8x28xf32>
    %30 = arith.addf %27, %29 : vector<8x28xf32>
    %31 = vector.broadcast %6 : vector<1x28xf32> to vector<8x28xf32>
    %32 = arith.addf %30, %31 : vector<8x28xf32>
    %33 = vector.extract_strided_slice %32 {offsets = [0, 0], sizes = [8, 16], strides = [1, 1]} : vector<8x28xf32> to vector<8x16xf32>
    %34 = vector.extract_strided_slice %32 {offsets = [0, 16], sizes = [8, 12], strides = [1, 1]} : vector<8x28xf32> to vector<8x12xf32>
    %cst_41 = arith.constant 0.000000e+00 : f32
    %35 = vector.broadcast %cst_41 : f32 to vector<8x16xf32>
    %36 = arith.cmpf oge, %33, %35 : vector<8x16xf32>
    %cst_42 = arith.constant 0.00999999977 : f32
    %37 = vector.broadcast %cst_42 : f32 to vector<8x16xf32>
    %38 = arith.mulf %37, %33 : vector<8x16xf32>
    %39 = arith.select %36, %33, %38 : vector<8x16xi1>, vector<8x16xf32>
    %cst_43 = arith.constant 0.000000e+00 : f32
    %40 = vector.broadcast %cst_43 : f32 to vector<8x12xf32>
    %41 = arith.cmpf oge, %34, %40 : vector<8x12xf32>
    %cst_44 = arith.constant 0.00999999977 : f32
    %42 = vector.broadcast %cst_44 : f32 to vector<8x12xf32>
    %43 = arith.mulf %42, %34 : vector<8x12xf32>
    %44 = arith.select %41, %34, %43 : vector<8x12xi1>, vector<8x12xf32>
    %45 = arith.truncf %39 : vector<8x16xf32> to vector<8x16xbf16>
    %cst_45 = arith.constant dense<0.000000e+00> : vector<8x8xf32>
    %46 = tpu.matmul %45, %7, %cst_45 {dimension_numbers = #tpu.dot_dimension_numbers<[1], [0], [0], [1], [0, 0, 1, 1], [], []>} : vector<8x16xbf16>, vector<16x8xbf16>, vector<8x8xf32> -> vector<8x8xf32>
    %47 = vector.broadcast %8 : vector<1x8xf32> to vector<8x8xf32>
    %48 = arith.addf %46, %47 : vector<8x8xf32>
    %cst_46 = arith.constant 0.000000e+00 : f32
    %49 = vector.broadcast %cst_46 : f32 to vector<8x8xf32>
    %50 = arith.cmpf oge, %48, %49 : vector<8x8xf32>
    %cst_47 = arith.constant 0.00999999977 : f32
    %51 = vector.broadcast %cst_47 : f32 to vector<8x8xf32>
    %52 = arith.mulf %51, %48 : vector<8x8xf32>
    %53 = arith.select %50, %48, %52 : vector<8x8xi1>, vector<8x8xf32>
    %54 = arith.truncf %53 : vector<8x8xf32> to vector<8x8xbf16>
    %cst_48 = arith.constant dense<0.000000e+00> : vector<8x3xf32>
    %55 = tpu.matmul %54, %9, %cst_48 {dimension_numbers = #tpu.dot_dimension_numbers<[1], [0], [0], [1], [0, 0, 1, 1], [], []>} : vector<8x8xbf16>, vector<8x3xbf16>, vector<8x3xf32> -> vector<8x3xf32>
    %56 = vector.broadcast %10 : vector<1x3xf32> to vector<8x3xf32>
    %57 = arith.addf %55, %56 : vector<8x3xf32>
    %58 = arith.truncf %44 : vector<8x12xf32> to vector<8x12xbf16>
    %cst_49 = arith.constant dense<0.000000e+00> : vector<8x16xf32>
    %59 = tpu.matmul %58, %11, %cst_49 {dimension_numbers = #tpu.dot_dimension_numbers<[1], [0], [0], [1], [0, 0, 1, 1], [], []>} : vector<8x12xbf16>, vector<12x16xbf16>, vector<8x16xf32> -> vector<8x16xf32>
    %60 = vector.broadcast %12 : vector<1x16xf32> to vector<8x16xf32>
    %61 = arith.addf %59, %60 : vector<8x16xf32>
    %cst_50 = arith.constant 0.000000e+00 : f32
    %62 = vector.broadcast %cst_50 : f32 to vector<8x16xf32>
    %63 = arith.cmpf oge, %61, %62 : vector<8x16xf32>
    %cst_51 = arith.constant 0.00999999977 : f32
    %64 = vector.broadcast %cst_51 : f32 to vector<8x16xf32>
    %65 = arith.mulf %64, %61 : vector<8x16xf32>
    %66 = arith.select %63, %61, %65 : vector<8x16xi1>, vector<8x16xf32>
    %67 = arith.truncf %66 : vector<8x16xf32> to vector<8x16xbf16>
    %cst_52 = arith.constant dense<0.000000e+00> : vector<8x8xf32>
    %68 = tpu.matmul %67, %13, %cst_52 {dimension_numbers = #tpu.dot_dimension_numbers<[1], [0], [0], [1], [0, 0, 1, 1], [], []>} : vector<8x16xbf16>, vector<16x8xbf16>, vector<8x8xf32> -> vector<8x8xf32>
    %69 = vector.broadcast %14 : vector<1x8xf32> to vector<8x8xf32>
    %70 = arith.addf %68, %69 : vector<8x8xf32>
    %cst_53 = arith.constant 0.000000e+00 : f32
    %71 = vector.broadcast %cst_53 : f32 to vector<8x8xf32>
    %72 = arith.cmpf oge, %70, %71 : vector<8x8xf32>
    %cst_54 = arith.constant 0.00999999977 : f32
    %73 = vector.broadcast %cst_54 : f32 to vector<8x8xf32>
    %74 = arith.mulf %73, %70 : vector<8x8xf32>
    %75 = arith.select %72, %70, %74 : vector<8x8xi1>, vector<8x8xf32>
    %76 = arith.truncf %75 : vector<8x8xf32> to vector<8x8xbf16>
    %cst_55 = arith.constant dense<0.000000e+00> : vector<8x3xf32>
    %77 = tpu.matmul %76, %15, %cst_55 {dimension_numbers = #tpu.dot_dimension_numbers<[1], [0], [0], [1], [0, 0, 1, 1], [], []>} : vector<8x8xbf16>, vector<8x3xbf16>, vector<8x3xf32> -> vector<8x3xf32>
    %78 = vector.broadcast %16 : vector<1x3xf32> to vector<8x3xf32>
    %79 = arith.addf %77, %78 : vector<8x3xf32>
    %cst_56 = arith.constant 0.000000e+00 : f32
    %80 = vector.broadcast %cst_56 : f32 to vector<8x3xf32>
    %81 = arith.cmpf oge, %79, %80 : vector<8x3xf32>
    %cst_57 = arith.constant 0.00999999977 : f32
    %82 = vector.broadcast %cst_57 : f32 to vector<8x3xf32>
    %83 = arith.mulf %82, %79 : vector<8x3xf32>
    %84 = arith.select %81, %79, %83 : vector<8x3xi1>, vector<8x3xf32>
    %85 = arith.truncf %84 : vector<8x3xf32> to vector<8x3xbf16>
    %cst_58 = arith.constant dense<0.000000e+00> : vector<8x5xf32>
    %86 = tpu.matmul %85, %17, %cst_58 {dimension_numbers = #tpu.dot_dimension_numbers<[1], [0], [0], [1], [0, 0, 1, 1], [], []>} : vector<8x3xbf16>, vector<3x5xbf16>, vector<8x5xf32> -> vector<8x5xf32>
    %87 = vector.broadcast %18 : vector<1x5xf32> to vector<8x5xf32>
    %88 = arith.addf %86, %87 : vector<8x5xf32>
    %89 = arith.index_cast %c0_i32_36 : i32 to index
    %c0_59 = arith.constant 0 : index
    %c0_60 = arith.constant 0 : index
    %90 = vector.load %arg21[%89, %c0_59, %c0_60] : memref<8x8x3xf32, #tpu.memory_space<vmem>>, vector<1x8x3xf32>
    %91 = vector.shape_cast %90 : vector<1x8x3xf32> to vector<8x3xf32>
    %92 = vector.shape_cast %57 : vector<8x3xf32> to vector<1x8x3xf32>
    tpu.vector_store %arg21[%89, %c0_59, %c0_60], %92 {strides = array<i32>} : memref<8x8x3xf32, #tpu.memory_space<vmem>>, vector<1x8x3xf32>,
    %c8_i32 = arith.constant 8 : i32
    %93 = arith.muli %arg1, %c8_i32 : i32
    %94 = arith.addi %93, %c0_i32_36 : i32
    %c8_i32_61 = arith.constant 8 : i32
    %95 = arith.cmpi slt, %94, %c8_i32_61 : i32
    %96 = arith.select %95, %57, %19 : vector<8x3xf32>
    %97 = arith.select %95, %88, %20 : vector<8x5xf32>
    %c1_i32 = arith.constant 1 : i32
    %98 = arith.index_cast %c1_i32 : i32 to index
    %c0_62 = arith.constant 0 : index
    %c0_63 = arith.constant 0 : index
    %99 = vector.load %arg2[%98, %c0_62, %c0_63] : memref<8x8x4xbf16, #tpu.memory_space<vmem>>, vector<1x8x4xbf16>
    %100 = vector.shape_cast %99 : vector<1x8x4xbf16> to vector<8x4xbf16>
    %cst_64 = arith.constant dense<0.000000e+00> : vector<8x28xf32>
    %101 = tpu.matmul %100, %3, %cst_64 {dimension_numbers = #tpu.dot_dimension_numbers<[1], [0], [0], [1], [0, 0, 1, 1], [], []>} : vector<8x4xbf16>, vector<4x28xbf16>, vector<8x28xf32> -> vector<8x28xf32>
    %102 = arith.truncf %96 : vector<8x3xf32> to vector<8x3xbf16>
    %cst_65 = arith.constant dense<0.000000e+00> : vector<8x28xf32>
    %103 = tpu.matmul %102, %4, %cst_65 {dimension_numbers = #tpu.dot_dimension_numbers<[1], [0], [0], [1], [0, 0, 1, 1], [], []>} : vector<8x3xbf16>, vector<3x28xbf16>, vector<8x28xf32> -> vector<8x28xf32>
    %104 = arith.addf %101, %103 : vector<8x28xf32>
    %105 = arith.truncf %97 : vector<8x5xf32> to vector<8x5xbf16>
    %cst_66 = arith.constant dense<0.000000e+00> : vector<8x28xf32>
    %106 = tpu.matmul %105, %5, %cst_66 {dimension_numbers = #tpu.dot_dimension_numbers<[1], [0], [0], [1], [0, 0, 1, 1], [], []>} : vector<8x5xbf16>, vector<5x28xbf16>, vector<8x28xf32> -> vector<8x28xf32>
    %107 = arith.addf %104, %106 : vector<8x28xf32>
    %108 = vector.broadcast %6 : vector<1x28xf32> to vector<8x28xf32>
    %109 = arith.addf %107, %108 : vector<8x28xf32>
    %110 = vector.extract_strided_slice %109 {offsets = [0, 0], sizes = [8, 16], strides = [1, 1]} : vector<8x28xf32> to vector<8x16xf32>
    %111 = vector.extract_strided_slice %109 {offsets = [0, 16], sizes = [8, 12], strides = [1, 1]} : vector<8x28xf32> to vector<8x12xf32>
    %cst_67 = arith.constant 0.000000e+00 : f32
    %112 = vector.broadcast %cst_67 : f32 to vector<8x16xf32>
    %113 = arith.cmpf oge, %110, %112 : vector<8x16xf32>
    %cst_68 = arith.constant 0.00999999977 : f32
    %114 = vector.broadcast %cst_68 : f32 to vector<8x16xf32>
    %115 = arith.mulf %114, %110 : vector<8x16xf32>
    %116 = arith.select %113, %110, %115 : vector<8x16xi1>, vector<8x16xf32>
    %cst_69 = arith.constant 0.000000e+00 : f32
    %117 = vector.broadcast %cst_69 : f32 to vector<8x12xf32>
    %118 = arith.cmpf oge, %111, %117 : vector<8x12xf32>
    %cst_70 = arith.constant 0.00999999977 : f32
    %119 = vector.broadcast %cst_70 : f32 to vector<8x12xf32>
    %120 = arith.mulf %119, %111 : vector<8x12xf32>
    %121 = arith.select %118, %111, %120 : vector<8x12xi1>, vector<8x12xf32>
    %122 = arith.truncf %116 : vector<8x16xf32> to vector<8x16xbf16>
    %cst_71 = arith.constant dense<0.000000e+00> : vector<8x8xf32>
    %123 = tpu.matmul %122, %7, %cst_71 {dimension_numbers = #tpu.dot_dimension_numbers<[1], [0], [0], [1], [0, 0, 1, 1], [], []>} : vector<8x16xbf16>, vector<16x8xbf16>, vector<8x8xf32> -> vector<8x8xf32>
    %124 = vector.broadcast %8 : vector<1x8xf32> to vector<8x8xf32>
    %125 = arith.addf %123, %124 : vector<8x8xf32>
    %cst_72 = arith.constant 0.000000e+00 : f32
    %126 = vector.broadcast %cst_72 : f32 to vector<8x8xf32>
    %127 = arith.cmpf oge, %125, %126 : vector<8x8xf32>
    %cst_73 = arith.constant 0.00999999977 : f32
    %128 = vector.broadcast %cst_73 : f32 to vector<8x8xf32>
    %129 = arith.mulf %128, %125 : vector<8x8xf32>
    %130 = arith.select %127, %125, %129 : vector<8x8xi1>, vector<8x8xf32>
    %131 = arith.truncf %130 : vector<8x8xf32> to vector<8x8xbf16>
    %cst_74 = arith.constant dense<0.000000e+00> : vector<8x3xf32>
    %132 = tpu.matmul %131, %9, %cst_74 {dimension_numbers = #tpu.dot_dimension_numbers<[1], [0], [0], [1], [0, 0, 1, 1], [], []>} : vector<8x8xbf16>, vector<8x3xbf16>, vector<8x3xf32> -> vector<8x3xf32>
    %133 = vector.broadcast %10 : vector<1x3xf32> to vector<8x3xf32>
    %134 = arith.addf %132, %133 : vector<8x3xf32>
    %135 = arith.truncf %121 : vector<8x12xf32> to vector<8x12xbf16>
    %cst_75 = arith.constant dense<0.000000e+00> : vector<8x16xf32>
    %136 = tpu.matmul %135, %11, %cst_75 {dimension_numbers = #tpu.dot_dimension_numbers<[1], [0], [0], [1], [0, 0, 1, 1], [], []>} : vector<8x12xbf16>, vector<12x16xbf16>, vector<8x16xf32> -> vector<8x16xf32>
    %137 = vector.broadcast %12 : vector<1x16xf32> to vector<8x16xf32>
    %138 = arith.addf %136, %137 : vector<8x16xf32>
    %cst_76 = arith.constant 0.000000e+00 : f32
    %139 = vector.broadcast %cst_76 : f32 to vector<8x16xf32>
    %140 = arith.cmpf oge, %138, %139 : vector<8x16xf32>
    %cst_77 = arith.constant 0.00999999977 : f32
    %141 = vector.broadcast %cst_77 : f32 to vector<8x16xf32>
    %142 = arith.mulf %141, %138 : vector<8x16xf32>
    %143 = arith.select %140, %138, %142 : vector<8x16xi1>, vector<8x16xf32>
    %144 = arith.truncf %143 : vector<8x16xf32> to vector<8x16xbf16>
    %cst_78 = arith.constant dense<0.000000e+00> : vector<8x8xf32>
    %145 = tpu.matmul %144, %13, %cst_78 {dimension_numbers = #tpu.dot_dimension_numbers<[1], [0], [0], [1], [0, 0, 1, 1], [], []>} : vector<8x16xbf16>, vector<16x8xbf16>, vector<8x8xf32> -> vector<8x8xf32>
    %146 = vector.broadcast %14 : vector<1x8xf32> to vector<8x8xf32>
    %147 = arith.addf %145, %146 : vector<8x8xf32>
    %cst_79 = arith.constant 0.000000e+00 : f32
    %148 = vector.broadcast %cst_79 : f32 to vector<8x8xf32>
    %149 = arith.cmpf oge, %147, %148 : vector<8x8xf32>
    %cst_80 = arith.constant 0.00999999977 : f32
    %150 = vector.broadcast %cst_80 : f32 to vector<8x8xf32>
    %151 = arith.mulf %150, %147 : vector<8x8xf32>
    %152 = arith.select %149, %147, %151 : vector<8x8xi1>, vector<8x8xf32>
    %153 = arith.truncf %152 : vector<8x8xf32> to vector<8x8xbf16>
    %cst_81 = arith.constant dense<0.000000e+00> : vector<8x3xf32>
    %154 = tpu.matmul %153, %15, %cst_81 {dimension_numbers = #tpu.dot_dimension_numbers<[1], [0], [0], [1], [0, 0, 1, 1], [], []>} : vector<8x8xbf16>, vector<8x3xbf16>, vector<8x3xf32> -> vector<8x3xf32>
    %155 = vector.broadcast %16 : vector<1x3xf32> to vector<8x3xf32>
    %156 = arith.addf %154, %155 : vector<8x3xf32>
    %cst_82 = arith.constant 0.000000e+00 : f32
    %157 = vector.broadcast %cst_82 : f32 to vector<8x3xf32>
    %158 = arith.cmpf oge, %156, %157 : vector<8x3xf32>
    %cst_83 = arith.constant 0.00999999977 : f32
    %159 = vector.broadcast %cst_83 : f32 to vector<8x3xf32>
    %160 = arith.mulf %159, %156 : vector<8x3xf32>
    %161 = arith.select %158, %156, %160 : vector<8x3xi1>, vector<8x3xf32>
    %162 = arith.truncf %161 : vector<8x3xf32> to vector<8x3xbf16>
    %cst_84 = arith.constant dense<0.000000e+00> : vector<8x5xf32>
    %163 = tpu.matmul %162, %17, %cst_84 {dimension_numbers = #tpu.dot_dimension_numbers<[1], [0], [0], [1], [0, 0, 1, 1], [], []>} : vector<8x3xbf16>, vector<3x5xbf16>, vector<8x5xf32> -> vector<8x5xf32>
    %164 = vector.broadcast %18 : vector<1x5xf32> to vector<8x5xf32>
    %165 = arith.addf %163, %164 : vector<8x5xf32>
    %166 = arith.index_cast %c1_i32 : i32 to index
    %c0_85 = arith.constant 0 : index
    %c0_86 = arith.constant 0 : index
    %167 = vector.load %arg21[%166, %c0_85, %c0_86] : memref<8x8x3xf32, #tpu.memory_space<vmem>>, vector<1x8x3xf32>
    %168 = vector.shape_cast %167 : vector<1x8x3xf32> to vector<8x3xf32>
    %169 = vector.shape_cast %134 : vector<8x3xf32> to vector<1x8x3xf32>
    tpu.vector_store %arg21[%166, %c0_85, %c0_86], %169 {strides = array<i32>} : memref<8x8x3xf32, #tpu.memory_space<vmem>>, vector<1x8x3xf32>,
    %c8_i32_87 = arith.constant 8 : i32
    %170 = arith.muli %arg1, %c8_i32_87 : i32
    %171 = arith.addi %170, %c1_i32 : i32
    %c8_i32_88 = arith.constant 8 : i32
    %172 = arith.cmpi slt, %171, %c8_i32_88 : i32
    %173 = arith.select %172, %134, %96 : vector<8x3xf32>
    %174 = arith.select %172, %165, %97 : vector<8x5xf32>
    %c2_i32 = arith.constant 2 : i32
    %175 = arith.index_cast %c2_i32 : i32 to index
    %c0_89 = arith.constant 0 : index
    %c0_90 = arith.constant 0 : index
    %176 = vector.load %arg2[%175, %c0_89, %c0_90] : memref<8x8x4xbf16, #tpu.memory_space<vmem>>, vector<1x8x4xbf16>
    %177 = vector.shape_cast %176 : vector<1x8x4xbf16> to vector<8x4xbf16>
    %cst_91 = arith.constant dense<0.000000e+00> : vector<8x28xf32>
    %178 = tpu.matmul %177, %3, %cst_91 {dimension_numbers = #tpu.dot_dimension_numbers<[1], [0], [0], [1], [0, 0, 1, 1], [], []>} : vector<8x4xbf16>, vector<4x28xbf16>, vector<8x28xf32> -> vector<8x28xf32>
    %179 = arith.truncf %173 : vector<8x3xf32> to vector<8x3xbf16>
    %cst_92 = arith.constant dense<0.000000e+00> : vector<8x28xf32>
    %180 = tpu.matmul %179, %4, %cst_92 {dimension_numbers = #tpu.dot_dimension_numbers<[1], [0], [0], [1], [0, 0, 1, 1], [], []>} : vector<8x3xbf16>, vector<3x28xbf16>, vector<8x28xf32> -> vector<8x28xf32>
    %181 = arith.addf %178, %180 : vector<8x28xf32>
    %182 = arith.truncf %174 : vector<8x5xf32> to vector<8x5xbf16>
    %cst_93 = arith.constant dense<0.000000e+00> : vector<8x28xf32>
    %183 = tpu.matmul %182, %5, %cst_93 {dimension_numbers = #tpu.dot_dimension_numbers<[1], [0], [0], [1], [0, 0, 1, 1], [], []>} : vector<8x5xbf16>, vector<5x28xbf16>, vector<8x28xf32> -> vector<8x28xf32>
    %184 = arith.addf %181, %183 : vector<8x28xf32>
    %185 = vector.broadcast %6 : vector<1x28xf32> to vector<8x28xf32>
    %186 = arith.addf %184, %185 : vector<8x28xf32>
    %187 = vector.extract_strided_slice %186 {offsets = [0, 0], sizes = [8, 16], strides = [1, 1]} : vector<8x28xf32> to vector<8x16xf32>
    %188 = vector.extract_strided_slice %186 {offsets = [0, 16], sizes = [8, 12], strides = [1, 1]} : vector<8x28xf32> to vector<8x12xf32>
    %cst_94 = arith.constant 0.000000e+00 : f32
    %189 = vector.broadcast %cst_94 : f32 to vector<8x16xf32>
    %190 = arith.cmpf oge, %187, %189 : vector<8x16xf32>
    %cst_95 = arith.constant 0.00999999977 : f32
    %191 = vector.broadcast %cst_95 : f32 to vector<8x16xf32>
    %192 = arith.mulf %191, %187 : vector<8x16xf32>
    %193 = arith.select %190, %187, %192 : vector<8x16xi1>, vector<8x16xf32>
    %cst_96 = arith.constant 0.000000e+00 : f32
    %194 = vector.broadcast %cst_96 : f32 to vector<8x12xf32>
    %195 = arith.cmpf oge, %188, %194 : vector<8x12xf32>
    %cst_97 = arith.constant 0.00999999977 : f32
    %196 = vector.broadcast %cst_97 : f32 to vector<8x12xf32>
    %197 = arith.mulf %196, %188 : vector<8x12xf32>
    %198 = arith.select %195, %188, %197 : vector<8x12xi1>, vector<8x12xf32>
    %199 = arith.truncf %193 : vector<8x16xf32> to vector<8x16xbf16>
    %cst_98 = arith.constant dense<0.000000e+00> : vector<8x8xf32>
    %200 = tpu.matmul %199, %7, %cst_98 {dimension_numbers = #tpu.dot_dimension_numbers<[1], [0], [0], [1], [0, 0, 1, 1], [], []>} : vector<8x16xbf16>, vector<16x8xbf16>, vector<8x8xf32> -> vector<8x8xf32>
    %201 = vector.broadcast %8 : vector<1x8xf32> to vector<8x8xf32>
    %202 = arith.addf %200, %201 : vector<8x8xf32>
    %cst_99 = arith.constant 0.000000e+00 : f32
    %203 = vector.broadcast %cst_99 : f32 to vector<8x8xf32>
    %204 = arith.cmpf oge, %202, %203 : vector<8x8xf32>
    %cst_100 = arith.constant 0.00999999977 : f32
    %205 = vector.broadcast %cst_100 : f32 to vector<8x8xf32>
    %206 = arith.mulf %205, %202 : vector<8x8xf32>
    %207 = arith.select %204, %202, %206 : vector<8x8xi1>, vector<8x8xf32>
    %208 = arith.truncf %207 : vector<8x8xf32> to vector<8x8xbf16>
    %cst_101 = arith.constant dense<0.000000e+00> : vector<8x3xf32>
    %209 = tpu.matmul %208, %9, %cst_101 {dimension_numbers = #tpu.dot_dimension_numbers<[1], [0], [0], [1], [0, 0, 1, 1], [], []>} : vector<8x8xbf16>, vector<8x3xbf16>, vector<8x3xf32> -> vector<8x3xf32>
    %210 = vector.broadcast %10 : vector<1x3xf32> to vector<8x3xf32>
    %211 = arith.addf %209, %210 : vector<8x3xf32>
    %212 = arith.truncf %198 : vector<8x12xf32> to vector<8x12xbf16>
    %cst_102 = arith.constant dense<0.000000e+00> : vector<8x16xf32>
    %213 = tpu.matmul %212, %11, %cst_102 {dimension_numbers = #tpu.dot_dimension_numbers<[1], [0], [0], [1], [0, 0, 1, 1], [], []>} : vector<8x12xbf16>, vector<12x16xbf16>, vector<8x16xf32> -> vector<8x16xf32>
    %214 = vector.broadcast %12 : vector<1x16xf32> to vector<8x16xf32>
    %215 = arith.addf %213, %214 : vector<8x16xf32>
    %cst_103 = arith.constant 0.000000e+00 : f32
    %216 = vector.broadcast %cst_103 : f32 to vector<8x16xf32>
    %217 = arith.cmpf oge, %215, %216 : vector<8x16xf32>
    %cst_104 = arith.constant 0.00999999977 : f32
    %218 = vector.broadcast %cst_104 : f32 to vector<8x16xf32>
    %219 = arith.mulf %218, %215 : vector<8x16xf32>
    %220 = arith.select %217, %215, %219 : vector<8x16xi1>, vector<8x16xf32>
    %221 = arith.truncf %220 : vector<8x16xf32> to vector<8x16xbf16>
    %cst_105 = arith.constant dense<0.000000e+00> : vector<8x8xf32>
    %222 = tpu.matmul %221, %13, %cst_105 {dimension_numbers = #tpu.dot_dimension_numbers<[1], [0], [0], [1], [0, 0, 1, 1], [], []>} : vector<8x16xbf16>, vector<16x8xbf16>, vector<8x8xf32> -> vector<8x8xf32>
    %223 = vector.broadcast %14 : vector<1x8xf32> to vector<8x8xf32>
    %224 = arith.addf %222, %223 : vector<8x8xf32>
    %cst_106 = arith.constant 0.000000e+00 : f32
    %225 = vector.broadcast %cst_106 : f32 to vector<8x8xf32>
    %226 = arith.cmpf oge, %224, %225 : vector<8x8xf32>
    %cst_107 = arith.constant 0.00999999977 : f32
    %227 = vector.broadcast %cst_107 : f32 to vector<8x8xf32>
    %228 = arith.mulf %227, %224 : vector<8x8xf32>
    %229 = arith.select %226, %224, %228 : vector<8x8xi1>, vector<8x8xf32>
    %230 = arith.truncf %229 : vector<8x8xf32> to vector<8x8xbf16>
    %cst_108 = arith.constant dense<0.000000e+00> : vector<8x3xf32>
    %231 = tpu.matmul %230, %15, %cst_108 {dimension_numbers = #tpu.dot_dimension_numbers<[1], [0], [0], [1], [0, 0, 1, 1], [], []>} : vector<8x8xbf16>, vector<8x3xbf16>, vector<8x3xf32> -> vector<8x3xf32>
    %232 = vector.broadcast %16 : vector<1x3xf32> to vector<8x3xf32>
    %233 = arith.addf %231, %232 : vector<8x3xf32>
    %cst_109 = arith.constant 0.000000e+00 : f32
    %234 = vector.broadcast %cst_109 : f32 to vector<8x3xf32>
    %235 = arith.cmpf oge, %233, %234 : vector<8x3xf32>
    %cst_110 = arith.constant 0.00999999977 : f32
    %236 = vector.broadcast %cst_110 : f32 to vector<8x3xf32>
    %237 = arith.mulf %236, %233 : vector<8x3xf32>
    %238 = arith.select %235, %233, %237 : vector<8x3xi1>, vector<8x3xf32>
    %239 = arith.truncf %238 : vector<8x3xf32> to vector<8x3xbf16>
    %cst_111 = arith.constant dense<0.000000e+00> : vector<8x5xf32>
    %240 = tpu.matmul %239, %17, %cst_111 {dimension_numbers = #tpu.dot_dimension_numbers<[1], [0], [0], [1], [0, 0, 1, 1], [], []>} : vector<8x3xbf16>, vector<3x5xbf16>, vector<8x5xf32> -> vector<8x5xf32>
    %241 = vector.broadcast %18 : vector<1x5xf32> to vector<8x5xf32>
    %242 = arith.addf %240, %241 : vector<8x5xf32>
    %243 = arith.index_cast %c2_i32 : i32 to index
    %c0_112 = arith.constant 0 : index
    %c0_113 = arith.constant 0 : index
    %244 = vector.load %arg21[%243, %c0_112, %c0_113] : memref<8x8x3xf32, #tpu.memory_space<vmem>>, vector<1x8x3xf32>
    %245 = vector.shape_cast %244 : vector<1x8x3xf32> to vector<8x3xf32>
    %246 = vector.shape_cast %211 : vector<8x3xf32> to vector<1x8x3xf32>
    tpu.vector_store %arg21[%243, %c0_112, %c0_113], %246 {strides = array<i32>} : memref<8x8x3xf32, #tpu.memory_space<vmem>>, vector<1x8x3xf32>,
    %c8_i32_114 = arith.constant 8 : i32
    %247 = arith.muli %arg1, %c8_i32_114 : i32
    %248 = arith.addi %247, %c2_i32 : i32
    %c8_i32_115 = arith.constant 8 : i32
    %249 = arith.cmpi slt, %248, %c8_i32_115 : i32
    %250 = arith.select %249, %211, %173 : vector<8x3xf32>
    %251 = arith.select %249, %242, %174 : vector<8x5xf32>
    %c3_i32 = arith.constant 3 : i32
    %252 = arith.index_cast %c3_i32 : i32 to index
    %c0_116 = arith.constant 0 : index
    %c0_117 = arith.constant 0 : index
    %253 = vector.load %arg2[%252, %c0_116, %c0_117] : memref<8x8x4xbf16, #tpu.memory_space<vmem>>, vector<1x8x4xbf16>
    %254 = vector.shape_cast %253 : vector<1x8x4xbf16> to vector<8x4xbf16>
    %cst_118 = arith.constant dense<0.000000e+00> : vector<8x28xf32>
    %255 = tpu.matmul %254, %3, %cst_118 {dimension_numbers = #tpu.dot_dimension_numbers<[1], [0], [0], [1], [0, 0, 1, 1], [], []>} : vector<8x4xbf16>, vector<4x28xbf16>, vector<8x28xf32> -> vector<8x28xf32>
    %256 = arith.truncf %250 : vector<8x3xf32> to vector<8x3xbf16>
    %cst_119 = arith.constant dense<0.000000e+00> : vector<8x28xf32>
    %257 = tpu.matmul %256, %4, %cst_119 {dimension_numbers = #tpu.dot_dimension_numbers<[1], [0], [0], [1], [0, 0, 1, 1], [], []>} : vector<8x3xbf16>, vector<3x28xbf16>, vector<8x28xf32> -> vector<8x28xf32>
    %258 = arith.addf %255, %257 : vector<8x28xf32>
    %259 = arith.truncf %251 : vector<8x5xf32> to vector<8x5xbf16>
    %cst_120 = arith.constant dense<0.000000e+00> : vector<8x28xf32>
    %260 = tpu.matmul %259, %5, %cst_120 {dimension_numbers = #tpu.dot_dimension_numbers<[1], [0], [0], [1], [0, 0, 1, 1], [], []>} : vector<8x5xbf16>, vector<5x28xbf16>, vector<8x28xf32> -> vector<8x28xf32>
    %261 = arith.addf %258, %260 : vector<8x28xf32>
    %262 = vector.broadcast %6 : vector<1x28xf32> to vector<8x28xf32>
    %263 = arith.addf %261, %262 : vector<8x28xf32>
    %264 = vector.extract_strided_slice %263 {offsets = [0, 0], sizes = [8, 16], strides = [1, 1]} : vector<8x28xf32> to vector<8x16xf32>
    %265 = vector.extract_strided_slice %263 {offsets = [0, 16], sizes = [8, 12], strides = [1, 1]} : vector<8x28xf32> to vector<8x12xf32>
    %cst_121 = arith.constant 0.000000e+00 : f32
    %266 = vector.broadcast %cst_121 : f32 to vector<8x16xf32>
    %267 = arith.cmpf oge, %264, %266 : vector<8x16xf32>
    %cst_122 = arith.constant 0.00999999977 : f32
    %268 = vector.broadcast %cst_122 : f32 to vector<8x16xf32>
    %269 = arith.mulf %268, %264 : vector<8x16xf32>
    %270 = arith.select %267, %264, %269 : vector<8x16xi1>, vector<8x16xf32>
    %cst_123 = arith.constant 0.000000e+00 : f32
    %271 = vector.broadcast %cst_123 : f32 to vector<8x12xf32>
    %272 = arith.cmpf oge, %265, %271 : vector<8x12xf32>
    %cst_124 = arith.constant 0.00999999977 : f32
    %273 = vector.broadcast %cst_124 : f32 to vector<8x12xf32>
    %274 = arith.mulf %273, %265 : vector<8x12xf32>
    %275 = arith.select %272, %265, %274 : vector<8x12xi1>, vector<8x12xf32>
    %276 = arith.truncf %270 : vector<8x16xf32> to vector<8x16xbf16>
    %cst_125 = arith.constant dense<0.000000e+00> : vector<8x8xf32>
    %277 = tpu.matmul %276, %7, %cst_125 {dimension_numbers = #tpu.dot_dimension_numbers<[1], [0], [0], [1], [0, 0, 1, 1], [], []>} : vector<8x16xbf16>, vector<16x8xbf16>, vector<8x8xf32> -> vector<8x8xf32>
    %278 = vector.broadcast %8 : vector<1x8xf32> to vector<8x8xf32>
    %279 = arith.addf %277, %278 : vector<8x8xf32>
    %cst_126 = arith.constant 0.000000e+00 : f32
    %280 = vector.broadcast %cst_126 : f32 to vector<8x8xf32>
    %281 = arith.cmpf oge, %279, %280 : vector<8x8xf32>
    %cst_127 = arith.constant 0.00999999977 : f32
    %282 = vector.broadcast %cst_127 : f32 to vector<8x8xf32>
    %283 = arith.mulf %282, %279 : vector<8x8xf32>
    %284 = arith.select %281, %279, %283 : vector<8x8xi1>, vector<8x8xf32>
    %285 = arith.truncf %284 : vector<8x8xf32> to vector<8x8xbf16>
    %cst_128 = arith.constant dense<0.000000e+00> : vector<8x3xf32>
    %286 = tpu.matmul %285, %9, %cst_128 {dimension_numbers = #tpu.dot_dimension_numbers<[1], [0], [0], [1], [0, 0, 1, 1], [], []>} : vector<8x8xbf16>, vector<8x3xbf16>, vector<8x3xf32> -> vector<8x3xf32>
    %287 = vector.broadcast %10 : vector<1x3xf32> to vector<8x3xf32>
    %288 = arith.addf %286, %287 : vector<8x3xf32>
    %289 = arith.truncf %275 : vector<8x12xf32> to vector<8x12xbf16>
    %cst_129 = arith.constant dense<0.000000e+00> : vector<8x16xf32>
    %290 = tpu.matmul %289, %11, %cst_129 {dimension_numbers = #tpu.dot_dimension_numbers<[1], [0], [0], [1], [0, 0, 1, 1], [], []>} : vector<8x12xbf16>, vector<12x16xbf16>, vector<8x16xf32> -> vector<8x16xf32>
    %291 = vector.broadcast %12 : vector<1x16xf32> to vector<8x16xf32>
    %292 = arith.addf %290, %291 : vector<8x16xf32>
    %cst_130 = arith.constant 0.000000e+00 : f32
    %293 = vector.broadcast %cst_130 : f32 to vector<8x16xf32>
    %294 = arith.cmpf oge, %292, %293 : vector<8x16xf32>
    %cst_131 = arith.constant 0.00999999977 : f32
    %295 = vector.broadcast %cst_131 : f32 to vector<8x16xf32>
    %296 = arith.mulf %295, %292 : vector<8x16xf32>
    %297 = arith.select %294, %292, %296 : vector<8x16xi1>, vector<8x16xf32>
    %298 = arith.truncf %297 : vector<8x16xf32> to vector<8x16xbf16>
    %cst_132 = arith.constant dense<0.000000e+00> : vector<8x8xf32>
    %299 = tpu.matmul %298, %13, %cst_132 {dimension_numbers = #tpu.dot_dimension_numbers<[1], [0], [0], [1], [0, 0, 1, 1], [], []>} : vector<8x16xbf16>, vector<16x8xbf16>, vector<8x8xf32> -> vector<8x8xf32>
    %300 = vector.broadcast %14 : vector<1x8xf32> to vector<8x8xf32>
    %301 = arith.addf %299, %300 : vector<8x8xf32>
    %cst_133 = arith.constant 0.000000e+00 : f32
    %302 = vector.broadcast %cst_133 : f32 to vector<8x8xf32>
    %303 = arith.cmpf oge, %301, %302 : vector<8x8xf32>
    %cst_134 = arith.constant 0.00999999977 : f32
    %304 = vector.broadcast %cst_134 : f32 to vector<8x8xf32>
    %305 = arith.mulf %304, %301 : vector<8x8xf32>
    %306 = arith.select %303, %301, %305 : vector<8x8xi1>, vector<8x8xf32>
    %307 = arith.truncf %306 : vector<8x8xf32> to vector<8x8xbf16>
    %cst_135 = arith.constant dense<0.000000e+00> : vector<8x3xf32>
    %308 = tpu.matmul %307, %15, %cst_135 {dimension_numbers = #tpu.dot_dimension_numbers<[1], [0], [0], [1], [0, 0, 1, 1], [], []>} : vector<8x8xbf16>, vector<8x3xbf16>, vector<8x3xf32> -> vector<8x3xf32>
    %309 = vector.broadcast %16 : vector<1x3xf32> to vector<8x3xf32>
    %310 = arith.addf %308, %309 : vector<8x3xf32>
    %cst_136 = arith.constant 0.000000e+00 : f32
    %311 = vector.broadcast %cst_136 : f32 to vector<8x3xf32>
    %312 = arith.cmpf oge, %310, %311 : vector<8x3xf32>
    %cst_137 = arith.constant 0.00999999977 : f32
    %313 = vector.broadcast %cst_137 : f32 to vector<8x3xf32>
    %314 = arith.mulf %313, %310 : vector<8x3xf32>
    %315 = arith.select %312, %310, %314 : vector<8x3xi1>, vector<8x3xf32>
    %316 = arith.truncf %315 : vector<8x3xf32> to vector<8x3xbf16>
    %cst_138 = arith.constant dense<0.000000e+00> : vector<8x5xf32>
    %317 = tpu.matmul %316, %17, %cst_138 {dimension_numbers = #tpu.dot_dimension_numbers<[1], [0], [0], [1], [0, 0, 1, 1], [], []>} : vector<8x3xbf16>, vector<3x5xbf16>, vector<8x5xf32> -> vector<8x5xf32>
    %318 = vector.broadcast %18 : vector<1x5xf32> to vector<8x5xf32>
    %319 = arith.addf %317, %318 : vector<8x5xf32>
    %320 = arith.index_cast %c3_i32 : i32 to index
    %c0_139 = arith.constant 0 : index
    %c0_140 = arith.constant 0 : index
    %321 = vector.load %arg21[%320, %c0_139, %c0_140] : memref<8x8x3xf32, #tpu.memory_space<vmem>>, vector<1x8x3xf32>
    %322 = vector.shape_cast %321 : vector<1x8x3xf32> to vector<8x3xf32>
    %323 = vector.shape_cast %288 : vector<8x3xf32> to vector<1x8x3xf32>
    tpu.vector_store %arg21[%320, %c0_139, %c0_140], %323 {strides = array<i32>} : memref<8x8x3xf32, #tpu.memory_space<vmem>>, vector<1x8x3xf32>,
    %c8_i32_141 = arith.constant 8 : i32
    %324 = arith.muli %arg1, %c8_i32_141 : i32
    %325 = arith.addi %324, %c3_i32 : i32
    %c8_i32_142 = arith.constant 8 : i32
    %326 = arith.cmpi slt, %325, %c8_i32_142 : i32
    %327 = arith.select %326, %288, %250 : vector<8x3xf32>
    %328 = arith.select %326, %319, %251 : vector<8x5xf32>
    %c4_i32 = arith.constant 4 : i32
    %329 = arith.index_cast %c4_i32 : i32 to index
    %c0_143 = arith.constant 0 : index
    %c0_144 = arith.constant 0 : index
    %330 = vector.load %arg2[%329, %c0_143, %c0_144] : memref<8x8x4xbf16, #tpu.memory_space<vmem>>, vector<1x8x4xbf16>
    %331 = vector.shape_cast %330 : vector<1x8x4xbf16> to vector<8x4xbf16>
    %cst_145 = arith.constant dense<0.000000e+00> : vector<8x28xf32>
    %332 = tpu.matmul %331, %3, %cst_145 {dimension_numbers = #tpu.dot_dimension_numbers<[1], [0], [0], [1], [0, 0, 1, 1], [], []>} : vector<8x4xbf16>, vector<4x28xbf16>, vector<8x28xf32> -> vector<8x28xf32>
    %333 = arith.truncf %327 : vector<8x3xf32> to vector<8x3xbf16>
    %cst_146 = arith.constant dense<0.000000e+00> : vector<8x28xf32>
    %334 = tpu.matmul %333, %4, %cst_146 {dimension_numbers = #tpu.dot_dimension_numbers<[1], [0], [0], [1], [0, 0, 1, 1], [], []>} : vector<8x3xbf16>, vector<3x28xbf16>, vector<8x28xf32> -> vector<8x28xf32>
    %335 = arith.addf %332, %334 : vector<8x28xf32>
    %336 = arith.truncf %328 : vector<8x5xf32> to vector<8x5xbf16>
    %cst_147 = arith.constant dense<0.000000e+00> : vector<8x28xf32>
    %337 = tpu.matmul %336, %5, %cst_147 {dimension_numbers = #tpu.dot_dimension_numbers<[1], [0], [0], [1], [0, 0, 1, 1], [], []>} : vector<8x5xbf16>, vector<5x28xbf16>, vector<8x28xf32> -> vector<8x28xf32>
    %338 = arith.addf %335, %337 : vector<8x28xf32>
    %339 = vector.broadcast %6 : vector<1x28xf32> to vector<8x28xf32>
    %340 = arith.addf %338, %339 : vector<8x28xf32>
    %341 = vector.extract_strided_slice %340 {offsets = [0, 0], sizes = [8, 16], strides = [1, 1]} : vector<8x28xf32> to vector<8x16xf32>
    %342 = vector.extract_strided_slice %340 {offsets = [0, 16], sizes = [8, 12], strides = [1, 1]} : vector<8x28xf32> to vector<8x12xf32>
    %cst_148 = arith.constant 0.000000e+00 : f32
    %343 = vector.broadcast %cst_148 : f32 to vector<8x16xf32>
    %344 = arith.cmpf oge, %341, %343 : vector<8x16xf32>
    %cst_149 = arith.constant 0.00999999977 : f32
    %345 = vector.broadcast %cst_149 : f32 to vector<8x16xf32>
    %346 = arith.mulf %345, %341 : vector<8x16xf32>
    %347 = arith.select %344, %341, %346 : vector<8x16xi1>, vector<8x16xf32>
    %cst_150 = arith.constant 0.000000e+00 : f32
    %348 = vector.broadcast %cst_150 : f32 to vector<8x12xf32>
    %349 = arith.cmpf oge, %342, %348 : vector<8x12xf32>
    %cst_151 = arith.constant 0.00999999977 : f32
    %350 = vector.broadcast %cst_151 : f32 to vector<8x12xf32>
    %351 = arith.mulf %350, %342 : vector<8x12xf32>
    %352 = arith.select %349, %342, %351 : vector<8x12xi1>, vector<8x12xf32>
    %353 = arith.truncf %347 : vector<8x16xf32> to vector<8x16xbf16>
    %cst_152 = arith.constant dense<0.000000e+00> : vector<8x8xf32>
    %354 = tpu.matmul %353, %7, %cst_152 {dimension_numbers = #tpu.dot_dimension_numbers<[1], [0], [0], [1], [0, 0, 1, 1], [], []>} : vector<8x16xbf16>, vector<16x8xbf16>, vector<8x8xf32> -> vector<8x8xf32>
    %355 = vector.broadcast %8 : vector<1x8xf32> to vector<8x8xf32>
    %356 = arith.addf %354, %355 : vector<8x8xf32>
    %cst_153 = arith.constant 0.000000e+00 : f32
    %357 = vector.broadcast %cst_153 : f32 to vector<8x8xf32>
    %358 = arith.cmpf oge, %356, %357 : vector<8x8xf32>
    %cst_154 = arith.constant 0.00999999977 : f32
    %359 = vector.broadcast %cst_154 : f32 to vector<8x8xf32>
    %360 = arith.mulf %359, %356 : vector<8x8xf32>
    %361 = arith.select %358, %356, %360 : vector<8x8xi1>, vector<8x8xf32>
    %362 = arith.truncf %361 : vector<8x8xf32> to vector<8x8xbf16>
    %cst_155 = arith.constant dense<0.000000e+00> : vector<8x3xf32>
    %363 = tpu.matmul %362, %9, %cst_155 {dimension_numbers = #tpu.dot_dimension_numbers<[1], [0], [0], [1], [0, 0, 1, 1], [], []>} : vector<8x8xbf16>, vector<8x3xbf16>, vector<8x3xf32> -> vector<8x3xf32>
    %364 = vector.broadcast %10 : vector<1x3xf32> to vector<8x3xf32>
    %365 = arith.addf %363, %364 : vector<8x3xf32>
    %366 = arith.truncf %352 : vector<8x12xf32> to vector<8x12xbf16>
    %cst_156 = arith.constant dense<0.000000e+00> : vector<8x16xf32>
    %367 = tpu.matmul %366, %11, %cst_156 {dimension_numbers = #tpu.dot_dimension_numbers<[1], [0], [0], [1], [0, 0, 1, 1], [], []>} : vector<8x12xbf16>, vector<12x16xbf16>, vector<8x16xf32> -> vector<8x16xf32>
    %368 = vector.broadcast %12 : vector<1x16xf32> to vector<8x16xf32>
    %369 = arith.addf %367, %368 : vector<8x16xf32>
    %cst_157 = arith.constant 0.000000e+00 : f32
    %370 = vector.broadcast %cst_157 : f32 to vector<8x16xf32>
    %371 = arith.cmpf oge, %369, %370 : vector<8x16xf32>
    %cst_158 = arith.constant 0.00999999977 : f32
    %372 = vector.broadcast %cst_158 : f32 to vector<8x16xf32>
    %373 = arith.mulf %372, %369 : vector<8x16xf32>
    %374 = arith.select %371, %369, %373 : vector<8x16xi1>, vector<8x16xf32>
    %375 = arith.truncf %374 : vector<8x16xf32> to vector<8x16xbf16>
    %cst_159 = arith.constant dense<0.000000e+00> : vector<8x8xf32>
    %376 = tpu.matmul %375, %13, %cst_159 {dimension_numbers = #tpu.dot_dimension_numbers<[1], [0], [0], [1], [0, 0, 1, 1], [], []>} : vector<8x16xbf16>, vector<16x8xbf16>, vector<8x8xf32> -> vector<8x8xf32>
    %377 = vector.broadcast %14 : vector<1x8xf32> to vector<8x8xf32>
    %378 = arith.addf %376, %377 : vector<8x8xf32>
    %cst_160 = arith.constant 0.000000e+00 : f32
    %379 = vector.broadcast %cst_160 : f32 to vector<8x8xf32>
    %380 = arith.cmpf oge, %378, %379 : vector<8x8xf32>
    %cst_161 = arith.constant 0.00999999977 : f32
    %381 = vector.broadcast %cst_161 : f32 to vector<8x8xf32>
    %382 = arith.mulf %381, %378 : vector<8x8xf32>
    %383 = arith.select %380, %378, %382 : vector<8x8xi1>, vector<8x8xf32>
    %384 = arith.truncf %383 : vector<8x8xf32> to vector<8x8xbf16>
    %cst_162 = arith.constant dense<0.000000e+00> : vector<8x3xf32>
    %385 = tpu.matmul %384, %15, %cst_162 {dimension_numbers = #tpu.dot_dimension_numbers<[1], [0], [0], [1], [0, 0, 1, 1], [], []>} : vector<8x8xbf16>, vector<8x3xbf16>, vector<8x3xf32> -> vector<8x3xf32>
    %386 = vector.broadcast %16 : vector<1x3xf32> to vector<8x3xf32>
    %387 = arith.addf %385, %386 : vector<8x3xf32>
    %cst_163 = arith.constant 0.000000e+00 : f32
    %388 = vector.broadcast %cst_163 : f32 to vector<8x3xf32>
    %389 = arith.cmpf oge, %387, %388 : vector<8x3xf32>
    %cst_164 = arith.constant 0.00999999977 : f32
    %390 = vector.broadcast %cst_164 : f32 to vector<8x3xf32>
    %391 = arith.mulf %390, %387 : vector<8x3xf32>
    %392 = arith.select %389, %387, %391 : vector<8x3xi1>, vector<8x3xf32>
    %393 = arith.truncf %392 : vector<8x3xf32> to vector<8x3xbf16>
    %cst_165 = arith.constant dense<0.000000e+00> : vector<8x5xf32>
    %394 = tpu.matmul %393, %17, %cst_165 {dimension_numbers = #tpu.dot_dimension_numbers<[1], [0], [0], [1], [0, 0, 1, 1], [], []>} : vector<8x3xbf16>, vector<3x5xbf16>, vector<8x5xf32> -> vector<8x5xf32>
    %395 = vector.broadcast %18 : vector<1x5xf32> to vector<8x5xf32>
    %396 = arith.addf %394, %395 : vector<8x5xf32>
    %397 = arith.index_cast %c4_i32 : i32 to index
    %c0_166 = arith.constant 0 : index
    %c0_167 = arith.constant 0 : index
    %398 = vector.load %arg21[%397, %c0_166, %c0_167] : memref<8x8x3xf32, #tpu.memory_space<vmem>>, vector<1x8x3xf32>
    %399 = vector.shape_cast %398 : vector<1x8x3xf32> to vector<8x3xf32>
    %400 = vector.shape_cast %365 : vector<8x3xf32> to vector<1x8x3xf32>
    tpu.vector_store %arg21[%397, %c0_166, %c0_167], %400 {strides = array<i32>} : memref<8x8x3xf32, #tpu.memory_space<vmem>>, vector<1x8x3xf32>,
    %c8_i32_168 = arith.constant 8 : i32
    %401 = arith.muli %arg1, %c8_i32_168 : i32
    %402 = arith.addi %401, %c4_i32 : i32
    %c8_i32_169 = arith.constant 8 : i32
    %403 = arith.cmpi slt, %402, %c8_i32_169 : i32
    %404 = arith.select %403, %365, %327 : vector<8x3xf32>
    %405 = arith.select %403, %396, %328 : vector<8x5xf32>
    %c5_i32 = arith.constant 5 : i32
    %406 = arith.index_cast %c5_i32 : i32 to index
    %c0_170 = arith.constant 0 : index
    %c0_171 = arith.constant 0 : index
    %407 = vector.load %arg2[%406, %c0_170, %c0_171] : memref<8x8x4xbf16, #tpu.memory_space<vmem>>, vector<1x8x4xbf16>
    %408 = vector.shape_cast %407 : vector<1x8x4xbf16> to vector<8x4xbf16>
    %cst_172 = arith.constant dense<0.000000e+00> : vector<8x28xf32>
    %409 = tpu.matmul %408, %3, %cst_172 {dimension_numbers = #tpu.dot_dimension_numbers<[1], [0], [0], [1], [0, 0, 1, 1], [], []>} : vector<8x4xbf16>, vector<4x28xbf16>, vector<8x28xf32> -> vector<8x28xf32>
    %410 = arith.truncf %404 : vector<8x3xf32> to vector<8x3xbf16>
    %cst_173 = arith.constant dense<0.000000e+00> : vector<8x28xf32>
    %411 = tpu.matmul %410, %4, %cst_173 {dimension_numbers = #tpu.dot_dimension_numbers<[1], [0], [0], [1], [0, 0, 1, 1], [], []>} : vector<8x3xbf16>, vector<3x28xbf16>, vector<8x28xf32> -> vector<8x28xf32>
    %412 = arith.addf %409, %411 : vector<8x28xf32>
    %413 = arith.truncf %405 : vector<8x5xf32> to vector<8x5xbf16>
    %cst_174 = arith.constant dense<0.000000e+00> : vector<8x28xf32>
    %414 = tpu.matmul %413, %5, %cst_174 {dimension_numbers = #tpu.dot_dimension_numbers<[1], [0], [0], [1], [0, 0, 1, 1], [], []>} : vector<8x5xbf16>, vector<5x28xbf16>, vector<8x28xf32> -> vector<8x28xf32>
    %415 = arith.addf %412, %414 : vector<8x28xf32>
    %416 = vector.broadcast %6 : vector<1x28xf32> to vector<8x28xf32>
    %417 = arith.addf %415, %416 : vector<8x28xf32>
    %418 = vector.extract_strided_slice %417 {offsets = [0, 0], sizes = [8, 16], strides = [1, 1]} : vector<8x28xf32> to vector<8x16xf32>
    %419 = vector.extract_strided_slice %417 {offsets = [0, 16], sizes = [8, 12], strides = [1, 1]} : vector<8x28xf32> to vector<8x12xf32>
    %cst_175 = arith.constant 0.000000e+00 : f32
    %420 = vector.broadcast %cst_175 : f32 to vector<8x16xf32>
    %421 = arith.cmpf oge, %418, %420 : vector<8x16xf32>
    %cst_176 = arith.constant 0.00999999977 : f32
    %422 = vector.broadcast %cst_176 : f32 to vector<8x16xf32>
    %423 = arith.mulf %422, %418 : vector<8x16xf32>
    %424 = arith.select %421, %418, %423 : vector<8x16xi1>, vector<8x16xf32>
    %cst_177 = arith.constant 0.000000e+00 : f32
    %425 = vector.broadcast %cst_177 : f32 to vector<8x12xf32>
    %426 = arith.cmpf oge, %419, %425 : vector<8x12xf32>
    %cst_178 = arith.constant 0.00999999977 : f32
    %427 = vector.broadcast %cst_178 : f32 to vector<8x12xf32>
    %428 = arith.mulf %427, %419 : vector<8x12xf32>
    %429 = arith.select %426, %419, %428 : vector<8x12xi1>, vector<8x12xf32>
    %430 = arith.truncf %424 : vector<8x16xf32> to vector<8x16xbf16>
    %cst_179 = arith.constant dense<0.000000e+00> : vector<8x8xf32>
    %431 = tpu.matmul %430, %7, %cst_179 {dimension_numbers = #tpu.dot_dimension_numbers<[1], [0], [0], [1], [0, 0, 1, 1], [], []>} : vector<8x16xbf16>, vector<16x8xbf16>, vector<8x8xf32> -> vector<8x8xf32>
    %432 = vector.broadcast %8 : vector<1x8xf32> to vector<8x8xf32>
    %433 = arith.addf %431, %432 : vector<8x8xf32>
    %cst_180 = arith.constant 0.000000e+00 : f32
    %434 = vector.broadcast %cst_180 : f32 to vector<8x8xf32>
    %435 = arith.cmpf oge, %433, %434 : vector<8x8xf32>
    %cst_181 = arith.constant 0.00999999977 : f32
    %436 = vector.broadcast %cst_181 : f32 to vector<8x8xf32>
    %437 = arith.mulf %436, %433 : vector<8x8xf32>
    %438 = arith.select %435, %433, %437 : vector<8x8xi1>, vector<8x8xf32>
    %439 = arith.truncf %438 : vector<8x8xf32> to vector<8x8xbf16>
    %cst_182 = arith.constant dense<0.000000e+00> : vector<8x3xf32>
    %440 = tpu.matmul %439, %9, %cst_182 {dimension_numbers = #tpu.dot_dimension_numbers<[1], [0], [0], [1], [0, 0, 1, 1], [], []>} : vector<8x8xbf16>, vector<8x3xbf16>, vector<8x3xf32> -> vector<8x3xf32>
    %441 = vector.broadcast %10 : vector<1x3xf32> to vector<8x3xf32>
    %442 = arith.addf %440, %441 : vector<8x3xf32>
    %443 = arith.truncf %429 : vector<8x12xf32> to vector<8x12xbf16>
    %cst_183 = arith.constant dense<0.000000e+00> : vector<8x16xf32>
    %444 = tpu.matmul %443, %11, %cst_183 {dimension_numbers = #tpu.dot_dimension_numbers<[1], [0], [0], [1], [0, 0, 1, 1], [], []>} : vector<8x12xbf16>, vector<12x16xbf16>, vector<8x16xf32> -> vector<8x16xf32>
    %445 = vector.broadcast %12 : vector<1x16xf32> to vector<8x16xf32>
    %446 = arith.addf %444, %445 : vector<8x16xf32>
    %cst_184 = arith.constant 0.000000e+00 : f32
    %447 = vector.broadcast %cst_184 : f32 to vector<8x16xf32>
    %448 = arith.cmpf oge, %446, %447 : vector<8x16xf32>
    %cst_185 = arith.constant 0.00999999977 : f32
    %449 = vector.broadcast %cst_185 : f32 to vector<8x16xf32>
    %450 = arith.mulf %449, %446 : vector<8x16xf32>
    %451 = arith.select %448, %446, %450 : vector<8x16xi1>, vector<8x16xf32>
    %452 = arith.truncf %451 : vector<8x16xf32> to vector<8x16xbf16>
    %cst_186 = arith.constant dense<0.000000e+00> : vector<8x8xf32>
    %453 = tpu.matmul %452, %13, %cst_186 {dimension_numbers = #tpu.dot_dimension_numbers<[1], [0], [0], [1], [0, 0, 1, 1], [], []>} : vector<8x16xbf16>, vector<16x8xbf16>, vector<8x8xf32> -> vector<8x8xf32>
    %454 = vector.broadcast %14 : vector<1x8xf32> to vector<8x8xf32>
    %455 = arith.addf %453, %454 : vector<8x8xf32>
    %cst_187 = arith.constant 0.000000e+00 : f32
    %456 = vector.broadcast %cst_187 : f32 to vector<8x8xf32>
    %457 = arith.cmpf oge, %455, %456 : vector<8x8xf32>
    %cst_188 = arith.constant 0.00999999977 : f32
    %458 = vector.broadcast %cst_188 : f32 to vector<8x8xf32>
    %459 = arith.mulf %458, %455 : vector<8x8xf32>
    %460 = arith.select %457, %455, %459 : vector<8x8xi1>, vector<8x8xf32>
    %461 = arith.truncf %460 : vector<8x8xf32> to vector<8x8xbf16>
    %cst_189 = arith.constant dense<0.000000e+00> : vector<8x3xf32>
    %462 = tpu.matmul %461, %15, %cst_189 {dimension_numbers = #tpu.dot_dimension_numbers<[1], [0], [0], [1], [0, 0, 1, 1], [], []>} : vector<8x8xbf16>, vector<8x3xbf16>, vector<8x3xf32> -> vector<8x3xf32>
    %463 = vector.broadcast %16 : vector<1x3xf32> to vector<8x3xf32>
    %464 = arith.addf %462, %463 : vector<8x3xf32>
    %cst_190 = arith.constant 0.000000e+00 : f32
    %465 = vector.broadcast %cst_190 : f32 to vector<8x3xf32>
    %466 = arith.cmpf oge, %464, %465 : vector<8x3xf32>
    %cst_191 = arith.constant 0.00999999977 : f32
    %467 = vector.broadcast %cst_191 : f32 to vector<8x3xf32>
    %468 = arith.mulf %467, %464 : vector<8x3xf32>
    %469 = arith.select %466, %464, %468 : vector<8x3xi1>, vector<8x3xf32>
    %470 = arith.truncf %469 : vector<8x3xf32> to vector<8x3xbf16>
    %cst_192 = arith.constant dense<0.000000e+00> : vector<8x5xf32>
    %471 = tpu.matmul %470, %17, %cst_192 {dimension_numbers = #tpu.dot_dimension_numbers<[1], [0], [0], [1], [0, 0, 1, 1], [], []>} : vector<8x3xbf16>, vector<3x5xbf16>, vector<8x5xf32> -> vector<8x5xf32>
    %472 = vector.broadcast %18 : vector<1x5xf32> to vector<8x5xf32>
    %473 = arith.addf %471, %472 : vector<8x5xf32>
    %474 = arith.index_cast %c5_i32 : i32 to index
    %c0_193 = arith.constant 0 : index
    %c0_194 = arith.constant 0 : index
    %475 = vector.load %arg21[%474, %c0_193, %c0_194] : memref<8x8x3xf32, #tpu.memory_space<vmem>>, vector<1x8x3xf32>
    %476 = vector.shape_cast %475 : vector<1x8x3xf32> to vector<8x3xf32>
    %477 = vector.shape_cast %442 : vector<8x3xf32> to vector<1x8x3xf32>
    tpu.vector_store %arg21[%474, %c0_193, %c0_194], %477 {strides = array<i32>} : memref<8x8x3xf32, #tpu.memory_space<vmem>>, vector<1x8x3xf32>,
    %c8_i32_195 = arith.constant 8 : i32
    %478 = arith.muli %arg1, %c8_i32_195 : i32
    %479 = arith.addi %478, %c5_i32 : i32
    %c8_i32_196 = arith.constant 8 : i32
    %480 = arith.cmpi slt, %479, %c8_i32_196 : i32
    %481 = arith.select %480, %442, %404 : vector<8x3xf32>
    %482 = arith.select %480, %473, %405 : vector<8x5xf32>
    %c6_i32 = arith.constant 6 : i32
    %483 = arith.index_cast %c6_i32 : i32 to index
    %c0_197 = arith.constant 0 : index
    %c0_198 = arith.constant 0 : index
    %484 = vector.load %arg2[%483, %c0_197, %c0_198] : memref<8x8x4xbf16, #tpu.memory_space<vmem>>, vector<1x8x4xbf16>
    %485 = vector.shape_cast %484 : vector<1x8x4xbf16> to vector<8x4xbf16>
    %cst_199 = arith.constant dense<0.000000e+00> : vector<8x28xf32>
    %486 = tpu.matmul %485, %3, %cst_199 {dimension_numbers = #tpu.dot_dimension_numbers<[1], [0], [0], [1], [0, 0, 1, 1], [], []>} : vector<8x4xbf16>, vector<4x28xbf16>, vector<8x28xf32> -> vector<8x28xf32>
    %487 = arith.truncf %481 : vector<8x3xf32> to vector<8x3xbf16>
    %cst_200 = arith.constant dense<0.000000e+00> : vector<8x28xf32>
    %488 = tpu.matmul %487, %4, %cst_200 {dimension_numbers = #tpu.dot_dimension_numbers<[1], [0], [0], [1], [0, 0, 1, 1], [], []>} : vector<8x3xbf16>, vector<3x28xbf16>, vector<8x28xf32> -> vector<8x28xf32>
    %489 = arith.addf %486, %488 : vector<8x28xf32>
    %490 = arith.truncf %482 : vector<8x5xf32> to vector<8x5xbf16>
    %cst_201 = arith.constant dense<0.000000e+00> : vector<8x28xf32>
    %491 = tpu.matmul %490, %5, %cst_201 {dimension_numbers = #tpu.dot_dimension_numbers<[1], [0], [0], [1], [0, 0, 1, 1], [], []>} : vector<8x5xbf16>, vector<5x28xbf16>, vector<8x28xf32> -> vector<8x28xf32>
    %492 = arith.addf %489, %491 : vector<8x28xf32>
    %493 = vector.broadcast %6 : vector<1x28xf32> to vector<8x28xf32>
    %494 = arith.addf %492, %493 : vector<8x28xf32>
    %495 = vector.extract_strided_slice %494 {offsets = [0, 0], sizes = [8, 16], strides = [1, 1]} : vector<8x28xf32> to vector<8x16xf32>
    %496 = vector.extract_strided_slice %494 {offsets = [0, 16], sizes = [8, 12], strides = [1, 1]} : vector<8x28xf32> to vector<8x12xf32>
    %cst_202 = arith.constant 0.000000e+00 : f32
    %497 = vector.broadcast %cst_202 : f32 to vector<8x16xf32>
    %498 = arith.cmpf oge, %495, %497 : vector<8x16xf32>
    %cst_203 = arith.constant 0.00999999977 : f32
    %499 = vector.broadcast %cst_203 : f32 to vector<8x16xf32>
    %500 = arith.mulf %499, %495 : vector<8x16xf32>
    %501 = arith.select %498, %495, %500 : vector<8x16xi1>, vector<8x16xf32>
    %cst_204 = arith.constant 0.000000e+00 : f32
    %502 = vector.broadcast %cst_204 : f32 to vector<8x12xf32>
    %503 = arith.cmpf oge, %496, %502 : vector<8x12xf32>
    %cst_205 = arith.constant 0.00999999977 : f32
    %504 = vector.broadcast %cst_205 : f32 to vector<8x12xf32>
    %505 = arith.mulf %504, %496 : vector<8x12xf32>
    %506 = arith.select %503, %496, %505 : vector<8x12xi1>, vector<8x12xf32>
    %507 = arith.truncf %501 : vector<8x16xf32> to vector<8x16xbf16>
    %cst_206 = arith.constant dense<0.000000e+00> : vector<8x8xf32>
    %508 = tpu.matmul %507, %7, %cst_206 {dimension_numbers = #tpu.dot_dimension_numbers<[1], [0], [0], [1], [0, 0, 1, 1], [], []>} : vector<8x16xbf16>, vector<16x8xbf16>, vector<8x8xf32> -> vector<8x8xf32>
    %509 = vector.broadcast %8 : vector<1x8xf32> to vector<8x8xf32>
    %510 = arith.addf %508, %509 : vector<8x8xf32>
    %cst_207 = arith.constant 0.000000e+00 : f32
    %511 = vector.broadcast %cst_207 : f32 to vector<8x8xf32>
    %512 = arith.cmpf oge, %510, %511 : vector<8x8xf32>
    %cst_208 = arith.constant 0.00999999977 : f32
    %513 = vector.broadcast %cst_208 : f32 to vector<8x8xf32>
    %514 = arith.mulf %513, %510 : vector<8x8xf32>
    %515 = arith.select %512, %510, %514 : vector<8x8xi1>, vector<8x8xf32>
    %516 = arith.truncf %515 : vector<8x8xf32> to vector<8x8xbf16>
    %cst_209 = arith.constant dense<0.000000e+00> : vector<8x3xf32>
    %517 = tpu.matmul %516, %9, %cst_209 {dimension_numbers = #tpu.dot_dimension_numbers<[1], [0], [0], [1], [0, 0, 1, 1], [], []>} : vector<8x8xbf16>, vector<8x3xbf16>, vector<8x3xf32> -> vector<8x3xf32>
    %518 = vector.broadcast %10 : vector<1x3xf32> to vector<8x3xf32>
    %519 = arith.addf %517, %518 : vector<8x3xf32>
    %520 = arith.truncf %506 : vector<8x12xf32> to vector<8x12xbf16>
    %cst_210 = arith.constant dense<0.000000e+00> : vector<8x16xf32>
    %521 = tpu.matmul %520, %11, %cst_210 {dimension_numbers = #tpu.dot_dimension_numbers<[1], [0], [0], [1], [0, 0, 1, 1], [], []>} : vector<8x12xbf16>, vector<12x16xbf16>, vector<8x16xf32> -> vector<8x16xf32>
    %522 = vector.broadcast %12 : vector<1x16xf32> to vector<8x16xf32>
    %523 = arith.addf %521, %522 : vector<8x16xf32>
    %cst_211 = arith.constant 0.000000e+00 : f32
    %524 = vector.broadcast %cst_211 : f32 to vector<8x16xf32>
    %525 = arith.cmpf oge, %523, %524 : vector<8x16xf32>
    %cst_212 = arith.constant 0.00999999977 : f32
    %526 = vector.broadcast %cst_212 : f32 to vector<8x16xf32>
    %527 = arith.mulf %526, %523 : vector<8x16xf32>
    %528 = arith.select %525, %523, %527 : vector<8x16xi1>, vector<8x16xf32>
    %529 = arith.truncf %528 : vector<8x16xf32> to vector<8x16xbf16>
    %cst_213 = arith.constant dense<0.000000e+00> : vector<8x8xf32>
    %530 = tpu.matmul %529, %13, %cst_213 {dimension_numbers = #tpu.dot_dimension_numbers<[1], [0], [0], [1], [0, 0, 1, 1], [], []>} : vector<8x16xbf16>, vector<16x8xbf16>, vector<8x8xf32> -> vector<8x8xf32>
    %531 = vector.broadcast %14 : vector<1x8xf32> to vector<8x8xf32>
    %532 = arith.addf %530, %531 : vector<8x8xf32>
    %cst_214 = arith.constant 0.000000e+00 : f32
    %533 = vector.broadcast %cst_214 : f32 to vector<8x8xf32>
    %534 = arith.cmpf oge, %532, %533 : vector<8x8xf32>
    %cst_215 = arith.constant 0.00999999977 : f32
    %535 = vector.broadcast %cst_215 : f32 to vector<8x8xf32>
    %536 = arith.mulf %535, %532 : vector<8x8xf32>
    %537 = arith.select %534, %532, %536 : vector<8x8xi1>, vector<8x8xf32>
    %538 = arith.truncf %537 : vector<8x8xf32> to vector<8x8xbf16>
    %cst_216 = arith.constant dense<0.000000e+00> : vector<8x3xf32>
    %539 = tpu.matmul %538, %15, %cst_216 {dimension_numbers = #tpu.dot_dimension_numbers<[1], [0], [0], [1], [0, 0, 1, 1], [], []>} : vector<8x8xbf16>, vector<8x3xbf16>, vector<8x3xf32> -> vector<8x3xf32>
    %540 = vector.broadcast %16 : vector<1x3xf32> to vector<8x3xf32>
    %541 = arith.addf %539, %540 : vector<8x3xf32>
    %cst_217 = arith.constant 0.000000e+00 : f32
    %542 = vector.broadcast %cst_217 : f32 to vector<8x3xf32>
    %543 = arith.cmpf oge, %541, %542 : vector<8x3xf32>
    %cst_218 = arith.constant 0.00999999977 : f32
    %544 = vector.broadcast %cst_218 : f32 to vector<8x3xf32>
    %545 = arith.mulf %544, %541 : vector<8x3xf32>
    %546 = arith.select %543, %541, %545 : vector<8x3xi1>, vector<8x3xf32>
    %547 = arith.truncf %546 : vector<8x3xf32> to vector<8x3xbf16>
    %cst_219 = arith.constant dense<0.000000e+00> : vector<8x5xf32>
    %548 = tpu.matmul %547, %17, %cst_219 {dimension_numbers = #tpu.dot_dimension_numbers<[1], [0], [0], [1], [0, 0, 1, 1], [], []>} : vector<8x3xbf16>, vector<3x5xbf16>, vector<8x5xf32> -> vector<8x5xf32>
    %549 = vector.broadcast %18 : vector<1x5xf32> to vector<8x5xf32>
    %550 = arith.addf %548, %549 : vector<8x5xf32>
    %551 = arith.index_cast %c6_i32 : i32 to index
    %c0_220 = arith.constant 0 : index
    %c0_221 = arith.constant 0 : index
    %552 = vector.load %arg21[%551, %c0_220, %c0_221] : memref<8x8x3xf32, #tpu.memory_space<vmem>>, vector<1x8x3xf32>
    %553 = vector.shape_cast %552 : vector<1x8x3xf32> to vector<8x3xf32>
    %554 = vector.shape_cast %519 : vector<8x3xf32> to vector<1x8x3xf32>
    tpu.vector_store %arg21[%551, %c0_220, %c0_221], %554 {strides = array<i32>} : memref<8x8x3xf32, #tpu.memory_space<vmem>>, vector<1x8x3xf32>,
    %c8_i32_222 = arith.constant 8 : i32
    %555 = arith.muli %arg1, %c8_i32_222 : i32
    %556 = arith.addi %555, %c6_i32 : i32
    %c8_i32_223 = arith.constant 8 : i32
    %557 = arith.cmpi slt, %556, %c8_i32_223 : i32
    %558 = arith.select %557, %519, %481 : vector<8x3xf32>
    %559 = arith.select %557, %550, %482 : vector<8x5xf32>
    %c7_i32 = arith.constant 7 : i32
    %560 = arith.index_cast %c7_i32 : i32 to index
    %c0_224 = arith.constant 0 : index
    %c0_225 = arith.constant 0 : index
    %561 = vector.load %arg2[%560, %c0_224, %c0_225] : memref<8x8x4xbf16, #tpu.memory_space<vmem>>, vector<1x8x4xbf16>
    %562 = vector.shape_cast %561 : vector<1x8x4xbf16> to vector<8x4xbf16>
    %cst_226 = arith.constant dense<0.000000e+00> : vector<8x28xf32>
    %563 = tpu.matmul %562, %3, %cst_226 {dimension_numbers = #tpu.dot_dimension_numbers<[1], [0], [0], [1], [0, 0, 1, 1], [], []>} : vector<8x4xbf16>, vector<4x28xbf16>, vector<8x28xf32> -> vector<8x28xf32>
    %564 = arith.truncf %558 : vector<8x3xf32> to vector<8x3xbf16>
    %cst_227 = arith.constant dense<0.000000e+00> : vector<8x28xf32>
    %565 = tpu.matmul %564, %4, %cst_227 {dimension_numbers = #tpu.dot_dimension_numbers<[1], [0], [0], [1], [0, 0, 1, 1], [], []>} : vector<8x3xbf16>, vector<3x28xbf16>, vector<8x28xf32> -> vector<8x28xf32>
    %566 = arith.addf %563, %565 : vector<8x28xf32>
    %567 = arith.truncf %559 : vector<8x5xf32> to vector<8x5xbf16>
    %cst_228 = arith.constant dense<0.000000e+00> : vector<8x28xf32>
    %568 = tpu.matmul %567, %5, %cst_228 {dimension_numbers = #tpu.dot_dimension_numbers<[1], [0], [0], [1], [0, 0, 1, 1], [], []>} : vector<8x5xbf16>, vector<5x28xbf16>, vector<8x28xf32> -> vector<8x28xf32>
    %569 = arith.addf %566, %568 : vector<8x28xf32>
    %570 = vector.broadcast %6 : vector<1x28xf32> to vector<8x28xf32>
    %571 = arith.addf %569, %570 : vector<8x28xf32>
    %572 = vector.extract_strided_slice %571 {offsets = [0, 0], sizes = [8, 16], strides = [1, 1]} : vector<8x28xf32> to vector<8x16xf32>
    %573 = vector.extract_strided_slice %571 {offsets = [0, 16], sizes = [8, 12], strides = [1, 1]} : vector<8x28xf32> to vector<8x12xf32>
    %cst_229 = arith.constant 0.000000e+00 : f32
    %574 = vector.broadcast %cst_229 : f32 to vector<8x16xf32>
    %575 = arith.cmpf oge, %572, %574 : vector<8x16xf32>
    %cst_230 = arith.constant 0.00999999977 : f32
    %576 = vector.broadcast %cst_230 : f32 to vector<8x16xf32>
    %577 = arith.mulf %576, %572 : vector<8x16xf32>
    %578 = arith.select %575, %572, %577 : vector<8x16xi1>, vector<8x16xf32>
    %cst_231 = arith.constant 0.000000e+00 : f32
    %579 = vector.broadcast %cst_231 : f32 to vector<8x12xf32>
    %580 = arith.cmpf oge, %573, %579 : vector<8x12xf32>
    %cst_232 = arith.constant 0.00999999977 : f32
    %581 = vector.broadcast %cst_232 : f32 to vector<8x12xf32>
    %582 = arith.mulf %581, %573 : vector<8x12xf32>
    %583 = arith.select %580, %573, %582 : vector<8x12xi1>, vector<8x12xf32>
    %584 = arith.truncf %578 : vector<8x16xf32> to vector<8x16xbf16>
    %cst_233 = arith.constant dense<0.000000e+00> : vector<8x8xf32>
    %585 = tpu.matmul %584, %7, %cst_233 {dimension_numbers = #tpu.dot_dimension_numbers<[1], [0], [0], [1], [0, 0, 1, 1], [], []>} : vector<8x16xbf16>, vector<16x8xbf16>, vector<8x8xf32> -> vector<8x8xf32>
    %586 = vector.broadcast %8 : vector<1x8xf32> to vector<8x8xf32>
    %587 = arith.addf %585, %586 : vector<8x8xf32>
    %cst_234 = arith.constant 0.000000e+00 : f32
    %588 = vector.broadcast %cst_234 : f32 to vector<8x8xf32>
    %589 = arith.cmpf oge, %587, %588 : vector<8x8xf32>
    %cst_235 = arith.constant 0.00999999977 : f32
    %590 = vector.broadcast %cst_235 : f32 to vector<8x8xf32>
    %591 = arith.mulf %590, %587 : vector<8x8xf32>
    %592 = arith.select %589, %587, %591 : vector<8x8xi1>, vector<8x8xf32>
    %593 = arith.truncf %592 : vector<8x8xf32> to vector<8x8xbf16>
    %cst_236 = arith.constant dense<0.000000e+00> : vector<8x3xf32>
    %594 = tpu.matmul %593, %9, %cst_236 {dimension_numbers = #tpu.dot_dimension_numbers<[1], [0], [0], [1], [0, 0, 1, 1], [], []>} : vector<8x8xbf16>, vector<8x3xbf16>, vector<8x3xf32> -> vector<8x3xf32>
    %595 = vector.broadcast %10 : vector<1x3xf32> to vector<8x3xf32>
    %596 = arith.addf %594, %595 : vector<8x3xf32>
    %597 = arith.truncf %583 : vector<8x12xf32> to vector<8x12xbf16>
    %cst_237 = arith.constant dense<0.000000e+00> : vector<8x16xf32>
    %598 = tpu.matmul %597, %11, %cst_237 {dimension_numbers = #tpu.dot_dimension_numbers<[1], [0], [0], [1], [0, 0, 1, 1], [], []>} : vector<8x12xbf16>, vector<12x16xbf16>, vector<8x16xf32> -> vector<8x16xf32>
    %599 = vector.broadcast %12 : vector<1x16xf32> to vector<8x16xf32>
    %600 = arith.addf %598, %599 : vector<8x16xf32>
    %cst_238 = arith.constant 0.000000e+00 : f32
    %601 = vector.broadcast %cst_238 : f32 to vector<8x16xf32>
    %602 = arith.cmpf oge, %600, %601 : vector<8x16xf32>
    %cst_239 = arith.constant 0.00999999977 : f32
    %603 = vector.broadcast %cst_239 : f32 to vector<8x16xf32>
    %604 = arith.mulf %603, %600 : vector<8x16xf32>
    %605 = arith.select %602, %600, %604 : vector<8x16xi1>, vector<8x16xf32>
    %606 = arith.truncf %605 : vector<8x16xf32> to vector<8x16xbf16>
    %cst_240 = arith.constant dense<0.000000e+00> : vector<8x8xf32>
    %607 = tpu.matmul %606, %13, %cst_240 {dimension_numbers = #tpu.dot_dimension_numbers<[1], [0], [0], [1], [0, 0, 1, 1], [], []>} : vector<8x16xbf16>, vector<16x8xbf16>, vector<8x8xf32> -> vector<8x8xf32>
    %608 = vector.broadcast %14 : vector<1x8xf32> to vector<8x8xf32>
    %609 = arith.addf %607, %608 : vector<8x8xf32>
    %cst_241 = arith.constant 0.000000e+00 : f32
    %610 = vector.broadcast %cst_241 : f32 to vector<8x8xf32>
    %611 = arith.cmpf oge, %609, %610 : vector<8x8xf32>
    %cst_242 = arith.constant 0.00999999977 : f32
    %612 = vector.broadcast %cst_242 : f32 to vector<8x8xf32>
    %613 = arith.mulf %612, %609 : vector<8x8xf32>
    %614 = arith.select %611, %609, %613 : vector<8x8xi1>, vector<8x8xf32>
    %615 = arith.truncf %614 : vector<8x8xf32> to vector<8x8xbf16>
    %cst_243 = arith.constant dense<0.000000e+00> : vector<8x3xf32>
    %616 = tpu.matmul %615, %15, %cst_243 {dimension_numbers = #tpu.dot_dimension_numbers<[1], [0], [0], [1], [0, 0, 1, 1], [], []>} : vector<8x8xbf16>, vector<8x3xbf16>, vector<8x3xf32> -> vector<8x3xf32>
    %617 = vector.broadcast %16 : vector<1x3xf32> to vector<8x3xf32>
    %618 = arith.addf %616, %617 : vector<8x3xf32>
    %cst_244 = arith.constant 0.000000e+00 : f32
    %619 = vector.broadcast %cst_244 : f32 to vector<8x3xf32>
    %620 = arith.cmpf oge, %618, %619 : vector<8x3xf32>
    %cst_245 = arith.constant 0.00999999977 : f32
    %621 = vector.broadcast %cst_245 : f32 to vector<8x3xf32>
    %622 = arith.mulf %621, %618 : vector<8x3xf32>
    %623 = arith.select %620, %618, %622 : vector<8x3xi1>, vector<8x3xf32>
    %624 = arith.truncf %623 : vector<8x3xf32> to vector<8x3xbf16>
    %cst_246 = arith.constant dense<0.000000e+00> : vector<8x5xf32>
    %625 = tpu.matmul %624, %17, %cst_246 {dimension_numbers = #tpu.dot_dimension_numbers<[1], [0], [0], [1], [0, 0, 1, 1], [], []>} : vector<8x3xbf16>, vector<3x5xbf16>, vector<8x5xf32> -> vector<8x5xf32>
    %626 = vector.broadcast %18 : vector<1x5xf32> to vector<8x5xf32>
    %627 = arith.addf %625, %626 : vector<8x5xf32>
    %628 = arith.index_cast %c7_i32 : i32 to index
    %c0_247 = arith.constant 0 : index
    %c0_248 = arith.constant 0 : index
    %629 = vector.load %arg21[%628, %c0_247, %c0_248] : memref<8x8x3xf32, #tpu.memory_space<vmem>>, vector<1x8x3xf32>
    %630 = vector.shape_cast %629 : vector<1x8x3xf32> to vector<8x3xf32>
    %631 = vector.shape_cast %596 : vector<8x3xf32> to vector<1x8x3xf32>
    tpu.vector_store %arg21[%628, %c0_247, %c0_248], %631 {strides = array<i32>} : memref<8x8x3xf32, #tpu.memory_space<vmem>>, vector<1x8x3xf32>,
    %c8_i32_249 = arith.constant 8 : i32
    %632 = arith.muli %arg1, %c8_i32_249 : i32
    %633 = arith.addi %632, %c7_i32 : i32
    %c8_i32_250 = arith.constant 8 : i32
    %634 = arith.cmpi slt, %633, %c8_i32_250 : i32
    %635 = arith.select %634, %596, %558 : vector<8x3xf32>
    %636 = arith.select %634, %627, %559 : vector<8x5xf32>
    %c8_i32_251 = arith.constant 8 : i32
    %c0_252 = arith.constant 0 : index
    %c0_253 = arith.constant 0 : index
    %637 = vector.load %arg24[%c0_252, %c0_253] : memref<8x3xf32, #tpu.memory_space<vmem>>, vector<8x3xf32>
    tpu.vector_store %arg24[%c0_252, %c0_253], %635 {strides = array<i32>} : memref<8x3xf32, #tpu.memory_space<vmem>>, vector<8x3xf32>,
    %c0_254 = arith.constant 0 : index
    %c0_255 = arith.constant 0 : index
    %638 = vector.load %arg25[%c0_254, %c0_255] : memref<8x5xf32, #tpu.memory_space<vmem>>, vector<8x5xf32>
    tpu.vector_store %arg25[%c0_254, %c0_255], %636 {strides = array<i32>} : memref<8x5xf32, #tpu.memory_space<vmem>>, vector<8x5xf32>,
    %c0_i32_256 = arith.constant 0 : i32
    %639 = arith.cmpi eq, %arg1, %c0_i32_256 : i32
    %640 = arith.extui %639 : i1 to i32
    %c0_i32_257 = arith.constant 0 : i32
    %641 = arith.cmpi ne, %640, %c0_i32_257 : i32
    scf.if %641 {
      %c0_258 = arith.constant 0 : index
      %c0_259 = arith.constant 0 : index
      %642 = vector.load %arg22[%c0_258, %c0_259] : memref<8x3xf32, #tpu.memory_space<vmem>>, vector<8x3xf32>
      tpu.vector_store %arg22[%c0_258, %c0_259], %635 {strides = array<i32>} : memref<8x3xf32, #tpu.memory_space<vmem>>, vector<8x3xf32>,
      %c0_260 = arith.constant 0 : index
      %c0_261 = arith.constant 0 : index
      %643 = vector.load %arg23[%c0_260, %c0_261] : memref<8x5xf32, #tpu.memory_space<vmem>>, vector<8x5xf32>
      tpu.vector_store %arg23[%c0_260, %c0_261], %636 {strides = array<i32>} : memref<8x5xf32, #tpu.memory_space<vmem>>, vector<8x5xf32>,
    } else {
    }
    return
  }
  func.func @transform_0(%arg0: i32, %arg1: i32) -> (i32, i32, i32) {
    %c0_i32 = arith.constant 0 : i32
    %c0_i32_0 = arith.constant 0 : i32
    return %arg1, %arg0, %c0_i32 : i32, i32, i32
  }
  func.func @transform_1(%arg0: i32, %arg1: i32) -> (i32, i32) {
    %c0_i32 = arith.constant 0 : i32
    %c0_i32_0 = arith.constant 0 : i32
    return %arg0, %c0_i32 : i32, i32
  }
  func.func @transform_2(%arg0: i32, %arg1: i32) -> (i32, i32) {
    %c0_i32 = arith.constant 0 : i32
    %c0_i32_0 = arith.constant 0 : i32
    return %arg0, %c0_i32 : i32, i32
  }
  func.func @transform_3(%arg0: i32, %arg1: i32) -> (i32, i32) {
    %c0_i32 = arith.constant 0 : i32
    %c0_i32_0 = arith.constant 0 : i32
    %c0_i32_1 = arith.constant 0 : i32
    return %c0_i32, %c0_i32_0 : i32, i32
  }
  func.func @transform_4(%arg0: i32, %arg1: i32) -> (i32, i32) {
    %c0_i32 = arith.constant 0 : i32
    %c0_i32_0 = arith.constant 0 : i32
    %c0_i32_1 = arith.constant 0 : i32
    return %c0_i32, %c0_i32_0 : i32, i32
  }
  func.func @transform_5(%arg0: i32, %arg1: i32) -> (i32, i32) {
    %c0_i32 = arith.constant 0 : i32
    %c0_i32_0 = arith.constant 0 : i32
    %c0_i32_1 = arith.constant 0 : i32
    return %c0_i32, %c0_i32_0 : i32, i32
  }
  func.func @transform_6(%arg0: i32, %arg1: i32) -> (i32, i32) {
    %c0_i32 = arith.constant 0 : i32
    %c0_i32_0 = arith.constant 0 : i32
    %c0_i32_1 = arith.constant 0 : i32
    return %c0_i32, %c0_i32_0 : i32, i32
  }
  func.func @transform_7(%arg0: i32, %arg1: i32) -> (i32, i32) {
    %c0_i32 = arith.constant 0 : i32
    %c0_i32_0 = arith.constant 0 : i32
    %c0_i32_1 = arith.constant 0 : i32
    return %c0_i32, %c0_i32_0 : i32, i32
  }
  func.func @transform_8(%arg0: i32, %arg1: i32) -> (i32, i32) {
    %c0_i32 = arith.constant 0 : i32
    %c0_i32_0 = arith.constant 0 : i32
    %c0_i32_1 = arith.constant 0 : i32
    return %c0_i32, %c0_i32_0 : i32, i32
  }
  func.func @transform_9(%arg0: i32, %arg1: i32) -> (i32, i32) {
    %c0_i32 = arith.constant 0 : i32
    %c0_i32_0 = arith.constant 0 : i32
    %c0_i32_1 = arith.constant 0 : i32
    return %c0_i32, %c0_i32_0 : i32, i32
  }
  func.func @transform_10(%arg0: i32, %arg1: i32) -> (i32, i32) {
    %c0_i32 = arith.constant 0 : i32
    %c0_i32_0 = arith.constant 0 : i32
    %c0_i32_1 = arith.constant 0 : i32
    return %c0_i32, %c0_i32_0 : i32, i32
  }
  func.func @transform_11(%arg0: i32, %arg1: i32) -> (i32, i32) {
    %c0_i32 = arith.constant 0 : i32
    %c0_i32_0 = arith.constant 0 : i32
    %c0_i32_1 = arith.constant 0 : i32
    return %c0_i32, %c0_i32_0 : i32, i32
  }
  func.func @transform_12(%arg0: i32, %arg1: i32) -> (i32, i32) {
    %c0_i32 = arith.constant 0 : i32
    %c0_i32_0 = arith.constant 0 : i32
    %c0_i32_1 = arith.constant 0 : i32
    return %c0_i32, %c0_i32_0 : i32, i32
  }
  func.func @transform_13(%arg0: i32, %arg1: i32) -> (i32, i32) {
    %c0_i32 = arith.constant 0 : i32
    %c0_i32_0 = arith.constant 0 : i32
    %c0_i32_1 = arith.constant 0 : i32
    return %c0_i32, %c0_i32_0 : i32, i32
  }
  func.func @transform_14(%arg0: i32, %arg1: i32) -> (i32, i32) {
    %c0_i32 = arith.constant 0 : i32
    %c0_i32_0 = arith.constant 0 : i32
    %c0_i32_1 = arith.constant 0 : i32
    return %c0_i32, %c0_i32_0 : i32, i32
  }
  func.func @transform_15(%arg0: i32, %arg1: i32) -> (i32, i32) {
    %c0_i32 = arith.constant 0 : i32
    %c0_i32_0 = arith.constant 0 : i32
    %c0_i32_1 = arith.constant 0 : i32
    return %c0_i32, %c0_i32_0 : i32, i32
  }
  func.func @transform_16(%arg0: i32, %arg1: i32) -> (i32, i32) {
    %c0_i32 = arith.constant 0 : i32
    %c0_i32_0 = arith.constant 0 : i32
    %c0_i32_1 = arith.constant 0 : i32
    return %c0_i32, %c0_i32_0 : i32, i32
  }
  func.func @transform_17(%arg0: i32, %arg1: i32) -> (i32, i32) {
    %c0_i32 = arith.constant 0 : i32
    %c0_i32_0 = arith.constant 0 : i32
    %c0_i32_1 = arith.constant 0 : i32
    return %c0_i32, %c0_i32_0 : i32, i32
  }
  func.func @transform_18(%arg0: i32, %arg1: i32) -> (i32, i32) {
    %c0_i32 = arith.constant 0 : i32
    %c0_i32_0 = arith.constant 0 : i32
    %c0_i32_1 = arith.constant 0 : i32
    return %c0_i32, %c0_i32_0 : i32, i32
  }
  func.func @transform_19(%arg0: i32, %arg1: i32) -> (i32, i32, i32) {
    %c0_i32 = arith.constant 0 : i32
    %c0_i32_0 = arith.constant 0 : i32
    return %arg1, %arg0, %c0_i32 : i32, i32, i32
  }
  func.func @transform_20(%arg0: i32, %arg1: i32) -> (i32, i32) {
    %c0_i32 = arith.constant 0 : i32
    %c0_i32_0 = arith.constant 0 : i32
    return %arg0, %c0_i32 : i32, i32
  }
  func.func @transform_21(%arg0: i32, %arg1: i32) -> (i32, i32) {
    %c0_i32 = arith.constant 0 : i32
    %c0_i32_0 = arith.constant 0 : i32
    return %arg0, %c0_i32 : i32, i32
  }
}

</mosaic_0001>

<llo_original>
// kernel: rnn_forward_sequence.1
$region0: #{rnn_forward_sequence.1}
  #allocation0 [shape = 'u32[]', space=smem, size = 0x4, offset = 0x4, fixed_abs, tag = 'smem constant byte address 0x4 - core index']
  #allocation1 [shape = 'u32[72,128]{1,0:T(1,128)}', space=vmem, size = 0x9000, scoped, tag = 'internal scratch']
  #allocation2 [shape = 'f32[8,3]{1,0:T(8,128)}', space=vmem, size = 0x1000, scoped, tag = 'scratch operand']
  #allocation3 [shape = 'f32[8,5]{1,0:T(8,128)}', space=vmem, size = 0x1000, scoped, tag = 'scratch operand']
  %s0 = inlined_call_operand.vmem [shape: bf16[8,16,4], index: 0, kind: input, shape index: {}]
  %s1 = inlined_call_operand.vmem [shape: f32[16,3], index: 1, kind: input, shape index: {}]
  %s2 = inlined_call_operand.vmem [shape: f32[16,5], index: 2, kind: input, shape index: {}]
  %s3 = inlined_call_operand.vmem [shape: bf16[4,28], index: 3, kind: input, shape index: {}]
  %s4 = inlined_call_operand.vmem [shape: bf16[3,28], index: 4, kind: input, shape index: {}]
  %s5 = inlined_call_operand.vmem [shape: bf16[5,28], index: 5, kind: input, shape index: {}]
  %s6 = inlined_call_operand.vmem [shape: f32[1,28], index: 6, kind: input, shape index: {}]
  %s7 = inlined_call_operand.vmem [shape: bf16[16,8], index: 7, kind: input, shape index: {}]
  %s8 = inlined_call_operand.vmem [shape: f32[1,8], index: 8, kind: input, shape index: {}]
  %s9 = inlined_call_operand.vmem [shape: bf16[8,3], index: 9, kind: input, shape index: {}]
  %s10 = inlined_call_operand.vmem [shape: f32[1,3], index: 10, kind: input, shape index: {}]
  %s11 = inlined_call_operand.vmem [shape: bf16[12,16], index: 11, kind: input, shape index: {}]
  %s12 = inlined_call_operand.vmem [shape: f32[1,16], index: 12, kind: input, shape index: {}]
  %s13 = inlined_call_operand.vmem [shape: bf16[16,8], index: 13, kind: input, shape index: {}]
  %s14 = inlined_call_operand.vmem [shape: f32[1,8], index: 14, kind: input, shape index: {}]
  %s15 = inlined_call_operand.vmem [shape: bf16[8,3], index: 15, kind: input, shape index: {}]
  %s16 = inlined_call_operand.vmem [shape: f32[1,3], index: 16, kind: input, shape index: {}]
  %s17 = inlined_call_operand.vmem [shape: bf16[3,5], index: 17, kind: input, shape index: {}]
  %s18 = inlined_call_operand.vmem [shape: f32[1,5], index: 18, kind: input, shape index: {}]
  %s19 = inlined_call_operand.vmem [shape: f32[8,16,3], index: 19, kind: output, shape index: {0}]
  %s20 = inlined_call_operand.vmem [shape: f32[16,3], index: 20, kind: output, shape index: {1}]
  %s21 = inlined_call_operand.vmem [shape: f32[16,5], index: 21, kind: output, shape index: {2}]
  %22 = xla_tuple %s19, %s20, %s21
  %s23 = sld [smem:[#allocation0]]
  $region208: #{rnn_forward_sequence.1} parent=0
    _
  %s25 = ssub.s32 1, %s23
  %s26 = scalar_select 0, %s25, %s23
  $region1: #{rnn_forward_sequence.1} parent=0
    #allocation4 [shape = 'u8[32768]{0}', space=vmem, size = 0x8000, scoped, tag = 'input window, operand 0']
    #allocation5 [shape = 'u8[65536]{0}', space=vmem, size = 0x10000, scoped, tag = 'output window, operand 0']
    loop: start=0, step=1, limit=4
    $region2: #{rnn_forward_sequence.1} parent=1 // loop_pre_header
      _
    $region3: #{rnn_forward_sequence.1} parent=1 // loop_header
      %s28 = sphi 0, %s32
      %p29 = scmp.ge.s32.totalorder %s28, 4
      %s35 = sphi 0, %s47
      %s36 = sphi 0, %s43
      %s37 = sphi 0, %s35
      %s38 = sphi 0, %s36
      %s39 = sphi 0, %s37
      %s40 = sphi 0, %s38
      %s52 = sphi 0, %s54
      %s55 = sphi 0, %s52
      %s56 = sphi 0, %s55
      %s72 = sphi 0, %s56
      %s78 = sphi 0, %s80
      %s81 = sphi 0, %s78
      %s82 = sphi 0, %s81
      %s98 = sphi 0, %s82
      %s104 = sphi 0, %s106
      %s107 = sphi 0, %s104
      %s108 = sphi 0, %s107
      %s124 = sphi 0, %s108
      %s128 = sphi 0, %s128
      %s130 = sphi 0, %s128
      %s131 = sphi 0, %s130
      %s145 = sphi 0, %s131
      %s149 = sphi 0, %s149
      %s151 = sphi 0, %s149
      %s152 = sphi 0, %s151
      %s166 = sphi 0, %s152
      %s170 = sphi 0, %s170
      %s172 = sphi 0, %s170
      %s173 = sphi 0, %s172
      %s187 = sphi 0, %s173
      %s191 = sphi 0, %s191
      %s193 = sphi 0, %s191
      %s194 = sphi 0, %s193
      %s208 = sphi 0, %s194
      %s212 = sphi 0, %s212
      %s214 = sphi 0, %s212
      %s215 = sphi 0, %s214
      %s229 = sphi 0, %s215
      %s233 = sphi 0, %s233
      %s235 = sphi 0, %s233
      %s236 = sphi 0, %s235
      %s250 = sphi 0, %s236
      %s254 = sphi 0, %s254
      %s256 = sphi 0, %s254
      %s257 = sphi 0, %s256
      %s271 = sphi 0, %s257
      %s275 = sphi 0, %s275
      %s277 = sphi 0, %s275
      %s278 = sphi 0, %s277
      %s292 = sphi 0, %s278
      %s296 = sphi 0, %s296
      %s298 = sphi 0, %s296
      %s299 = sphi 0, %s298
      %s313 = sphi 0, %s299
      %s317 = sphi 0, %s317
      %s319 = sphi 0, %s317
      %s320 = sphi 0, %s319
      %s334 = sphi 0, %s320
      %s338 = sphi 0, %s338
      %s340 = sphi 0, %s338
      %s341 = sphi 0, %s340
      %s355 = sphi 0, %s341
      %s359 = sphi 0, %s359
      %s361 = sphi 0, %s359
      %s362 = sphi 0, %s361
      %s376 = sphi 0, %s362
      %s380 = sphi 0, %s380
      %s382 = sphi 0, %s380
      %s383 = sphi 0, %s382
      %s397 = sphi 0, %s383
      %s401 = sphi 0, %s401
      %s403 = sphi 0, %s401
      %s404 = sphi 0, %s403
      %s418 = sphi 0, %s404
      %s422 = sphi 0, %s422
      %s424 = sphi 0, %s422
      %s425 = sphi 0, %s424
      %s439 = sphi 0, %s425
      %s443 = sphi 0, %s443
      %s445 = sphi 0, %s443
      %s446 = sphi 0, %s445
      %s460 = sphi 0, %s446
      %s468 = sphi 0, %s470
      %s471 = sphi 0, %s468
      %s472 = sphi 0, %s471
      %s488 = sphi 0, %s472
      %s494 = sphi 0, %s496
      %s497 = sphi 0, %s494
      %s498 = sphi 0, %s497
      %s514 = sphi 0, %s498
      %s520 = sphi 0, %s522
      %s523 = sphi 0, %s520
      %s524 = sphi 0, %s523
      %s540 = sphi 0, %s524
    $region4: #{rnn_forward_sequence.1} parent=1 // loop_header_branch
      %31 = sbr.rel (%p29) target = $region8
    $region5: #{rnn_forward_sequence.1} parent=1 // loop_body
      %s33 = ssub.s32 %s28, 1
      %s34 = ssub.s32 %s28, 2
      %s41 = sadd.s32 1, %s36
      %p42 = scmp.ge.s32.totalorder %s41, 1
      %s43 = scalar_select %p42, 0, %s41
      %s44 = sadd.s32 1, %s35
      %s45 = scalar_select %p42, %s44, %s35
      %p46 = scmp.ge.s32.totalorder %s45, 2
      %s47 = scalar_select %p46, 0, %s45
      %s48 = ssub.s32 %s36, %s43
      %s49 = ssub.s32 %s35, %s47
      %s50 = sor.u32 %s48, %s49
      %p51 = scmp.eq.s32.totalorder %s50, 0
      %s53 = sadd.s32 %s52, 1
      %s54 = scalar_select %p51, %s52, %s53
      %p57 = pneg %p51
      %p58 = scmp.eq.s32.totalorder %s28, 1
      %p59 = por %p57, %p58
      %p60 = scmp.ne.s32.totalorder %s52, %s55
      %p61 = scmp.eq.s32.totalorder %s28, 0
      %p62 = por %p60, %p61
      %p63 = scmp.ne.s32.totalorder %s52, %s55
      %p64 = scmp.eq.s32.totalorder %s33, 1
      %p65 = por %p63, %p64
      %p66 = scmp.ne.s32.totalorder %s55, %s56
      %p67 = scmp.eq.s32.totalorder %s33, 0
      %p68 = por %p66, %p67
      %p69 = scmp.ne.s32.totalorder %s55, %s56
      %p70 = scmp.eq.s32.totalorder %s34, 1
      %p71 = por %p69, %p70
      %p73 = scmp.ne.s32.totalorder %s56, %s72
      %p74 = scmp.eq.s32.totalorder %s34, 0
      %p75 = por %p73, %p74
      %s76 = ssub.s32 %s35, %s47
      %p77 = scmp.eq.s32.totalorder %s76, 0
      %s79 = sadd.s32 %s78, 1
      %s80 = scalar_select %p77, %s78, %s79
      %p83 = pneg %p77
      %p84 = scmp.eq.s32.totalorder %s28, 1
      %p85 = por %p83, %p84
      %p86 = scmp.ne.s32.totalorder %s78, %s81
      %p87 = scmp.eq.s32.totalorder %s28, 0
      %p88 = por %p86, %p87
      %p89 = scmp.ne.s32.totalorder %s78, %s81
      %p90 = scmp.eq.s32.totalorder %s33, 1
      %p91 = por %p89, %p90
      %p92 = scmp.ne.s32.totalorder %s81, %s82
      %p93 = scmp.eq.s32.totalorder %s33, 0
      %p94 = por %p92, %p93
      %p95 = scmp.ne.s32.totalorder %s81, %s82
      %p96 = scmp.eq.s32.totalorder %s34, 1
      %p97 = por %p95, %p96
      %p99 = scmp.ne.s32.totalorder %s82, %s98
      %p100 = scmp.eq.s32.totalorder %s34, 0
      %p101 = por %p99, %p100
      %s102 = ssub.s32 %s35, %s47
      %p103 = scmp.eq.s32.totalorder %s102, 0
      %s105 = sadd.s32 %s104, 1
      %s106 = scalar_select %p103, %s104, %s105
      %p109 = pneg %p103
      %p110 = scmp.eq.s32.totalorder %s28, 1
      %p111 = por %p109, %p110
      %p112 = scmp.ne.s32.totalorder %s104, %s107
      %p113 = scmp.eq.s32.totalorder %s28, 0
      %p114 = por %p112, %p113
      %p115 = scmp.ne.s32.totalorder %s104, %s107
      %p116 = scmp.eq.s32.totalorder %s33, 1
      %p117 = por %p115, %p116
      %p118 = scmp.ne.s32.totalorder %s107, %s108
      %p119 = scmp.eq.s32.totalorder %s33, 0
      %p120 = por %p118, %p119
      %p121 = scmp.ne.s32.totalorder %s107, %s108
      %p122 = scmp.eq.s32.totalorder %s34, 1
      %p123 = por %p121, %p122
      %p125 = scmp.ne.s32.totalorder %s108, %s124
      %p126 = scmp.eq.s32.totalorder %s34, 0
      %p127 = por %p125, %p126
      %s129 = sadd.s32 %s128, 1
      %p132 = scmp.eq.s32.totalorder %s28, 1
      %p133 = scmp.ne.s32.totalorder %s128, %s130
      %p134 = scmp.eq.s32.totalorder %s28, 0
      %p135 = por %p133, %p134
      %p136 = scmp.ne.s32.totalorder %s128, %s130
      %p137 = scmp.eq.s32.totalorder %s33, 1
      %p138 = por %p136, %p137
      %p139 = scmp.ne.s32.totalorder %s130, %s131
      %p140 = scmp.eq.s32.totalorder %s33, 0
      %p141 = por %p139, %p140
      %p142 = scmp.ne.s32.totalorder %s130, %s131
      %p143 = scmp.eq.s32.totalorder %s34, 1
      %p144 = por %p142, %p143
      %p146 = scmp.ne.s32.totalorder %s131, %s145
      %p147 = scmp.eq.s32.totalorder %s34, 0
      %p148 = por %p146, %p147
      %s150 = sadd.s32 %s149, 1
      %p153 = scmp.eq.s32.totalorder %s28, 1
      %p154 = scmp.ne.s32.totalorder %s149, %s151
      %p155 = scmp.eq.s32.totalorder %s28, 0
      %p156 = por %p154, %p155
      %p157 = scmp.ne.s32.totalorder %s149, %s151
      %p158 = scmp.eq.s32.totalorder %s33, 1
      %p159 = por %p157, %p158
      %p160 = scmp.ne.s32.totalorder %s151, %s152
      %p161 = scmp.eq.s32.totalorder %s33, 0
      %p162 = por %p160, %p161
      %p163 = scmp.ne.s32.totalorder %s151, %s152
      %p164 = scmp.eq.s32.totalorder %s34, 1
      %p165 = por %p163, %p164
      %p167 = scmp.ne.s32.totalorder %s152, %s166
      %p168 = scmp.eq.s32.totalorder %s34, 0
      %p169 = por %p167, %p168
      %s171 = sadd.s32 %s170, 1
      %p174 = scmp.eq.s32.totalorder %s28, 1
      %p175 = scmp.ne.s32.totalorder %s170, %s172
      %p176 = scmp.eq.s32.totalorder %s28, 0
      %p177 = por %p175, %p176
      %p178 = scmp.ne.s32.totalorder %s170, %s172
      %p179 = scmp.eq.s32.totalorder %s33, 1
      %p180 = por %p178, %p179
      %p181 = scmp.ne.s32.totalorder %s172, %s173
      %p182 = scmp.eq.s32.totalorder %s33, 0
      %p183 = por %p181, %p182
      %p184 = scmp.ne.s32.totalorder %s172, %s173
      %p185 = scmp.eq.s32.totalorder %s34, 1
      %p186 = por %p184, %p185
      %p188 = scmp.ne.s32.totalorder %s173, %s187
      %p189 = scmp.eq.s32.totalorder %s34, 0
      %p190 = por %p188, %p189
      %s192 = sadd.s32 %s191, 1
      %p195 = scmp.eq.s32.totalorder %s28, 1
      %p196 = scmp.ne.s32.totalorder %s191, %s193
      %p197 = scmp.eq.s32.totalorder %s28, 0
      %p198 = por %p196, %p197
      %p199 = scmp.ne.s32.totalorder %s191, %s193
      %p200 = scmp.eq.s32.totalorder %s33, 1
      %p201 = por %p199, %p200
      %p202 = scmp.ne.s32.totalorder %s193, %s194
      %p203 = scmp.eq.s32.totalorder %s33, 0
      %p204 = por %p202, %p203
      %p205 = scmp.ne.s32.totalorder %s193, %s194
      %p206 = scmp.eq.s32.totalorder %s34, 1
      %p207 = por %p205, %p206
      %p209 = scmp.ne.s32.totalorder %s194, %s208
      %p210 = scmp.eq.s32.totalorder %s34, 0
      %p211 = por %p209, %p210
      %s213 = sadd.s32 %s212, 1
      %p216 = scmp.eq.s32.totalorder %s28, 1
      %p217 = scmp.ne.s32.totalorder %s212, %s214
      %p218 = scmp.eq.s32.totalorder %s28, 0
      %p219 = por %p217, %p218
      %p220 = scmp.ne.s32.totalorder %s212, %s214
      %p221 = scmp.eq.s32.totalorder %s33, 1
      %p222 = por %p220, %p221
      %p223 = scmp.ne.s32.totalorder %s214, %s215
      %p224 = scmp.eq.s32.totalorder %s33, 0
      %p225 = por %p223, %p224
      %p226 = scmp.ne.s32.totalorder %s214, %s215
      %p227 = scmp.eq.s32.totalorder %s34, 1
      %p228 = por %p226, %p227
      %p230 = scmp.ne.s32.totalorder %s215, %s229
      %p231 = scmp.eq.s32.totalorder %s34, 0
      %p232 = por %p230, %p231
      %s234 = sadd.s32 %s233, 1
      %p237 = scmp.eq.s32.totalorder %s28, 1
      %p238 = scmp.ne.s32.totalorder %s233, %s235
      %p239 = scmp.eq.s32.totalorder %s28, 0
      %p240 = por %p238, %p239
      %p241 = scmp.ne.s32.totalorder %s233, %s235
      %p242 = scmp.eq.s32.totalorder %s33, 1
      %p243 = por %p241, %p242
      %p244 = scmp.ne.s32.totalorder %s235, %s236
      %p245 = scmp.eq.s32.totalorder %s33, 0
      %p246 = por %p244, %p245
      %p247 = scmp.ne.s32.totalorder %s235, %s236
      %p248 = scmp.eq.s32.totalorder %s34, 1
      %p249 = por %p247, %p248
      %p251 = scmp.ne.s32.totalorder %s236, %s250
      %p252 = scmp.eq.s32.totalorder %s34, 0
      %p253 = por %p251, %p252
      %s255 = sadd.s32 %s254, 1
      %p258 = scmp.eq.s32.totalorder %s28, 1
      %p259 = scmp.ne.s32.totalorder %s254, %s256
      %p260 = scmp.eq.s32.totalorder %s28, 0
      %p261 = por %p259, %p260
      %p262 = scmp.ne.s32.totalorder %s254, %s256
      %p263 = scmp.eq.s32.totalorder %s33, 1
      %p264 = por %p262, %p263
      %p265 = scmp.ne.s32.totalorder %s256, %s257
      %p266 = scmp.eq.s32.totalorder %s33, 0
      %p267 = por %p265, %p266
      %p268 = scmp.ne.s32.totalorder %s256, %s257
      %p269 = scmp.eq.s32.totalorder %s34, 1
      %p270 = por %p268, %p269
      %p272 = scmp.ne.s32.totalorder %s257, %s271
      %p273 = scmp.eq.s32.totalorder %s34, 0
      %p274 = por %p272, %p273
      %s276 = sadd.s32 %s275, 1
      %p279 = scmp.eq.s32.totalorder %s28, 1
      %p280 = scmp.ne.s32.totalorder %s275, %s277
      %p281 = scmp.eq.s32.totalorder %s28, 0
      %p282 = por %p280, %p281
      %p283 = scmp.ne.s32.totalorder %s275, %s277
      %p284 = scmp.eq.s32.totalorder %s33, 1
      %p285 = por %p283, %p284
      %p286 = scmp.ne.s32.totalorder %s277, %s278
      %p287 = scmp.eq.s32.totalorder %s33, 0
      %p288 = por %p286, %p287
      %p289 = scmp.ne.s32.totalorder %s277, %s278
      %p290 = scmp.eq.s32.totalorder %s34, 1
      %p291 = por %p289, %p290
      %p293 = scmp.ne.s32.totalorder %s278, %s292
      %p294 = scmp.eq.s32.totalorder %s34, 0
      %p295 = por %p293, %p294
      %s297 = sadd.s32 %s296, 1
      %p300 = scmp.eq.s32.totalorder %s28, 1
      %p301 = scmp.ne.s32.totalorder %s296, %s298
      %p302 = scmp.eq.s32.totalorder %s28, 0
      %p303 = por %p301, %p302
      %p304 = scmp.ne.s32.totalorder %s296, %s298
      %p305 = scmp.eq.s32.totalorder %s33, 1
      %p306 = por %p304, %p305
      %p307 = scmp.ne.s32.totalorder %s298, %s299
      %p308 = scmp.eq.s32.totalorder %s33, 0
      %p309 = por %p307, %p308
      %p310 = scmp.ne.s32.totalorder %s298, %s299
      %p311 = scmp.eq.s32.totalorder %s34, 1
      %p312 = por %p310, %p311
      %p314 = scmp.ne.s32.totalorder %s299, %s313
      %p315 = scmp.eq.s32.totalorder %s34, 0
      %p316 = por %p314, %p315
      %s318 = sadd.s32 %s317, 1
      %p321 = scmp.eq.s32.totalorder %s28, 1
      %p322 = scmp.ne.s32.totalorder %s317, %s319
      %p323 = scmp.eq.s32.totalorder %s28, 0
      %p324 = por %p322, %p323
      %p325 = scmp.ne.s32.totalorder %s317, %s319
      %p326 = scmp.eq.s32.totalorder %s33, 1
      %p327 = por %p325, %p326
      %p328 = scmp.ne.s32.totalorder %s319, %s320
      %p329 = scmp.eq.s32.totalorder %s33, 0
      %p330 = por %p328, %p329
      %p331 = scmp.ne.s32.totalorder %s319, %s320
      %p332 = scmp.eq.s32.totalorder %s34, 1
      %p333 = por %p331, %p332
      %p335 = scmp.ne.s32.totalorder %s320, %s334
      %p336 = scmp.eq.s32.totalorder %s34, 0
      %p337 = por %p335, %p336
      %s339 = sadd.s32 %s338, 1
      %p342 = scmp.eq.s32.totalorder %s28, 1
      %p343 = scmp.ne.s32.totalorder %s338, %s340
      %p344 = scmp.eq.s32.totalorder %s28, 0
      %p345 = por %p343, %p344
      %p346 = scmp.ne.s32.totalorder %s338, %s340
      %p347 = scmp.eq.s32.totalorder %s33, 1
      %p348 = por %p346, %p347
      %p349 = scmp.ne.s32.totalorder %s340, %s341
      %p350 = scmp.eq.s32.totalorder %s33, 0
      %p351 = por %p349, %p350
      %p352 = scmp.ne.s32.totalorder %s340, %s341
      %p353 = scmp.eq.s32.totalorder %s34, 1
      %p354 = por %p352, %p353
      %p356 = scmp.ne.s32.totalorder %s341, %s355
      %p357 = scmp.eq.s32.totalorder %s34, 0
      %p358 = por %p356, %p357
      %s360 = sadd.s32 %s359, 1
      %p363 = scmp.eq.s32.totalorder %s28, 1
      %p364 = scmp.ne.s32.totalorder %s359, %s361
      %p365 = scmp.eq.s32.totalorder %s28, 0
      %p366 = por %p364, %p365
      %p367 = scmp.ne.s32.totalorder %s359, %s361
      %p368 = scmp.eq.s32.totalorder %s33, 1
      %p369 = por %p367, %p368
      %p370 = scmp.ne.s32.totalorder %s361, %s362
      %p371 = scmp.eq.s32.totalorder %s33, 0
      %p372 = por %p370, %p371
      %p373 = scmp.ne.s32.totalorder %s361, %s362
      %p374 = scmp.eq.s32.totalorder %s34, 1
      %p375 = por %p373, %p374
      %p377 = scmp.ne.s32.totalorder %s362, %s376
      %p378 = scmp.eq.s32.totalorder %s34, 0
      %p379 = por %p377, %p378
      %s381 = sadd.s32 %s380, 1
      %p384 = scmp.eq.s32.totalorder %s28, 1
      %p385 = scmp.ne.s32.totalorder %s380, %s382
      %p386 = scmp.eq.s32.totalorder %s28, 0
      %p387 = por %p385, %p386
      %p388 = scmp.ne.s32.totalorder %s380, %s382
      %p389 = scmp.eq.s32.totalorder %s33, 1
      %p390 = por %p388, %p389
      %p391 = scmp.ne.s32.totalorder %s382, %s383
      %p392 = scmp.eq.s32.totalorder %s33, 0
      %p393 = por %p391, %p392
      %p394 = scmp.ne.s32.totalorder %s382, %s383
      %p395 = scmp.eq.s32.totalorder %s34, 1
      %p396 = por %p394, %p395
      %p398 = scmp.ne.s32.totalorder %s383, %s397
      %p399 = scmp.eq.s32.totalorder %s34, 0
      %p400 = por %p398, %p399
      %s402 = sadd.s32 %s401, 1
      %p405 = scmp.eq.s32.totalorder %s28, 1
      %p406 = scmp.ne.s32.totalorder %s401, %s403
      %p407 = scmp.eq.s32.totalorder %s28, 0
      %p408 = por %p406, %p407
      %p409 = scmp.ne.s32.totalorder %s401, %s403
      %p410 = scmp.eq.s32.totalorder %s33, 1
      %p411 = por %p409, %p410
      %p412 = scmp.ne.s32.totalorder %s403, %s404
      %p413 = scmp.eq.s32.totalorder %s33, 0
      %p414 = por %p412, %p413
      %p415 = scmp.ne.s32.totalorder %s403, %s404
      %p416 = scmp.eq.s32.totalorder %s34, 1
      %p417 = por %p415, %p416
      %p419 = scmp.ne.s32.totalorder %s404, %s418
      %p420 = scmp.eq.s32.totalorder %s34, 0
      %p421 = por %p419, %p420
      %s423 = sadd.s32 %s422, 1
      %p426 = scmp.eq.s32.totalorder %s28, 1
      %p427 = scmp.ne.s32.totalorder %s422, %s424
      %p428 = scmp.eq.s32.totalorder %s28, 0
      %p429 = por %p427, %p428
      %p430 = scmp.ne.s32.totalorder %s422, %s424
      %p431 = scmp.eq.s32.totalorder %s33, 1
      %p432 = por %p430, %p431
      %p433 = scmp.ne.s32.totalorder %s424, %s425
      %p434 = scmp.eq.s32.totalorder %s33, 0
      %p435 = por %p433, %p434
      %p436 = scmp.ne.s32.totalorder %s424, %s425
      %p437 = scmp.eq.s32.totalorder %s34, 1
      %p438 = por %p436, %p437
      %p440 = scmp.ne.s32.totalorder %s425, %s439
      %p441 = scmp.eq.s32.totalorder %s34, 0
      %p442 = por %p440, %p441
      %s444 = sadd.s32 %s443, 1
      %p447 = scmp.eq.s32.totalorder %s28, 1
      %p448 = scmp.ne.s32.totalorder %s443, %s445
      %p449 = scmp.eq.s32.totalorder %s28, 0
      %p450 = por %p448, %p449
      %p451 = scmp.ne.s32.totalorder %s443, %s445
      %p452 = scmp.eq.s32.totalorder %s33, 1
      %p453 = por %p451, %p452
      %p454 = scmp.ne.s32.totalorder %s445, %s446
      %p455 = scmp.eq.s32.totalorder %s33, 0
      %p456 = por %p454, %p455
      %p457 = scmp.ne.s32.totalorder %s445, %s446
      %p458 = scmp.eq.s32.totalorder %s34, 1
      %p459 = por %p457, %p458
      %p461 = scmp.ne.s32.totalorder %s446, %s460
      %p462 = scmp.eq.s32.totalorder %s34, 0
      %p463 = por %p461, %p462
      %s464 = ssub.s32 %s36, %s43
      %s465 = ssub.s32 %s35, %s47
      %s466 = sor.u32 %s464, %s465
      %p467 = scmp.eq.s32.totalorder %s466, 0
      %s469 = sadd.s32 %s468, 1
      %s470 = scalar_select %p467, %s468, %s469
      %p473 = pneg %p467
      %p474 = scmp.eq.s32.totalorder %s28, 1
      %p475 = por %p473, %p474
      %p476 = scmp.ne.s32.totalorder %s468, %s471
      %p477 = scmp.eq.s32.totalorder %s28, 0
      %p478 = por %p476, %p477
      %p479 = scmp.ne.s32.totalorder %s468, %s471
      %p480 = scmp.eq.s32.totalorder %s33, 1
      %p481 = por %p479, %p480
      %p482 = scmp.ne.s32.totalorder %s471, %s472
      %p483 = scmp.eq.s32.totalorder %s33, 0
      %p484 = por %p482, %p483
      %p485 = scmp.ne.s32.totalorder %s471, %s472
      %p486 = scmp.eq.s32.totalorder %s34, 1
      %p487 = por %p485, %p486
      %p489 = scmp.ne.s32.totalorder %s472, %s488
      %p490 = scmp.eq.s32.totalorder %s34, 0
      %p491 = por %p489, %p490
      %s492 = ssub.s32 %s35, %s47
      %p493 = scmp.eq.s32.totalorder %s492, 0
      %s495 = sadd.s32 %s494, 1
      %s496 = scalar_select %p493, %s494, %s495
      %p499 = pneg %p493
      %p500 = scmp.eq.s32.totalorder %s28, 1
      %p501 = por %p499, %p500
      %p502 = scmp.ne.s32.totalorder %s494, %s497
      %p503 = scmp.eq.s32.totalorder %s28, 0
      %p504 = por %p502, %p503
      %p505 = scmp.ne.s32.totalorder %s494, %s497
      %p506 = scmp.eq.s32.totalorder %s33, 1
      %p507 = por %p505, %p506
      %p508 = scmp.ne.s32.totalorder %s497, %s498
      %p509 = scmp.eq.s32.totalorder %s33, 0
      %p510 = por %p508, %p509
      %p511 = scmp.ne.s32.totalorder %s497, %s498
      %p512 = scmp.eq.s32.totalorder %s34, 1
      %p513 = por %p511, %p512
      %p515 = scmp.ne.s32.totalorder %s498, %s514
      %p516 = scmp.eq.s32.totalorder %s34, 0
      %p517 = por %p515, %p516
      %s518 = ssub.s32 %s35, %s47
      %p519 = scmp.eq.s32.totalorder %s518, 0
      %s521 = sadd.s32 %s520, 1
      %s522 = scalar_select %p519, %s520, %s521
      %p525 = pneg %p519
      %p526 = scmp.eq.s32.totalorder %s28, 1
      %p527 = por %p525, %p526
      %p528 = scmp.ne.s32.totalorder %s520, %s523
      %p529 = scmp.eq.s32.totalorder %s28, 0
      %p530 = por %p528, %p529
      %p531 = scmp.ne.s32.totalorder %s520, %s523
      %p532 = scmp.eq.s32.totalorder %s33, 1
      %p533 = por %p531, %p532
      %p534 = scmp.ne.s32.totalorder %s523, %s524
      %p535 = scmp.eq.s32.totalorder %s33, 0
      %p536 = por %p534, %p535
      %p537 = scmp.ne.s32.totalorder %s523, %s524
      %p538 = scmp.eq.s32.totalorder %s34, 1
      %p539 = por %p537, %p538
      %p541 = scmp.ne.s32.totalorder %s524, %s540
      %p542 = scmp.eq.s32.totalorder %s34, 0
      %p543 = por %p541, %p542
      %p544 = scmp.le.s32.totalorder 1, %s28
      %p545 = scmp.lt.s32.totalorder %s28, 3
      %p546 = pnand %p544, %p545
      %p547 = pneg %p546
      // Predicated region
      $region9: #{rnn_forward_sequence.1} parent=5 // pred_check
        _
      $region10: #{rnn_forward_sequence.1} parent=5 // pred_check_branch
        %549 = sbr.rel (%p546) target = $region12
      $region11: #{rnn_forward_sequence.1} parent=5 // pred_region
        %s550 = ssub.s32 %s28, 1
        // Predicated region
        $region13: #{rnn_forward_sequence.1} parent=11 // pred_check
          %p551 = pneg %p141
        $region14: #{rnn_forward_sequence.1} parent=11 // pred_check_branch
          %553 = sbr.rel (%p551) target = $region16
        $region15: #{rnn_forward_sequence.1} parent=11 // pred_region
          _
        $region16: #{rnn_forward_sequence.1} parent=11 // pred_fallthru
          _
        // Predicated region
        $region17: #{rnn_forward_sequence.1} parent=11 // pred_check
          %p554 = pneg %p162
        $region18: #{rnn_forward_sequence.1} parent=11 // pred_check_branch
          %556 = sbr.rel (%p554) target = $region20
        $region19: #{rnn_forward_sequence.1} parent=11 // pred_region
          _
        $region20: #{rnn_forward_sequence.1} parent=11 // pred_fallthru
          _
        // Predicated region
        $region21: #{rnn_forward_sequence.1} parent=11 // pred_check
          %p557 = pneg %p183
        $region22: #{rnn_forward_sequence.1} parent=11 // pred_check_branch
          %559 = sbr.rel (%p557) target = $region24
        $region23: #{rnn_forward_sequence.1} parent=11 // pred_region
          _
        $region24: #{rnn_forward_sequence.1} parent=11 // pred_fallthru
          _
        // Predicated region
        $region25: #{rnn_forward_sequence.1} parent=11 // pred_check
          %p560 = pneg %p204
        $region26: #{rnn_forward_sequence.1} parent=11 // pred_check_branch
          %562 = sbr.rel (%p560) target = $region28
        $region27: #{rnn_forward_sequence.1} parent=11 // pred_region
          _
        $region28: #{rnn_forward_sequence.1} parent=11 // pred_fallthru
          _
        // Predicated region
        $region29: #{rnn_forward_sequence.1} parent=11 // pred_check
          %p563 = pneg %p225
        $region30: #{rnn_forward_sequence.1} parent=11 // pred_check_branch
          %565 = sbr.rel (%p563) target = $region32
        $region31: #{rnn_forward_sequence.1} parent=11 // pred_region
          _
        $region32: #{rnn_forward_sequence.1} parent=11 // pred_fallthru
          _
        // Predicated region
        $region33: #{rnn_forward_sequence.1} parent=11 // pred_check
          %p566 = pneg %p246
        $region34: #{rnn_forward_sequence.1} parent=11 // pred_check_branch
          %568 = sbr.rel (%p566) target = $region36
        $region35: #{rnn_forward_sequence.1} parent=11 // pred_region
          _
        $region36: #{rnn_forward_sequence.1} parent=11 // pred_fallthru
          _
        // Predicated region
        $region37: #{rnn_forward_sequence.1} parent=11 // pred_check
          %p569 = pneg %p267
        $region38: #{rnn_forward_sequence.1} parent=11 // pred_check_branch
          %571 = sbr.rel (%p569) target = $region40
        $region39: #{rnn_forward_sequence.1} parent=11 // pred_region
          _
        $region40: #{rnn_forward_sequence.1} parent=11 // pred_fallthru
          _
        // Predicated region
        $region41: #{rnn_forward_sequence.1} parent=11 // pred_check
          %p572 = pneg %p288
        $region42: #{rnn_forward_sequence.1} parent=11 // pred_check_branch
          %574 = sbr.rel (%p572) target = $region44
        $region43: #{rnn_forward_sequence.1} parent=11 // pred_region
          _
        $region44: #{rnn_forward_sequence.1} parent=11 // pred_fallthru
          _
        // Predicated region
        $region45: #{rnn_forward_sequence.1} parent=11 // pred_check
          %p575 = pneg %p309
        $region46: #{rnn_forward_sequence.1} parent=11 // pred_check_branch
          %577 = sbr.rel (%p575) target = $region48
        $region47: #{rnn_forward_sequence.1} parent=11 // pred_region
          _
        $region48: #{rnn_forward_sequence.1} parent=11 // pred_fallthru
          _
        // Predicated region
        $region49: #{rnn_forward_sequence.1} parent=11 // pred_check
          %p578 = pneg %p330
        $region50: #{rnn_forward_sequence.1} parent=11 // pred_check_branch
          %580 = sbr.rel (%p578) target = $region52
        $region51: #{rnn_forward_sequence.1} parent=11 // pred_region
          _
        $region52: #{rnn_forward_sequence.1} parent=11 // pred_fallthru
          _
        // Predicated region
        $region53: #{rnn_forward_sequence.1} parent=11 // pred_check
          %p581 = pneg %p351
        $region54: #{rnn_forward_sequence.1} parent=11 // pred_check_branch
          %583 = sbr.rel (%p581) target = $region56
        $region55: #{rnn_forward_sequence.1} parent=11 // pred_region
          _
        $region56: #{rnn_forward_sequence.1} parent=11 // pred_fallthru
          _
        // Predicated region
        $region57: #{rnn_forward_sequence.1} parent=11 // pred_check
          %p584 = pneg %p372
        $region58: #{rnn_forward_sequence.1} parent=11 // pred_check_branch
          %586 = sbr.rel (%p584) target = $region60
        $region59: #{rnn_forward_sequence.1} parent=11 // pred_region
          _
        $region60: #{rnn_forward_sequence.1} parent=11 // pred_fallthru
          _
        // Predicated region
        $region61: #{rnn_forward_sequence.1} parent=11 // pred_check
          %p587 = pneg %p393
        $region62: #{rnn_forward_sequence.1} parent=11 // pred_check_branch
          %589 = sbr.rel (%p587) target = $region64
        $region63: #{rnn_forward_sequence.1} parent=11 // pred_region
          _
        $region64: #{rnn_forward_sequence.1} parent=11 // pred_fallthru
          _
        // Predicated region
        $region65: #{rnn_forward_sequence.1} parent=11 // pred_check
          %p590 = pneg %p414
        $region66: #{rnn_forward_sequence.1} parent=11 // pred_check_branch
          %592 = sbr.rel (%p590) target = $region68
        $region67: #{rnn_forward_sequence.1} parent=11 // pred_region
          _
        $region68: #{rnn_forward_sequence.1} parent=11 // pred_fallthru
          _
        // Predicated region
        $region69: #{rnn_forward_sequence.1} parent=11 // pred_check
          %p593 = pneg %p435
        $region70: #{rnn_forward_sequence.1} parent=11 // pred_check_branch
          %595 = sbr.rel (%p593) target = $region72
        $region71: #{rnn_forward_sequence.1} parent=11 // pred_region
          _
        $region72: #{rnn_forward_sequence.1} parent=11 // pred_fallthru
          _
        // Predicated region
        $region73: #{rnn_forward_sequence.1} parent=11 // pred_check
          %p596 = pneg %p456
        $region74: #{rnn_forward_sequence.1} parent=11 // pred_check_branch
          %598 = sbr.rel (%p596) target = $region76
        $region75: #{rnn_forward_sequence.1} parent=11 // pred_region
          _
        $region76: #{rnn_forward_sequence.1} parent=11 // pred_fallthru
          _
      $region12: #{rnn_forward_sequence.1} parent=5 // pred_fallthru
        _
      %p599 = scmp.lt.s32.totalorder %s28, 2
      // Predicated region
      $region77: #{rnn_forward_sequence.1} parent=5 // pred_check
        %p600 = pneg %p599
      $region78: #{rnn_forward_sequence.1} parent=5 // pred_check_branch
        %602 = sbr.rel (%p600) target = $region80
      $region79: #{rnn_forward_sequence.1} parent=5 // pred_region
        // Predicated region
        $region81: #{rnn_forward_sequence.1} parent=79 // pred_check
          %p603 = pneg %p62
        $region82: #{rnn_forward_sequence.1} parent=79 // pred_check_branch
          %605 = sbr.rel (%p603) target = $region84
        $region83: #{rnn_forward_sequence.1} parent=79 // pred_region
          %s606 = sand.u32 %s52, 1
          %s607 = sand.u32 %s52, 1
          %s608 = smul.addr %s607, 32
          %s609 = scalar_lea.vmem [#allocation4], %s608
          %s610 = smul.u32 8, %s36
          %s611 = smul.addr %s610, 2
          %s612 = sadd.s32 %s35, %s611
          %s613 = smul.addr %s612, 4
          %s614 = scalar_lea.vmem %s0, %s613
          // Predicated region
          $region85: #{rnn_forward_sequence.1} parent=83 // pred_check
            _
          $region86: #{rnn_forward_sequence.1} parent=83 // pred_check_branch
            %616 = sbr.rel (0) target = $region88
          $region87: #{rnn_forward_sequence.1} parent=83 // pred_region
            // Predicated region
            $region89: #{rnn_forward_sequence.1} parent=87 // pred_check
              _
            $region90: #{rnn_forward_sequence.1} parent=87 // pred_check_branch
              %618 = sbr.rel target = $region92
            $region91: #{rnn_forward_sequence.1} parent=87 // pred_region
              // Predicated region
              $region104: #{rnn_forward_sequence.1} parent=91 // pred_check
                _
              $region105: #{rnn_forward_sequence.1} parent=91 // pred_check_branch
                %648 = sbr.rel (0) target = $region107
              $region106: #{rnn_forward_sequence.1} parent=91 // pred_region
                loop: start=0, step=1, limit=1
                $region108: #{rnn_forward_sequence.1} parent=106 // loop_pre_header
                  _
                $region109: #{rnn_forward_sequence.1} parent=106 // loop_header
                  %s650 = sphi 0, %s654
                  %p651 = scmp.ge.s32.totalorder %s650, 1
                  %s655 = sphi %s614, %s614
                  %s656 = sphi %s609, %s609
                $region110: #{rnn_forward_sequence.1} parent=106 // loop_header_branch
                  %653 = sbr.rel (%p651) target = $region114
                $region111: #{rnn_forward_sequence.1} parent=106 // loop_body
                  _
                $region112: #{rnn_forward_sequence.1} parent=106 // loop_footer
                  %s654 = sadd.s32 1, %s650
                $region113: #{rnn_forward_sequence.1} parent=106 // loop_footer_branch
                  %649 = sbr.rel target = $region109
                $region114: #{rnn_forward_sequence.1} parent=106 // loop_exit
                  _
                %s658 = ssub.s32 16, 1
                loop: start=0, step=1, limit=1
                $region115: #{rnn_forward_sequence.1} parent=106 // loop_pre_header
                  _
                $region116: #{rnn_forward_sequence.1} parent=106 // loop_header
                  %s660 = sphi 0, %s664
                  %p661 = scmp.ge.s32.totalorder %s660, 1
                  %s665 = sphi %s614, %s614
                  %s666 = sphi %s609, %s609
                $region117: #{rnn_forward_sequence.1} parent=106 // loop_header_branch
                  %663 = sbr.rel (%p661) target = $region121
                $region118: #{rnn_forward_sequence.1} parent=106 // loop_body
                  %v667 = vld [vmem:[%s665] sm:%s658]
                  %668 = vst [vmem:[%s666] sm:%s658] %v667
                  %v669 = vld [vmem:[%s665 + $0x8] sm:%s658]
                  %670 = vst [vmem:[%s666 + $0x4] sm:%s658] %v669
                  %v671 = vld [vmem:[%s665 + $0x10] sm:%s658]
                  %672 = vst [vmem:[%s666 + $0x8] sm:%s658] %v671
                  %v673 = vld [vmem:[%s665 + $0x18] sm:%s658]
                  %674 = vst [vmem:[%s666 + $0xc] sm:%s658] %v673
                  %v675 = vld [vmem:[%s665 + $0x20] sm:%s658]
                  %676 = vst [vmem:[%s666 + $0x10] sm:%s658] %v675
                  %v677 = vld [vmem:[%s665 + $0x28] sm:%s658]
                  %678 = vst [vmem:[%s666 + $0x14] sm:%s658] %v677
                  %v679 = vld [vmem:[%s665 + $0x30] sm:%s658]
                  %680 = vst [vmem:[%s666 + $0x18] sm:%s658] %v679
                  %v681 = vld [vmem:[%s665 + $0x38] sm:%s658]
                  %682 = vst [vmem:[%s666 + $0x1c] sm:%s658] %v681
                $region119: #{rnn_forward_sequence.1} parent=106 // loop_footer
                  %s664 = sadd.s32 1, %s660
                $region120: #{rnn_forward_sequence.1} parent=106 // loop_footer_branch
                  %659 = sbr.rel target = $region116
                $region121: #{rnn_forward_sequence.1} parent=106 // loop_exit
                  _
              $region107: #{rnn_forward_sequence.1} parent=91 // pred_fallthru
                _
            $region92: #{rnn_forward_sequence.1} parent=87 // pred_fallthru
              _
            // Predicated region
            $region93: #{rnn_forward_sequence.1} parent=87 // pred_check
              _
            $region94: #{rnn_forward_sequence.1} parent=87 // pred_check_branch
              %620 = sbr.rel (0) target = $region96
            $region95: #{rnn_forward_sequence.1} parent=87 // pred_region
              %s622 = ssub.s32 16, 1
              loop: start=0, step=1, limit=1
              $region97: #{rnn_forward_sequence.1} parent=95 // loop_pre_header
                _
              $region98: #{rnn_forward_sequence.1} parent=95 // loop_header
                %s624 = sphi 0, %s628
                %p625 = scmp.ge.s32.totalorder %s624, 1
                %s629 = sphi %s614, %s614
                %s630 = sphi %s609, %s609
              $region99: #{rnn_forward_sequence.1} parent=95 // loop_header_branch
                %627 = sbr.rel (%p625) target = $region103
              $region100: #{rnn_forward_sequence.1} parent=95 // loop_body
                %v631 = vld [vmem:[%s629] sm:%s622]
                %632 = vst [vmem:[%s630] sm:%s622] %v631
                %v633 = vld [vmem:[%s629 + $0x8] sm:%s622]
                %634 = vst [vmem:[%s630 + $0x4] sm:%s622] %v633
                %v635 = vld [vmem:[%s629 + $0x10] sm:%s622]
                %636 = vst [vmem:[%s630 + $0x8] sm:%s622] %v635
                %v637 = vld [vmem:[%s629 + $0x18] sm:%s622]
                %638 = vst [vmem:[%s630 + $0xc] sm:%s622] %v637
                %v639 = vld [vmem:[%s629 + $0x20] sm:%s622]
                %640 = vst [vmem:[%s630 + $0x10] sm:%s622] %v639
                %v641 = vld [vmem:[%s629 + $0x28] sm:%s622]
                %642 = vst [vmem:[%s630 + $0x14] sm:%s622] %v641
                %v643 = vld [vmem:[%s629 + $0x30] sm:%s622]
                %644 = vst [vmem:[%s630 + $0x18] sm:%s622] %v643
                %v645 = vld [vmem:[%s629 + $0x38] sm:%s622]
                %646 = vst [vmem:[%s630 + $0x1c] sm:%s622] %v645
              $region101: #{rnn_forward_sequence.1} parent=95 // loop_footer
                %s628 = sadd.s32 1, %s624
              $region102: #{rnn_forward_sequence.1} parent=95 // loop_footer_branch
                %623 = sbr.rel target = $region98
              $region103: #{rnn_forward_sequence.1} parent=95 // loop_exit
                _
            $region96: #{rnn_forward_sequence.1} parent=87 // pred_fallthru
              _
          $region88: #{rnn_forward_sequence.1} parent=83 // pred_fallthru
            _
          %683 = vnop
        $region84: #{rnn_forward_sequence.1} parent=79 // pred_fallthru
          _
        // Predicated region
        $region122: #{rnn_forward_sequence.1} parent=79 // pred_check
          %p684 = pneg %p88
        $region123: #{rnn_forward_sequence.1} parent=79 // pred_check_branch
          %686 = sbr.rel (%p684) target = $region125
        $region124: #{rnn_forward_sequence.1} parent=79 // pred_region
          %p687 = scmp.lt.s32.totalorder %s35, 1
          %s688 = scalar_select %p687, %s35, 1
          %s689 = smul.addr %s688, 8
          %s690 = scalar_lea.vmem %s1, %s689
        $region125: #{rnn_forward_sequence.1} parent=79 // pred_fallthru
          _
        // Predicated region
        $region126: #{rnn_forward_sequence.1} parent=79 // pred_check
          %p691 = pneg %p114
        $region127: #{rnn_forward_sequence.1} parent=79 // pred_check_branch
          %693 = sbr.rel (%p691) target = $region129
        $region128: #{rnn_forward_sequence.1} parent=79 // pred_region
          %p694 = scmp.lt.s32.totalorder %s35, 1
          %s695 = scalar_select %p694, %s35, 1
          %s696 = smul.addr %s695, 8
          %s697 = scalar_lea.vmem %s2, %s696
        $region129: #{rnn_forward_sequence.1} parent=79 // pred_fallthru
          _
      $region80: #{rnn_forward_sequence.1} parent=5 // pred_fallthru
        _
      %p698 = scmp.le.s32.totalorder 1, %s28
      %p699 = scmp.lt.s32.totalorder %s28, 3
      %p700 = pnand %p698, %p699
      %p701 = pneg %p700
      // Predicated region
      $region130: #{rnn_forward_sequence.1} parent=5 // pred_check
        _
      $region131: #{rnn_forward_sequence.1} parent=5 // pred_check_branch
        %703 = sbr.rel (%p700) target = $region133
      $region132: #{rnn_forward_sequence.1} parent=5 // pred_region
        %s704 = ssub.s32 %s28, 1
        %s705 = sand.u32 %s55, 1
        %s706 = sand.u32 %s55, 1
        %s707 = smul.addr %s706, 32
        %s708 = scalar_lea.vmem [#allocation4], %s707
        // Predicated region
        $region134: #{rnn_forward_sequence.1} parent=132 // pred_check
          %p709 = pneg %p68
        $region135: #{rnn_forward_sequence.1} parent=132 // pred_check_branch
          %711 = sbr.rel (%p709) target = $region137
        $region136: #{rnn_forward_sequence.1} parent=132 // pred_region
          _
        $region137: #{rnn_forward_sequence.1} parent=132 // pred_fallthru
          _
        %s712 = sand.u32 %s55, 1
        %s713 = sand.u32 %s55, 1
        %s714 = smul.addr %s713, 32
        %s715 = scalar_lea.vmem [#allocation4], %s714
        %p716 = pneg %p68
        %p717 = pneg %p65
        %p718 = scmp.lt.s32.totalorder %s37, 1
        %s719 = scalar_select %p718, %s37, 1
        %s720 = smul.addr %s719, 8
        %s721 = scalar_lea.vmem %s1, %s720
        %p722 = pneg %p94
        %p723 = pneg %p91
        %p724 = scmp.lt.s32.totalorder %s37, 1
        %s725 = scalar_select %p724, %s37, 1
        %s726 = smul.addr %s725, 8
        %s727 = scalar_lea.vmem %s2, %s726
        %p728 = pneg %p120
        %p729 = pneg %p117
        %p730 = pneg %p141
        %p731 = pneg %p138
        %p732 = pneg %p162
        %p733 = pneg %p159
        %p734 = pneg %p183
        %p735 = pneg %p180
        %p736 = pneg %p204
        %p737 = pneg %p201
        %p738 = pneg %p225
        %p739 = pneg %p222
        %p740 = pneg %p246
        %p741 = pneg %p243
        %p742 = pneg %p267
        %p743 = pneg %p264
        %p744 = pneg %p288
        %p745 = pneg %p285
        %p746 = pneg %p309
        %p747 = pneg %p306
        %p748 = pneg %p330
        %p749 = pneg %p327
        %p750 = pneg %p351
        %p751 = pneg %p348
        %p752 = pneg %p372
        %p753 = pneg %p369
        %p754 = pneg %p393
        %p755 = pneg %p390
        %p756 = pneg %p414
        %p757 = pneg %p411
        %p758 = pneg %p435
        %p759 = pneg %p432
        %p760 = pneg %p456
        %p761 = pneg %p453
        %p762 = pneg %p484
        %p763 = pneg %p481
        %s764 = sand.u32 %s471, 1
        %s765 = sand.u32 %s471, 1
        %s766 = smul.addr %s765, 64
        %s767 = scalar_lea.vmem [#allocation5], %s766
        %p768 = pneg %p510
        %p769 = pneg %p507
        %p770 = scmp.lt.s32.totalorder %s37, 1
        %s771 = scalar_select %p770, %s37, 1
        %s772 = smul.addr %s771, 8
        %s773 = scalar_lea.vmem %s20, %s772
        %p774 = pneg %p536
        %p775 = pneg %p533
        %p776 = scmp.lt.s32.totalorder %s37, 1
        %s777 = scalar_select %p776, %s37, 1
        %s778 = smul.addr %s777, 8
        %s779 = scalar_lea.vmem %s21, %s778
        %s780 = smul.u32 8, %s38
        %p781 = scmp.lt.s32.totalorder %s37, 1
        %s782 = scalar_select %p781, %s37, 1
        %s783 = smul.addr %s782, 8
        %s784 = scalar_lea.vmem %s1, %s783
        %p785 = scmp.lt.s32.totalorder %s37, 1
        %s786 = scalar_select %p785, %s37, 1
        %s787 = smul.addr %s786, 8
        %s788 = scalar_lea.vmem %s2, %s787
        %s789 = smul.u32 8, %s38
        %p790 = scmp.lt.s32.totalorder %s37, 1
        %s791 = scalar_select %p790, %s37, 1
        %s792 = smul.addr %s791, 8
        %s793 = scalar_lea.vmem %s20, %s792
        %p794 = scmp.lt.s32.totalorder %s37, 1
        %s795 = scalar_select %p794, %s37, 1
        %s796 = smul.addr %s795, 8
        %s797 = scalar_lea.vmem %s21, %s796
        %p799 = scmp.eq.s32.totalorder %s38, 0
        // Predicated region
        $region138: #{rnn_forward_sequence.1} parent=132 // pred_check
          %p800 = pneg %p799
        $region139: #{rnn_forward_sequence.1} parent=132 // pred_check_branch
          %802 = sbr.rel (%p800) target = $region141
        $region140: #{rnn_forward_sequence.1} parent=132 // pred_region
          %v803 = vld [vmem:[%s784] sm:$0xff]
          %vm804 = vcmask 23552
          %805 = vst.msk [vmem:[#allocation2] sm:$0xff] %vm804, %v803
          %v806 = vld [vmem:[%s788] sm:$0xff]
          %vm807 = vcmask 39936
          %808 = vst.msk [vmem:[#allocation3] sm:$0xff] %vm807, %v806
        $region141: #{rnn_forward_sequence.1} parent=132 // pred_fallthru
          _
        %v809 = vld [vmem:[%s3] sm:$0x3]
        %v810 = vld [vmem:[%s4] sm:$0x3]
        %v811 = vld [vmem:[%s5] sm:$0x7]
        %v812 = vld [vmem:[%s6] sm:$0x1]
        %v813 = vld [vmem:[%s7] sm:$0xf]
        %v814 = vld [vmem:[%s7 + $0x4] sm:$0xf]
        %v815 = vld [vmem:[%s8] sm:$0x1]
        %v816 = vld [vmem:[%s9] sm:$0xf]
        %v817 = vld [vmem:[%s10] sm:$0x1]
        %v818 = vld [vmem:[%s11] sm:$0xf]
        %v819 = vld [vmem:[%s11 + $0x4] sm:$0x3]
        %v820 = vld [vmem:[%s12] sm:$0x1]
        %v821 = vld [vmem:[%s13] sm:$0xf]
        %v822 = vld [vmem:[%s13 + $0x4] sm:$0xf]
        %v823 = vld [vmem:[%s14] sm:$0x1]
        %v824 = vld [vmem:[%s15] sm:$0xf]
        %v825 = vld [vmem:[%s16] sm:$0x1]
        %v826 = vld [vmem:[%s17] sm:$0x3]
        %v827 = vld [vmem:[%s18] sm:$0x1]
        %v828 = vld [vmem:[#allocation2] sm:$0xff]
        %v829 = vld [vmem:[#allocation3] sm:$0xff]
        %v830 = vld [vmem:[%s708] sm:$0xf]
        %v831 = vpack.c.bf16 %v828, %v828
        %vm832 = vcmask 23552
        %v834 = vsel %vm832, %v831, 0
        %vm836 = vcmask 1040384
        %vm837 = vcmask 1041408
        %v838 = vsel %vm836, 4294967295, 65535
        %v839 = vsel %vm837, %v838, 0
        %v841 = vand.u32 %v810, %v839
        %843 = vmatpush.bf16.msra.mxu0 0
        %844 = vmatpush.bf16.msra.mxu0 0
        %845 = vmatpush.bf16.msra.mxu0 0
        %846 = vmatpush.bf16.msra.mxu0 0
        %847 = vmatpush.bf16.msra.mxu0 0
        %848 = vmatpush.bf16.msra.mxu0 0
        %849 = vmatpush.bf16.msra.mxu0 0
        %850 = vmatpush.bf16.msra.mxu0 %v841
        %851 = vmatmul.bf16.gmra.mxu0 %v834
        %v852 = vpop.f32.mrf.mxu0
        %v853 = vadd.f32 0.0, %v852
        %v854 = vpop.f32.mrf.mxu0
        %855 = vdwg.mxu0
        %vm856 = vcmask 31744
        %v858 = vsel %vm856, %v830, 0
        %v861 = vsel %vm837, %v809, 0
        %863 = vmatpush.bf16.msra.mxu0 0
        %864 = vmatpush.bf16.msra.mxu0 0
        %865 = vmatpush.bf16.msra.mxu0 0
        %866 = vmatpush.bf16.msra.mxu0 0
        %867 = vmatpush.bf16.msra.mxu0 0
        %868 = vmatpush.bf16.msra.mxu0 0
        %869 = vmatpush.bf16.msra.mxu0 0
        %870 = vmatpush.bf16.msra.mxu0 %v861
        %871 = vmatmul.bf16.gmra.mxu0 %v858
        %v872 = vpop.f32.mrf.mxu0
        %v873 = vadd.f32 %v853, %v872
        %v874 = vpop.f32.mrf.mxu0
        %875 = vdwg.mxu0
        %v876 = vpack.c.bf16 %v829, %v829
        %vm877 = vcmask 39936
        %v879 = vsel %vm877, %v876, 0
        %vm881 = vcmask 1042432
        %v882 = vsel %vm837, 4294967295, 65535
        %v883 = vsel %vm881, %v882, 0
        %v885 = vand.u32 %v811, %v883
        %887 = vmatpush.bf16.msra.mxu0 0
        %888 = vmatpush.bf16.msra.mxu0 0
        %889 = vmatpush.bf16.msra.mxu0 0
        %890 = vmatpush.bf16.msra.mxu0 0
        %891 = vmatpush.bf16.msra.mxu0 0
        %892 = vmatpush.bf16.msra.mxu0 0
        %893 = vmatpush.bf16.msra.mxu0 0
        %894 = vmatpush.bf16.msra.mxu0 %v885
        %895 = vmatmul.bf16.gmra.mxu0 %v879
        %v896 = vpop.f32.mrf.mxu0
        %v897 = vadd.f32 0.0, %v896
        %v898 = vpop.f32.mrf.mxu0
        %899 = vdwg.mxu0
        %v900 = vadd.f32 %v873, %v897
        %v902 = vperm.slane %v812, 0
        %v904 = vadd.f32 %v900, %v902
        %vm905 = vcmp.ge.f32.partialorder %v904, 0.0
        %v906 = vmul.f32 %v904, 0.01
        %v907 = vsel %vm905, %v904, %v906
        %v908 = vpack.c.bf16 %v907, %v907
        %v910 = vperm.slane %v815, 0
        %v914 = vunpack.c.l.b16 %v813
        %v915 = vunpack.c.l.b16 %v814
        %v916 = vpack.c.b16 %v915, %v914
        %vm918 = vcmask 130048
        %v920 = vsel %vm918, %v908, 0
        %922 = vmatpush.bf16.msra.mxu0 0
        %923 = vmatpush.bf16.msra.mxu0 0
        %924 = vmatpush.bf16.msra.mxu0 0
        %925 = vmatpush.bf16.msra.mxu0 0
        %926 = vmatpush.bf16.msra.mxu0 0
        %927 = vmatpush.bf16.msra.mxu0 0
        %928 = vmatpush.bf16.msra.mxu0 0
        %929 = vmatpush.bf16.msra.mxu0 %v916
        %930 = vmatmul.bf16.gmra.mxu0 %v920
        %v931 = vpop.f32.mrf.mxu0
        %v932 = vadd.f32 %v910, %v931
        %v933 = vpop.f32.mrf.mxu0
        %934 = vdwg.mxu0
        %vm935 = vcmp.ge.f32.partialorder %v932, 0.0
        %v936 = vmul.f32 %v932, 0.01
        %v937 = vsel %vm935, %v932, %v936
        %v938 = vpack.c.bf16 %v937, %v937
        %v940 = vperm.slane %v817, 0
        %vm942 = vcmask 64512
        %v944 = vsel %vm942, %v938, 0
        %vm946 = vcmask 1043456
        %v948 = vsel %vm946, %v816, 0
        %950 = vmatpush.bf16.msra.mxu0 0
        %951 = vmatpush.bf16.msra.mxu0 0
        %952 = vmatpush.bf16.msra.mxu0 0
        %953 = vmatpush.bf16.msra.mxu0 0
        %954 = vmatpush.bf16.msra.mxu0 0
        %955 = vmatpush.bf16.msra.mxu0 0
        %956 = vmatpush.bf16.msra.mxu0 0
        %957 = vmatpush.bf16.msra.mxu0 %v948
        %958 = vmatmul.bf16.gmra.mxu0 %v944
        %v959 = vpop.f32.mrf.mxu0
        %v960 = vadd.f32 %v940, %v959
        %v961 = vpop.f32.mrf.mxu0
        %962 = vdwg.mxu0
        %v964 = vperm.slane %v820, 0
        %967 = vrot.lane.b32.xlu0 %v908, 112
        %v968 = vpop.permute.xlu0 %967
        %v971 = vunpack.c.l.b16 %v818
        %v972 = vunpack.c.l.b16 %v819
        %v973 = vpack.c.b16 %v972, %v971
        %vm974 = vcmask 97280
        %v976 = vsel %vm974, %v968, 0
        %vm978 = vcmask 1045504
        %v980 = vsel %vm978, %v973, 0
        %982 = vmatpush.bf16.msra.mxu0 0
        %983 = vmatpush.bf16.msra.mxu0 0
        %984 = vmatpush.bf16.msra.mxu0 0
        %985 = vmatpush.bf16.msra.mxu0 0
        %986 = vmatpush.bf16.msra.mxu0 0
        %987 = vmatpush.bf16.msra.mxu0 0
        %988 = vmatpush.bf16.msra.mxu0 0
        %989 = vmatpush.bf16.msra.mxu0 %v980
        %990 = vmatmul.bf16.gmra.mxu0 %v976
        %v991 = vpop.f32.mrf.mxu0
        %v992 = vadd.f32 %v964, %v991
        %v993 = vpop.f32.mrf.mxu0
        %994 = vdwg.mxu0
        %vm995 = vcmp.ge.f32.partialorder %v992, 0.0
        %v996 = vmul.f32 %v992, 0.01
        %v997 = vsel %vm995, %v992, %v996
        %v998 = vpack.c.bf16 %v997, %v997
        %v1000 = vperm.slane %v823, 0
        %v1004 = vunpack.c.l.b16 %v821
        %v1005 = vunpack.c.l.b16 %v822
        %v1006 = vpack.c.b16 %v1005, %v1004
        %v1009 = vsel %vm918, %v998, 0
        %1011 = vmatpush.bf16.msra.mxu0 0
        %1012 = vmatpush.bf16.msra.mxu0 0
        %1013 = vmatpush.bf16.msra.mxu0 0
        %1014 = vmatpush.bf16.msra.mxu0 0
        %1015 = vmatpush.bf16.msra.mxu0 0
        %1016 = vmatpush.bf16.msra.mxu0 0
        %1017 = vmatpush.bf16.msra.mxu0 0
        %1018 = vmatpush.bf16.msra.mxu0 %v1006
        %1019 = vmatmul.bf16.gmra.mxu0 %v1009
        %v1020 = vpop.f32.mrf.mxu0
        %v1021 = vadd.f32 %v1000, %v1020
        %v1022 = vpop.f32.mrf.mxu0
        %1023 = vdwg.mxu0
        %vm1024 = vcmp.ge.f32.partialorder %v1021, 0.0
        %v1025 = vmul.f32 %v1021, 0.01
        %v1026 = vsel %vm1024, %v1021, %v1025
        %v1027 = vpack.c.bf16 %v1026, %v1026
        %v1029 = vperm.slane %v825, 0
        %v1032 = vsel %vm942, %v1027, 0
        %v1035 = vsel %vm946, %v824, 0
        %1037 = vmatpush.bf16.msra.mxu0 0
        %1038 = vmatpush.bf16.msra.mxu0 0
        %1039 = vmatpush.bf16.msra.mxu0 0
        %1040 = vmatpush.bf16.msra.mxu0 0
        %1041 = vmatpush.bf16.msra.mxu0 0
        %1042 = vmatpush.bf16.msra.mxu0 0
        %1043 = vmatpush.bf16.msra.mxu0 0
        %1044 = vmatpush.bf16.msra.mxu0 %v1035
        %1045 = vmatmul.bf16.gmra.mxu0 %v1032
        %v1046 = vpop.f32.mrf.mxu0
        %v1047 = vadd.f32 %v1029, %v1046
        %v1048 = vpop.f32.mrf.mxu0
        %1049 = vdwg.mxu0
        %vm1050 = vcmp.ge.f32.partialorder %v1047, 0.0
        %v1051 = vmul.f32 %v1047, 0.01
        %v1052 = vsel %vm1050, %v1047, %v1051
        %v1053 = vpack.c.bf16 %v1052, %v1052
        %v1055 = vperm.slane %v827, 0
        %v1058 = vsel %vm832, %v1053, 0
        %v1061 = vand.u32 %v826, %v839
        %1063 = vmatpush.bf16.msra.mxu0 0
        %1064 = vmatpush.bf16.msra.mxu0 0
        %1065 = vmatpush.bf16.msra.mxu0 0
        %1066 = vmatpush.bf16.msra.mxu0 0
        %1067 = vmatpush.bf16.msra.mxu0 0
        %1068 = vmatpush.bf16.msra.mxu0 0
        %1069 = vmatpush.bf16.msra.mxu0 0
        %1070 = vmatpush.bf16.msra.mxu0 %v1061
        %1071 = vmatmul.bf16.gmra.mxu0 %v1058
        %v1072 = vpop.f32.mrf.mxu0
        %v1073 = vadd.f32 %v1055, %v1072
        %v1074 = vpop.f32.mrf.mxu0
        %1075 = vdwg.mxu0
        %1076 = vst.msk [vmem:[%s767] sm:$0xff] %vm832, %v960
        %s1077 = smul.u32 %s38, 8
        %p1078 = scmp.lt.s32.totalorder %s1077, 8
        %s1079 = scalar_select %p1078, 1, 0
        %v1080 = vstv %s1079
        %vm1081 = vcmp.eq.s32.totalorder %v1080, 1
        %v1082 = vsel %vm1081, %v960, %v828
        %v1083 = vsel %vm1081, %v1073, %v829
        %s1084 = scalar_lea.vmem %s708, 4 [#allocation4]
        %v1085 = vld [vmem:[%s1084] sm:$0xf]
        %v1086 = vpack.c.bf16 %v1082, %v1082
        %v1088 = vsel %vm832, %v1086, 0
        %1090 = vmatpush.bf16.msra.mxu0 0
        %1091 = vmatpush.bf16.msra.mxu0 0
        %1092 = vmatpush.bf16.msra.mxu0 0
        %1093 = vmatpush.bf16.msra.mxu0 0
        %1094 = vmatpush.bf16.msra.mxu0 0
        %1095 = vmatpush.bf16.msra.mxu0 0
        %1096 = vmatpush.bf16.msra.mxu0 0
        %1097 = vmatpush.bf16.msra.mxu0 %v841
        %1098 = vmatmul.bf16.gmra.mxu0 %v1088
        %v1099 = vpop.f32.mrf.mxu0
        %v1100 = vadd.f32 0.0, %v1099
        %v1101 = vpop.f32.mrf.mxu0
        %1102 = vdwg.mxu0
        %v1104 = vsel %vm856, %v1085, 0
        %1106 = vmatpush.bf16.msra.mxu0 0
        %1107 = vmatpush.bf16.msra.mxu0 0
        %1108 = vmatpush.bf16.msra.mxu0 0
        %1109 = vmatpush.bf16.msra.mxu0 0
        %1110 = vmatpush.bf16.msra.mxu0 0
        %1111 = vmatpush.bf16.msra.mxu0 0
        %1112 = vmatpush.bf16.msra.mxu0 0
        %1113 = vmatpush.bf16.msra.mxu0 %v861
        %1114 = vmatmul.bf16.gmra.mxu0 %v1104
        %v1115 = vpop.f32.mrf.mxu0
        %v1116 = vadd.f32 %v1100, %v1115
        %v1117 = vpop.f32.mrf.mxu0
        %1118 = vdwg.mxu0
        %v1119 = vpack.c.bf16 %v1083, %v1083
        %v1121 = vsel %vm877, %v1119, 0
        %1123 = vmatpush.bf16.msra.mxu0 0
        %1124 = vmatpush.bf16.msra.mxu0 0
        %1125 = vmatpush.bf16.msra.mxu0 0
        %1126 = vmatpush.bf16.msra.mxu0 0
        %1127 = vmatpush.bf16.msra.mxu0 0
        %1128 = vmatpush.bf16.msra.mxu0 0
        %1129 = vmatpush.bf16.msra.mxu0 0
        %1130 = vmatpush.bf16.msra.mxu0 %v885
        %1131 = vmatmul.bf16.gmra.mxu0 %v1121
        %v1132 = vpop.f32.mrf.mxu0
        %v1133 = vadd.f32 0.0, %v1132
        %v1134 = vpop.f32.mrf.mxu0
        %1135 = vdwg.mxu0
        %v1136 = vadd.f32 %v1116, %v1133
        %v1137 = vadd.f32 %v1136, %v902
        %vm1138 = vcmp.ge.f32.partialorder %v1137, 0.0
        %v1139 = vmul.f32 %v1137, 0.01
        %v1140 = vsel %vm1138, %v1137, %v1139
        %v1141 = vpack.c.bf16 %v1140, %v1140
        %v1143 = vsel %vm918, %v1141, 0
        %1145 = vmatpush.bf16.msra.mxu0 0
        %1146 = vmatpush.bf16.msra.mxu0 0
        %1147 = vmatpush.bf16.msra.mxu0 0
        %1148 = vmatpush.bf16.msra.mxu0 0
        %1149 = vmatpush.bf16.msra.mxu0 0
        %1150 = vmatpush.bf16.msra.mxu0 0
        %1151 = vmatpush.bf16.msra.mxu0 0
        %1152 = vmatpush.bf16.msra.mxu0 %v916
        %1153 = vmatmul.bf16.gmra.mxu0 %v1143
        %v1154 = vpop.f32.mrf.mxu0
        %v1155 = vadd.f32 %v910, %v1154
        %v1156 = vpop.f32.mrf.mxu0
        %1157 = vdwg.mxu0
        %vm1158 = vcmp.ge.f32.partialorder %v1155, 0.0
        %v1159 = vmul.f32 %v1155, 0.01
        %v1160 = vsel %vm1158, %v1155, %v1159
        %v1161 = vpack.c.bf16 %v1160, %v1160
        %v1163 = vsel %vm942, %v1161, 0
        %1165 = vmatpush.bf16.msra.mxu0 0
        %1166 = vmatpush.bf16.msra.mxu0 0
        %1167 = vmatpush.bf16.msra.mxu0 0
        %1168 = vmatpush.bf16.msra.mxu0 0
        %1169 = vmatpush.bf16.msra.mxu0 0
        %1170 = vmatpush.bf16.msra.mxu0 0
        %1171 = vmatpush.bf16.msra.mxu0 0
        %1172 = vmatpush.bf16.msra.mxu0 %v948
        %1173 = vmatmul.bf16.gmra.mxu0 %v1163
        %v1174 = vpop.f32.mrf.mxu0
        %v1175 = vadd.f32 %v940, %v1174
        %v1176 = vpop.f32.mrf.mxu0
        %1177 = vdwg.mxu0
        %1179 = vrot.lane.b32.xlu0 %v1141, 112
        %v1180 = vpop.permute.xlu0 %1179
        %v1182 = vsel %vm974, %v1180, 0
        %1184 = vmatpush.bf16.msra.mxu0 0
        %1185 = vmatpush.bf16.msra.mxu0 0
        %1186 = vmatpush.bf16.msra.mxu0 0
        %1187 = vmatpush.bf16.msra.mxu0 0
        %1188 = vmatpush.bf16.msra.mxu0 0
        %1189 = vmatpush.bf16.msra.mxu0 0
        %1190 = vmatpush.bf16.msra.mxu0 0
        %1191 = vmatpush.bf16.msra.mxu0 %v980
        %1192 = vmatmul.bf16.gmra.mxu0 %v1182
        %v1193 = vpop.f32.mrf.mxu0
        %v1194 = vadd.f32 %v964, %v1193
        %v1195 = vpop.f32.mrf.mxu0
        %1196 = vdwg.mxu0
        %vm1197 = vcmp.ge.f32.partialorder %v1194, 0.0
        %v1198 = vmul.f32 %v1194, 0.01
        %v1199 = vsel %vm1197, %v1194, %v1198
        %v1200 = vpack.c.bf16 %v1199, %v1199
        %v1202 = vsel %vm918, %v1200, 0
        %1204 = vmatpush.bf16.msra.mxu0 0
        %1205 = vmatpush.bf16.msra.mxu0 0
        %1206 = vmatpush.bf16.msra.mxu0 0
        %1207 = vmatpush.bf16.msra.mxu0 0
        %1208 = vmatpush.bf16.msra.mxu0 0
        %1209 = vmatpush.bf16.msra.mxu0 0
        %1210 = vmatpush.bf16.msra.mxu0 0
        %1211 = vmatpush.bf16.msra.mxu0 %v1006
        %1212 = vmatmul.bf16.gmra.mxu0 %v1202
        %v1213 = vpop.f32.mrf.mxu0
        %v1214 = vadd.f32 %v1000, %v1213
        %v1215 = vpop.f32.mrf.mxu0
        %1216 = vdwg.mxu0
        %vm1217 = vcmp.ge.f32.partialorder %v1214, 0.0
        %v1218 = vmul.f32 %v1214, 0.01
        %v1219 = vsel %vm1217, %v1214, %v1218
        %v1220 = vpack.c.bf16 %v1219, %v1219
        %v1222 = vsel %vm942, %v1220, 0
        %1224 = vmatpush.bf16.msra.mxu0 0
        %1225 = vmatpush.bf16.msra.mxu0 0
        %1226 = vmatpush.bf16.msra.mxu0 0
        %1227 = vmatpush.bf16.msra.mxu0 0
        %1228 = vmatpush.bf16.msra.mxu0 0
        %1229 = vmatpush.bf16.msra.mxu0 0
        %1230 = vmatpush.bf16.msra.mxu0 0
        %1231 = vmatpush.bf16.msra.mxu0 %v1035
        %1232 = vmatmul.bf16.gmra.mxu0 %v1222
        %v1233 = vpop.f32.mrf.mxu0
        %v1234 = vadd.f32 %v1029, %v1233
        %v1235 = vpop.f32.mrf.mxu0
        %1236 = vdwg.mxu0
        %vm1237 = vcmp.ge.f32.partialorder %v1234, 0.0
        %v1238 = vmul.f32 %v1234, 0.01
        %v1239 = vsel %vm1237, %v1234, %v1238
        %v1240 = vpack.c.bf16 %v1239, %v1239
        %v1242 = vsel %vm832, %v1240, 0
        %1244 = vmatpush.bf16.msra.mxu0 0
        %1245 = vmatpush.bf16.msra.mxu0 0
        %1246 = vmatpush.bf16.msra.mxu0 0
        %1247 = vmatpush.bf16.msra.mxu0 0
        %1248 = vmatpush.bf16.msra.mxu0 0
        %1249 = vmatpush.bf16.msra.mxu0 0
        %1250 = vmatpush.bf16.msra.mxu0 0
        %1251 = vmatpush.bf16.msra.mxu0 %v1061
        %1252 = vmatmul.bf16.gmra.mxu0 %v1242
        %v1253 = vpop.f32.mrf.mxu0
        %v1254 = vadd.f32 %v1055, %v1253
        %v1255 = vpop.f32.mrf.mxu0
        %1256 = vdwg.mxu0
        %s1257 = scalar_lea.vmem %s767, 8 [#allocation5]
        %1258 = vst.msk [vmem:[%s1257] sm:$0xff] %vm832, %v1175
        %s1259 = sadd.s32 %s1077, 1
        %p1260 = scmp.lt.s32.totalorder %s1259, 8
        %s1261 = scalar_select %p1260, 1, 0
        %v1262 = vstv %s1261
        %vm1263 = vcmp.eq.s32.totalorder %v1262, 1
        %v1264 = vsel %vm1263, %v1175, %v1082
        %v1265 = vsel %vm1263, %v1254, %v1083
        %s1266 = scalar_lea.vmem %s708, 8 [#allocation4]
        %v1267 = vld [vmem:[%s1266] sm:$0xf]
        %v1268 = vpack.c.bf16 %v1264, %v1264
        %v1270 = vsel %vm832, %v1268, 0
        %1272 = vmatpush.bf16.msra.mxu0 0
        %1273 = vmatpush.bf16.msra.mxu0 0
        %1274 = vmatpush.bf16.msra.mxu0 0
        %1275 = vmatpush.bf16.msra.mxu0 0
        %1276 = vmatpush.bf16.msra.mxu0 0
        %1277 = vmatpush.bf16.msra.mxu0 0
        %1278 = vmatpush.bf16.msra.mxu0 0
        %1279 = vmatpush.bf16.msra.mxu0 %v841
        %1280 = vmatmul.bf16.gmra.mxu0 %v1270
        %v1281 = vpop.f32.mrf.mxu0
        %v1282 = vadd.f32 0.0, %v1281
        %v1283 = vpop.f32.mrf.mxu0
        %1284 = vdwg.mxu0
        %v1286 = vsel %vm856, %v1267, 0
        %1288 = vmatpush.bf16.msra.mxu0 0
        %1289 = vmatpush.bf16.msra.mxu0 0
        %1290 = vmatpush.bf16.msra.mxu0 0
        %1291 = vmatpush.bf16.msra.mxu0 0
        %1292 = vmatpush.bf16.msra.mxu0 0
        %1293 = vmatpush.bf16.msra.mxu0 0
        %1294 = vmatpush.bf16.msra.mxu0 0
        %1295 = vmatpush.bf16.msra.mxu0 %v861
        %1296 = vmatmul.bf16.gmra.mxu0 %v1286
        %v1297 = vpop.f32.mrf.mxu0
        %v1298 = vadd.f32 %v1282, %v1297
        %v1299 = vpop.f32.mrf.mxu0
        %1300 = vdwg.mxu0
        %v1301 = vpack.c.bf16 %v1265, %v1265
        %v1303 = vsel %vm877, %v1301, 0
        %1305 = vmatpush.bf16.msra.mxu0 0
        %1306 = vmatpush.bf16.msra.mxu0 0
        %1307 = vmatpush.bf16.msra.mxu0 0
        %1308 = vmatpush.bf16.msra.mxu0 0
        %1309 = vmatpush.bf16.msra.mxu0 0
        %1310 = vmatpush.bf16.msra.mxu0 0
        %1311 = vmatpush.bf16.msra.mxu0 0
        %1312 = vmatpush.bf16.msra.mxu0 %v885
        %1313 = vmatmul.bf16.gmra.mxu0 %v1303
        %v1314 = vpop.f32.mrf.mxu0
        %v1315 = vadd.f32 0.0, %v1314
        %v1316 = vpop.f32.mrf.mxu0
        %1317 = vdwg.mxu0
        %v1318 = vadd.f32 %v1298, %v1315
        %v1319 = vadd.f32 %v1318, %v902
        %vm1320 = vcmp.ge.f32.partialorder %v1319, 0.0
        %v1321 = vmul.f32 %v1319, 0.01
        %v1322 = vsel %vm1320, %v1319, %v1321
        %v1323 = vpack.c.bf16 %v1322, %v1322
        %v1325 = vsel %vm918, %v1323, 0
        %1327 = vmatpush.bf16.msra.mxu0 0
        %1328 = vmatpush.bf16.msra.mxu0 0
        %1329 = vmatpush.bf16.msra.mxu0 0
        %1330 = vmatpush.bf16.msra.mxu0 0
        %1331 = vmatpush.bf16.msra.mxu0 0
        %1332 = vmatpush.bf16.msra.mxu0 0
        %1333 = vmatpush.bf16.msra.mxu0 0
        %1334 = vmatpush.bf16.msra.mxu0 %v916
        %1335 = vmatmul.bf16.gmra.mxu0 %v1325
        %v1336 = vpop.f32.mrf.mxu0
        %v1337 = vadd.f32 %v910, %v1336
        %v1338 = vpop.f32.mrf.mxu0
        %1339 = vdwg.mxu0
        %vm1340 = vcmp.ge.f32.partialorder %v1337, 0.0
        %v1341 = vmul.f32 %v1337, 0.01
        %v1342 = vsel %vm1340, %v1337, %v1341
        %v1343 = vpack.c.bf16 %v1342, %v1342
        %v1345 = vsel %vm942, %v1343, 0
        %1347 = vmatpush.bf16.msra.mxu0 0
        %1348 = vmatpush.bf16.msra.mxu0 0
        %1349 = vmatpush.bf16.msra.mxu0 0
        %1350 = vmatpush.bf16.msra.mxu0 0
        %1351 = vmatpush.bf16.msra.mxu0 0
        %1352 = vmatpush.bf16.msra.mxu0 0
        %1353 = vmatpush.bf16.msra.mxu0 0
        %1354 = vmatpush.bf16.msra.mxu0 %v948
        %1355 = vmatmul.bf16.gmra.mxu0 %v1345
        %v1356 = vpop.f32.mrf.mxu0
        %v1357 = vadd.f32 %v940, %v1356
        %v1358 = vpop.f32.mrf.mxu0
        %1359 = vdwg.mxu0
        %1361 = vrot.lane.b32.xlu0 %v1323, 112
        %v1362 = vpop.permute.xlu0 %1361
        %v1364 = vsel %vm974, %v1362, 0
        %1366 = vmatpush.bf16.msra.mxu0 0
        %1367 = vmatpush.bf16.msra.mxu0 0
        %1368 = vmatpush.bf16.msra.mxu0 0
        %1369 = vmatpush.bf16.msra.mxu0 0
        %1370 = vmatpush.bf16.msra.mxu0 0
        %1371 = vmatpush.bf16.msra.mxu0 0
        %1372 = vmatpush.bf16.msra.mxu0 0
        %1373 = vmatpush.bf16.msra.mxu0 %v980
        %1374 = vmatmul.bf16.gmra.mxu0 %v1364
        %v1375 = vpop.f32.mrf.mxu0
        %v1376 = vadd.f32 %v964, %v1375
        %v1377 = vpop.f32.mrf.mxu0
        %1378 = vdwg.mxu0
        %vm1379 = vcmp.ge.f32.partialorder %v1376, 0.0
        %v1380 = vmul.f32 %v1376, 0.01
        %v1381 = vsel %vm1379, %v1376, %v1380
        %v1382 = vpack.c.bf16 %v1381, %v1381
        %v1384 = vsel %vm918, %v1382, 0
        %1386 = vmatpush.bf16.msra.mxu0 0
        %1387 = vmatpush.bf16.msra.mxu0 0
        %1388 = vmatpush.bf16.msra.mxu0 0
        %1389 = vmatpush.bf16.msra.mxu0 0
        %1390 = vmatpush.bf16.msra.mxu0 0
        %1391 = vmatpush.bf16.msra.mxu0 0
        %1392 = vmatpush.bf16.msra.mxu0 0
        %1393 = vmatpush.bf16.msra.mxu0 %v1006
        %1394 = vmatmul.bf16.gmra.mxu0 %v1384
        %v1395 = vpop.f32.mrf.mxu0
        %v1396 = vadd.f32 %v1000, %v1395
        %v1397 = vpop.f32.mrf.mxu0
        %1398 = vdwg.mxu0
        %vm1399 = vcmp.ge.f32.partialorder %v1396, 0.0
        %v1400 = vmul.f32 %v1396, 0.01
        %v1401 = vsel %vm1399, %v1396, %v1400
        %v1402 = vpack.c.bf16 %v1401, %v1401
        %v1404 = vsel %vm942, %v1402, 0
        %1406 = vmatpush.bf16.msra.mxu0 0
        %1407 = vmatpush.bf16.msra.mxu0 0
        %1408 = vmatpush.bf16.msra.mxu0 0
        %1409 = vmatpush.bf16.msra.mxu0 0
        %1410 = vmatpush.bf16.msra.mxu0 0
        %1411 = vmatpush.bf16.msra.mxu0 0
        %1412 = vmatpush.bf16.msra.mxu0 0
        %1413 = vmatpush.bf16.msra.mxu0 %v1035
        %1414 = vmatmul.bf16.gmra.mxu0 %v1404
        %v1415 = vpop.f32.mrf.mxu0
        %v1416 = vadd.f32 %v1029, %v1415
        %v1417 = vpop.f32.mrf.mxu0
        %1418 = vdwg.mxu0
        %vm1419 = vcmp.ge.f32.partialorder %v1416, 0.0
        %v1420 = vmul.f32 %v1416, 0.01
        %v1421 = vsel %vm1419, %v1416, %v1420
        %v1422 = vpack.c.bf16 %v1421, %v1421
        %v1424 = vsel %vm832, %v1422, 0
        %1426 = vmatpush.bf16.msra.mxu0 0
        %1427 = vmatpush.bf16.msra.mxu0 0
        %1428 = vmatpush.bf16.msra.mxu0 0
        %1429 = vmatpush.bf16.msra.mxu0 0
        %1430 = vmatpush.bf16.msra.mxu0 0
        %1431 = vmatpush.bf16.msra.mxu0 0
        %1432 = vmatpush.bf16.msra.mxu0 0
        %1433 = vmatpush.bf16.msra.mxu0 %v1061
        %1434 = vmatmul.bf16.gmra.mxu0 %v1424
        %v1435 = vpop.f32.mrf.mxu0
        %v1436 = vadd.f32 %v1055, %v1435
        %v1437 = vpop.f32.mrf.mxu0
        %1438 = vdwg.mxu0
        %s1439 = scalar_lea.vmem %s767, 16 [#allocation5]
        %1440 = vst.msk [vmem:[%s1439] sm:$0xff] %vm832, %v1357
        %s1441 = sadd.s32 %s1077, 2
        %p1442 = scmp.lt.s32.totalorder %s1441, 8
        %s1443 = scalar_select %p1442, 1, 0
        %v1444 = vstv %s1443
        %vm1445 = vcmp.eq.s32.totalorder %v1444, 1
        %v1446 = vsel %vm1445, %v1357, %v1264
        %v1447 = vsel %vm1445, %v1436, %v1265
        %s1448 = scalar_lea.vmem %s708, 12 [#allocation4]
        %v1449 = vld [vmem:[%s1448] sm:$0xf]
        %v1450 = vpack.c.bf16 %v1446, %v1446
        %v1452 = vsel %vm832, %v1450, 0
        %1454 = vmatpush.bf16.msra.mxu0 0
        %1455 = vmatpush.bf16.msra.mxu0 0
        %1456 = vmatpush.bf16.msra.mxu0 0
        %1457 = vmatpush.bf16.msra.mxu0 0
        %1458 = vmatpush.bf16.msra.mxu0 0
        %1459 = vmatpush.bf16.msra.mxu0 0
        %1460 = vmatpush.bf16.msra.mxu0 0
        %1461 = vmatpush.bf16.msra.mxu0 %v841
        %1462 = vmatmul.bf16.gmra.mxu0 %v1452
        %v1463 = vpop.f32.mrf.mxu0
        %v1464 = vadd.f32 0.0, %v1463
        %v1465 = vpop.f32.mrf.mxu0
        %1466 = vdwg.mxu0
        %v1468 = vsel %vm856, %v1449, 0
        %1470 = vmatpush.bf16.msra.mxu0 0
        %1471 = vmatpush.bf16.msra.mxu0 0
        %1472 = vmatpush.bf16.msra.mxu0 0
        %1473 = vmatpush.bf16.msra.mxu0 0
        %1474 = vmatpush.bf16.msra.mxu0 0
        %1475 = vmatpush.bf16.msra.mxu0 0
        %1476 = vmatpush.bf16.msra.mxu0 0
        %1477 = vmatpush.bf16.msra.mxu0 %v861
        %1478 = vmatmul.bf16.gmra.mxu0 %v1468
        %v1479 = vpop.f32.mrf.mxu0
        %v1480 = vadd.f32 %v1464, %v1479
        %v1481 = vpop.f32.mrf.mxu0
        %1482 = vdwg.mxu0
        %v1483 = vpack.c.bf16 %v1447, %v1447
        %v1485 = vsel %vm877, %v1483, 0
        %1487 = vmatpush.bf16.msra.mxu0 0
        %1488 = vmatpush.bf16.msra.mxu0 0
        %1489 = vmatpush.bf16.msra.mxu0 0
        %1490 = vmatpush.bf16.msra.mxu0 0
        %1491 = vmatpush.bf16.msra.mxu0 0
        %1492 = vmatpush.bf16.msra.mxu0 0
        %1493 = vmatpush.bf16.msra.mxu0 0
        %1494 = vmatpush.bf16.msra.mxu0 %v885
        %1495 = vmatmul.bf16.gmra.mxu0 %v1485
        %v1496 = vpop.f32.mrf.mxu0
        %v1497 = vadd.f32 0.0, %v1496
        %v1498 = vpop.f32.mrf.mxu0
        %1499 = vdwg.mxu0
        %v1500 = vadd.f32 %v1480, %v1497
        %v1501 = vadd.f32 %v1500, %v902
        %vm1502 = vcmp.ge.f32.partialorder %v1501, 0.0
        %v1503 = vmul.f32 %v1501, 0.01
        %v1504 = vsel %vm1502, %v1501, %v1503
        %v1505 = vpack.c.bf16 %v1504, %v1504
        %v1507 = vsel %vm918, %v1505, 0
        %1509 = vmatpush.bf16.msra.mxu0 0
        %1510 = vmatpush.bf16.msra.mxu0 0
        %1511 = vmatpush.bf16.msra.mxu0 0
        %1512 = vmatpush.bf16.msra.mxu0 0
        %1513 = vmatpush.bf16.msra.mxu0 0
        %1514 = vmatpush.bf16.msra.mxu0 0
        %1515 = vmatpush.bf16.msra.mxu0 0
        %1516 = vmatpush.bf16.msra.mxu0 %v916
        %1517 = vmatmul.bf16.gmra.mxu0 %v1507
        %v1518 = vpop.f32.mrf.mxu0
        %v1519 = vadd.f32 %v910, %v1518
        %v1520 = vpop.f32.mrf.mxu0
        %1521 = vdwg.mxu0
        %vm1522 = vcmp.ge.f32.partialorder %v1519, 0.0
        %v1523 = vmul.f32 %v1519, 0.01
        %v1524 = vsel %vm1522, %v1519, %v1523
        %v1525 = vpack.c.bf16 %v1524, %v1524
        %v1527 = vsel %vm942, %v1525, 0
        %1529 = vmatpush.bf16.msra.mxu0 0
        %1530 = vmatpush.bf16.msra.mxu0 0
        %1531 = vmatpush.bf16.msra.mxu0 0
        %1532 = vmatpush.bf16.msra.mxu0 0
        %1533 = vmatpush.bf16.msra.mxu0 0
        %1534 = vmatpush.bf16.msra.mxu0 0
        %1535 = vmatpush.bf16.msra.mxu0 0
        %1536 = vmatpush.bf16.msra.mxu0 %v948
        %1537 = vmatmul.bf16.gmra.mxu0 %v1527
        %v1538 = vpop.f32.mrf.mxu0
        %v1539 = vadd.f32 %v940, %v1538
        %v1540 = vpop.f32.mrf.mxu0
        %1541 = vdwg.mxu0
        %1543 = vrot.lane.b32.xlu0 %v1505, 112
        %v1544 = vpop.permute.xlu0 %1543
        %v1546 = vsel %vm974, %v1544, 0
        %1548 = vmatpush.bf16.msra.mxu0 0
        %1549 = vmatpush.bf16.msra.mxu0 0
        %1550 = vmatpush.bf16.msra.mxu0 0
        %1551 = vmatpush.bf16.msra.mxu0 0
        %1552 = vmatpush.bf16.msra.mxu0 0
        %1553 = vmatpush.bf16.msra.mxu0 0
        %1554 = vmatpush.bf16.msra.mxu0 0
        %1555 = vmatpush.bf16.msra.mxu0 %v980
        %1556 = vmatmul.bf16.gmra.mxu0 %v1546
        %v1557 = vpop.f32.mrf.mxu0
        %v1558 = vadd.f32 %v964, %v1557
        %v1559 = vpop.f32.mrf.mxu0
        %1560 = vdwg.mxu0
        %vm1561 = vcmp.ge.f32.partialorder %v1558, 0.0
        %v1562 = vmul.f32 %v1558, 0.01
        %v1563 = vsel %vm1561, %v1558, %v1562
        %v1564 = vpack.c.bf16 %v1563, %v1563
        %v1566 = vsel %vm918, %v1564, 0
        %1568 = vmatpush.bf16.msra.mxu0 0
        %1569 = vmatpush.bf16.msra.mxu0 0
        %1570 = vmatpush.bf16.msra.mxu0 0
        %1571 = vmatpush.bf16.msra.mxu0 0
        %1572 = vmatpush.bf16.msra.mxu0 0
        %1573 = vmatpush.bf16.msra.mxu0 0
        %1574 = vmatpush.bf16.msra.mxu0 0
        %1575 = vmatpush.bf16.msra.mxu0 %v1006
        %1576 = vmatmul.bf16.gmra.mxu0 %v1566
        %v1577 = vpop.f32.mrf.mxu0
        %v1578 = vadd.f32 %v1000, %v1577
        %v1579 = vpop.f32.mrf.mxu0
        %1580 = vdwg.mxu0
        %vm1581 = vcmp.ge.f32.partialorder %v1578, 0.0
        %v1582 = vmul.f32 %v1578, 0.01
        %v1583 = vsel %vm1581, %v1578, %v1582
        %v1584 = vpack.c.bf16 %v1583, %v1583
        %v1586 = vsel %vm942, %v1584, 0
        %1588 = vmatpush.bf16.msra.mxu0 0
        %1589 = vmatpush.bf16.msra.mxu0 0
        %1590 = vmatpush.bf16.msra.mxu0 0
        %1591 = vmatpush.bf16.msra.mxu0 0
        %1592 = vmatpush.bf16.msra.mxu0 0
        %1593 = vmatpush.bf16.msra.mxu0 0
        %1594 = vmatpush.bf16.msra.mxu0 0
        %1595 = vmatpush.bf16.msra.mxu0 %v1035
        %1596 = vmatmul.bf16.gmra.mxu0 %v1586
        %v1597 = vpop.f32.mrf.mxu0
        %v1598 = vadd.f32 %v1029, %v1597
        %v1599 = vpop.f32.mrf.mxu0
        %1600 = vdwg.mxu0
        %vm1601 = vcmp.ge.f32.partialorder %v1598, 0.0
        %v1602 = vmul.f32 %v1598, 0.01
        %v1603 = vsel %vm1601, %v1598, %v1602
        %v1604 = vpack.c.bf16 %v1603, %v1603
        %v1606 = vsel %vm832, %v1604, 0
        %1608 = vmatpush.bf16.msra.mxu0 0
        %1609 = vmatpush.bf16.msra.mxu0 0
        %1610 = vmatpush.bf16.msra.mxu0 0
        %1611 = vmatpush.bf16.msra.mxu0 0
        %1612 = vmatpush.bf16.msra.mxu0 0
        %1613 = vmatpush.bf16.msra.mxu0 0
        %1614 = vmatpush.bf16.msra.mxu0 0
        %1615 = vmatpush.bf16.msra.mxu0 %v1061
        %1616 = vmatmul.bf16.gmra.mxu0 %v1606
        %v1617 = vpop.f32.mrf.mxu0
        %v1618 = vadd.f32 %v1055, %v1617
        %v1619 = vpop.f32.mrf.mxu0
        %1620 = vdwg.mxu0
        %s1621 = scalar_lea.vmem %s767, 24 [#allocation5]
        %1622 = vst.msk [vmem:[%s1621] sm:$0xff] %vm832, %v1539
        %s1623 = sadd.s32 %s1077, 3
        %p1624 = scmp.lt.s32.totalorder %s1623, 8
        %s1625 = scalar_select %p1624, 1, 0
        %v1626 = vstv %s1625
        %vm1627 = vcmp.eq.s32.totalorder %v1626, 1
        %v1628 = vsel %vm1627, %v1539, %v1446
        %v1629 = vsel %vm1627, %v1618, %v1447
        %s1630 = scalar_lea.vmem %s708, 16 [#allocation4]
        %v1631 = vld [vmem:[%s1630] sm:$0xf]
        %v1632 = vpack.c.bf16 %v1628, %v1628
        %v1634 = vsel %vm832, %v1632, 0
        %1636 = vmatpush.bf16.msra.mxu0 0
        %1637 = vmatpush.bf16.msra.mxu0 0
        %1638 = vmatpush.bf16.msra.mxu0 0
        %1639 = vmatpush.bf16.msra.mxu0 0
        %1640 = vmatpush.bf16.msra.mxu0 0
        %1641 = vmatpush.bf16.msra.mxu0 0
        %1642 = vmatpush.bf16.msra.mxu0 0
        %1643 = vmatpush.bf16.msra.mxu0 %v841
        %1644 = vmatmul.bf16.gmra.mxu0 %v1634
        %v1645 = vpop.f32.mrf.mxu0
        %v1646 = vadd.f32 0.0, %v1645
        %v1647 = vpop.f32.mrf.mxu0
        %1648 = vdwg.mxu0
        %v1650 = vsel %vm856, %v1631, 0
        %1652 = vmatpush.bf16.msra.mxu0 0
        %1653 = vmatpush.bf16.msra.mxu0 0
        %1654 = vmatpush.bf16.msra.mxu0 0
        %1655 = vmatpush.bf16.msra.mxu0 0
        %1656 = vmatpush.bf16.msra.mxu0 0
        %1657 = vmatpush.bf16.msra.mxu0 0
        %1658 = vmatpush.bf16.msra.mxu0 0
        %1659 = vmatpush.bf16.msra.mxu0 %v861
        %1660 = vmatmul.bf16.gmra.mxu0 %v1650
        %v1661 = vpop.f32.mrf.mxu0
        %v1662 = vadd.f32 %v1646, %v1661
        %v1663 = vpop.f32.mrf.mxu0
        %1664 = vdwg.mxu0
        %v1665 = vpack.c.bf16 %v1629, %v1629
        %v1667 = vsel %vm877, %v1665, 0
        %1669 = vmatpush.bf16.msra.mxu0 0
        %1670 = vmatpush.bf16.msra.mxu0 0
        %1671 = vmatpush.bf16.msra.mxu0 0
        %1672 = vmatpush.bf16.msra.mxu0 0
        %1673 = vmatpush.bf16.msra.mxu0 0
        %1674 = vmatpush.bf16.msra.mxu0 0
        %1675 = vmatpush.bf16.msra.mxu0 0
        %1676 = vmatpush.bf16.msra.mxu0 %v885
        %1677 = vmatmul.bf16.gmra.mxu0 %v1667
        %v1678 = vpop.f32.mrf.mxu0
        %v1679 = vadd.f32 0.0, %v1678
        %v1680 = vpop.f32.mrf.mxu0
        %1681 = vdwg.mxu0
        %v1682 = vadd.f32 %v1662, %v1679
        %v1683 = vadd.f32 %v1682, %v902
        %vm1684 = vcmp.ge.f32.partialorder %v1683, 0.0
        %v1685 = vmul.f32 %v1683, 0.01
        %v1686 = vsel %vm1684, %v1683, %v1685
        %v1687 = vpack.c.bf16 %v1686, %v1686
        %v1689 = vsel %vm918, %v1687, 0
        %1691 = vmatpush.bf16.msra.mxu0 0
        %1692 = vmatpush.bf16.msra.mxu0 0
        %1693 = vmatpush.bf16.msra.mxu0 0
        %1694 = vmatpush.bf16.msra.mxu0 0
        %1695 = vmatpush.bf16.msra.mxu0 0
        %1696 = vmatpush.bf16.msra.mxu0 0
        %1697 = vmatpush.bf16.msra.mxu0 0
        %1698 = vmatpush.bf16.msra.mxu0 %v916
        %1699 = vmatmul.bf16.gmra.mxu0 %v1689
        %v1700 = vpop.f32.mrf.mxu0
        %v1701 = vadd.f32 %v910, %v1700
        %v1702 = vpop.f32.mrf.mxu0
        %1703 = vdwg.mxu0
        %vm1704 = vcmp.ge.f32.partialorder %v1701, 0.0
        %v1705 = vmul.f32 %v1701, 0.01
        %v1706 = vsel %vm1704, %v1701, %v1705
        %v1707 = vpack.c.bf16 %v1706, %v1706
        %v1709 = vsel %vm942, %v1707, 0
        %1711 = vmatpush.bf16.msra.mxu0 0
        %1712 = vmatpush.bf16.msra.mxu0 0
        %1713 = vmatpush.bf16.msra.mxu0 0
        %1714 = vmatpush.bf16.msra.mxu0 0
        %1715 = vmatpush.bf16.msra.mxu0 0
        %1716 = vmatpush.bf16.msra.mxu0 0
        %1717 = vmatpush.bf16.msra.mxu0 0
        %1718 = vmatpush.bf16.msra.mxu0 %v948
        %1719 = vmatmul.bf16.gmra.mxu0 %v1709
        %v1720 = vpop.f32.mrf.mxu0
        %v1721 = vadd.f32 %v940, %v1720
        %v1722 = vpop.f32.mrf.mxu0
        %1723 = vdwg.mxu0
        %1725 = vrot.lane.b32.xlu0 %v1687, 112
        %v1726 = vpop.permute.xlu0 %1725
        %v1728 = vsel %vm974, %v1726, 0
        %1730 = vmatpush.bf16.msra.mxu0 0
        %1731 = vmatpush.bf16.msra.mxu0 0
        %1732 = vmatpush.bf16.msra.mxu0 0
        %1733 = vmatpush.bf16.msra.mxu0 0
        %1734 = vmatpush.bf16.msra.mxu0 0
        %1735 = vmatpush.bf16.msra.mxu0 0
        %1736 = vmatpush.bf16.msra.mxu0 0
        %1737 = vmatpush.bf16.msra.mxu0 %v980
        %1738 = vmatmul.bf16.gmra.mxu0 %v1728
        %v1739 = vpop.f32.mrf.mxu0
        %v1740 = vadd.f32 %v964, %v1739
        %v1741 = vpop.f32.mrf.mxu0
        %1742 = vdwg.mxu0
        %vm1743 = vcmp.ge.f32.partialorder %v1740, 0.0
        %v1744 = vmul.f32 %v1740, 0.01
        %v1745 = vsel %vm1743, %v1740, %v1744
        %v1746 = vpack.c.bf16 %v1745, %v1745
        %v1748 = vsel %vm918, %v1746, 0
        %1750 = vmatpush.bf16.msra.mxu0 0
        %1751 = vmatpush.bf16.msra.mxu0 0
        %1752 = vmatpush.bf16.msra.mxu0 0
        %1753 = vmatpush.bf16.msra.mxu0 0
        %1754 = vmatpush.bf16.msra.mxu0 0
        %1755 = vmatpush.bf16.msra.mxu0 0
        %1756 = vmatpush.bf16.msra.mxu0 0
        %1757 = vmatpush.bf16.msra.mxu0 %v1006
        %1758 = vmatmul.bf16.gmra.mxu0 %v1748
        %v1759 = vpop.f32.mrf.mxu0
        %v1760 = vadd.f32 %v1000, %v1759
        %v1761 = vpop.f32.mrf.mxu0
        %1762 = vdwg.mxu0
        %vm1763 = vcmp.ge.f32.partialorder %v1760, 0.0
        %v1764 = vmul.f32 %v1760, 0.01
        %v1765 = vsel %vm1763, %v1760, %v1764
        %v1766 = vpack.c.bf16 %v1765, %v1765
        %v1768 = vsel %vm942, %v1766, 0
        %1770 = vmatpush.bf16.msra.mxu0 0
        %1771 = vmatpush.bf16.msra.mxu0 0
        %1772 = vmatpush.bf16.msra.mxu0 0
        %1773 = vmatpush.bf16.msra.mxu0 0
        %1774 = vmatpush.bf16.msra.mxu0 0
        %1775 = vmatpush.bf16.msra.mxu0 0
        %1776 = vmatpush.bf16.msra.mxu0 0
        %1777 = vmatpush.bf16.msra.mxu0 %v1035
        %1778 = vmatmul.bf16.gmra.mxu0 %v1768
        %v1779 = vpop.f32.mrf.mxu0
        %v1780 = vadd.f32 %v1029, %v1779
        %v1781 = vpop.f32.mrf.mxu0
        %1782 = vdwg.mxu0
        %vm1783 = vcmp.ge.f32.partialorder %v1780, 0.0
        %v1784 = vmul.f32 %v1780, 0.01
        %v1785 = vsel %vm1783, %v1780, %v1784
        %v1786 = vpack.c.bf16 %v1785, %v1785
        %v1788 = vsel %vm832, %v1786, 0
        %1790 = vmatpush.bf16.msra.mxu0 0
        %1791 = vmatpush.bf16.msra.mxu0 0
        %1792 = vmatpush.bf16.msra.mxu0 0
        %1793 = vmatpush.bf16.msra.mxu0 0
        %1794 = vmatpush.bf16.msra.mxu0 0
        %1795 = vmatpush.bf16.msra.mxu0 0
        %1796 = vmatpush.bf16.msra.mxu0 0
        %1797 = vmatpush.bf16.msra.mxu0 %v1061
        %1798 = vmatmul.bf16.gmra.mxu0 %v1788
        %v1799 = vpop.f32.mrf.mxu0
        %v1800 = vadd.f32 %v1055, %v1799
        %v1801 = vpop.f32.mrf.mxu0
        %1802 = vdwg.mxu0
        %s1803 = scalar_lea.vmem %s767, 32 [#allocation5]
        %1804 = vst.msk [vmem:[%s1803] sm:$0xff] %vm832, %v1721
        %s1805 = sadd.s32 %s1077, 4
        %p1806 = scmp.lt.s32.totalorder %s1805, 8
        %s1807 = scalar_select %p1806, 1, 0
        %v1808 = vstv %s1807
        %vm1809 = vcmp.eq.s32.totalorder %v1808, 1
        %v1810 = vsel %vm1809, %v1721, %v1628
        %v1811 = vsel %vm1809, %v1800, %v1629
        %s1812 = scalar_lea.vmem %s708, 20 [#allocation4]
        %v1813 = vld [vmem:[%s1812] sm:$0xf]
        %v1814 = vpack.c.bf16 %v1810, %v1810
        %v1816 = vsel %vm832, %v1814, 0
        %1818 = vmatpush.bf16.msra.mxu0 0
        %1819 = vmatpush.bf16.msra.mxu0 0
        %1820 = vmatpush.bf16.msra.mxu0 0
        %1821 = vmatpush.bf16.msra.mxu0 0
        %1822 = vmatpush.bf16.msra.mxu0 0
        %1823 = vmatpush.bf16.msra.mxu0 0
        %1824 = vmatpush.bf16.msra.mxu0 0
        %1825 = vmatpush.bf16.msra.mxu0 %v841
        %1826 = vmatmul.bf16.gmra.mxu0 %v1816
        %v1827 = vpop.f32.mrf.mxu0
        %v1828 = vadd.f32 0.0, %v1827
        %v1829 = vpop.f32.mrf.mxu0
        %1830 = vdwg.mxu0
        %v1832 = vsel %vm856, %v1813, 0
        %1834 = vmatpush.bf16.msra.mxu0 0
        %1835 = vmatpush.bf16.msra.mxu0 0
        %1836 = vmatpush.bf16.msra.mxu0 0
        %1837 = vmatpush.bf16.msra.mxu0 0
        %1838 = vmatpush.bf16.msra.mxu0 0
        %1839 = vmatpush.bf16.msra.mxu0 0
        %1840 = vmatpush.bf16.msra.mxu0 0
        %1841 = vmatpush.bf16.msra.mxu0 %v861
        %1842 = vmatmul.bf16.gmra.mxu0 %v1832
        %v1843 = vpop.f32.mrf.mxu0
        %v1844 = vadd.f32 %v1828, %v1843
        %v1845 = vpop.f32.mrf.mxu0
        %1846 = vdwg.mxu0
        %v1847 = vpack.c.bf16 %v1811, %v1811
        %v1849 = vsel %vm877, %v1847, 0
        %1851 = vmatpush.bf16.msra.mxu0 0
        %1852 = vmatpush.bf16.msra.mxu0 0
        %1853 = vmatpush.bf16.msra.mxu0 0
        %1854 = vmatpush.bf16.msra.mxu0 0
        %1855 = vmatpush.bf16.msra.mxu0 0
        %1856 = vmatpush.bf16.msra.mxu0 0
        %1857 = vmatpush.bf16.msra.mxu0 0
        %1858 = vmatpush.bf16.msra.mxu0 %v885
        %1859 = vmatmul.bf16.gmra.mxu0 %v1849
        %v1860 = vpop.f32.mrf.mxu0
        %v1861 = vadd.f32 0.0, %v1860
        %v1862 = vpop.f32.mrf.mxu0
        %1863 = vdwg.mxu0
        %v1864 = vadd.f32 %v1844, %v1861
        %v1865 = vadd.f32 %v1864, %v902
        %vm1866 = vcmp.ge.f32.partialorder %v1865, 0.0
        %v1867 = vmul.f32 %v1865, 0.01
        %v1868 = vsel %vm1866, %v1865, %v1867
        %v1869 = vpack.c.bf16 %v1868, %v1868
        %v1871 = vsel %vm918, %v1869, 0
        %1873 = vmatpush.bf16.msra.mxu0 0
        %1874 = vmatpush.bf16.msra.mxu0 0
        %1875 = vmatpush.bf16.msra.mxu0 0
        %1876 = vmatpush.bf16.msra.mxu0 0
        %1877 = vmatpush.bf16.msra.mxu0 0
        %1878 = vmatpush.bf16.msra.mxu0 0
        %1879 = vmatpush.bf16.msra.mxu0 0
        %1880 = vmatpush.bf16.msra.mxu0 %v916
        %1881 = vmatmul.bf16.gmra.mxu0 %v1871
        %v1882 = vpop.f32.mrf.mxu0
        %v1883 = vadd.f32 %v910, %v1882
        %v1884 = vpop.f32.mrf.mxu0
        %1885 = vdwg.mxu0
        %vm1886 = vcmp.ge.f32.partialorder %v1883, 0.0
        %v1887 = vmul.f32 %v1883, 0.01
        %v1888 = vsel %vm1886, %v1883, %v1887
        %v1889 = vpack.c.bf16 %v1888, %v1888
        %v1891 = vsel %vm942, %v1889, 0
        %1893 = vmatpush.bf16.msra.mxu0 0
        %1894 = vmatpush.bf16.msra.mxu0 0
        %1895 = vmatpush.bf16.msra.mxu0 0
        %1896 = vmatpush.bf16.msra.mxu0 0
        %1897 = vmatpush.bf16.msra.mxu0 0
        %1898 = vmatpush.bf16.msra.mxu0 0
        %1899 = vmatpush.bf16.msra.mxu0 0
        %1900 = vmatpush.bf16.msra.mxu0 %v948
        %1901 = vmatmul.bf16.gmra.mxu0 %v1891
        %v1902 = vpop.f32.mrf.mxu0
        %v1903 = vadd.f32 %v940, %v1902
        %v1904 = vpop.f32.mrf.mxu0
        %1905 = vdwg.mxu0
        %1907 = vrot.lane.b32.xlu0 %v1869, 112
        %v1908 = vpop.permute.xlu0 %1907
        %v1910 = vsel %vm974, %v1908, 0
        %1912 = vmatpush.bf16.msra.mxu0 0
        %1913 = vmatpush.bf16.msra.mxu0 0
        %1914 = vmatpush.bf16.msra.mxu0 0
        %1915 = vmatpush.bf16.msra.mxu0 0
        %1916 = vmatpush.bf16.msra.mxu0 0
        %1917 = vmatpush.bf16.msra.mxu0 0
        %1918 = vmatpush.bf16.msra.mxu0 0
        %1919 = vmatpush.bf16.msra.mxu0 %v980
        %1920 = vmatmul.bf16.gmra.mxu0 %v1910
        %v1921 = vpop.f32.mrf.mxu0
        %v1922 = vadd.f32 %v964, %v1921
        %v1923 = vpop.f32.mrf.mxu0
        %1924 = vdwg.mxu0
        %vm1925 = vcmp.ge.f32.partialorder %v1922, 0.0
        %v1926 = vmul.f32 %v1922, 0.01
        %v1927 = vsel %vm1925, %v1922, %v1926
        %v1928 = vpack.c.bf16 %v1927, %v1927
        %v1930 = vsel %vm918, %v1928, 0
        %1932 = vmatpush.bf16.msra.mxu0 0
        %1933 = vmatpush.bf16.msra.mxu0 0
        %1934 = vmatpush.bf16.msra.mxu0 0
        %1935 = vmatpush.bf16.msra.mxu0 0
        %1936 = vmatpush.bf16.msra.mxu0 0
        %1937 = vmatpush.bf16.msra.mxu0 0
        %1938 = vmatpush.bf16.msra.mxu0 0
        %1939 = vmatpush.bf16.msra.mxu0 %v1006
        %1940 = vmatmul.bf16.gmra.mxu0 %v1930
        %v1941 = vpop.f32.mrf.mxu0
        %v1942 = vadd.f32 %v1000, %v1941
        %v1943 = vpop.f32.mrf.mxu0
        %1944 = vdwg.mxu0
        %vm1945 = vcmp.ge.f32.partialorder %v1942, 0.0
        %v1946 = vmul.f32 %v1942, 0.01
        %v1947 = vsel %vm1945, %v1942, %v1946
        %v1948 = vpack.c.bf16 %v1947, %v1947
        %v1950 = vsel %vm942, %v1948, 0
        %1952 = vmatpush.bf16.msra.mxu0 0
        %1953 = vmatpush.bf16.msra.mxu0 0
        %1954 = vmatpush.bf16.msra.mxu0 0
        %1955 = vmatpush.bf16.msra.mxu0 0
        %1956 = vmatpush.bf16.msra.mxu0 0
        %1957 = vmatpush.bf16.msra.mxu0 0
        %1958 = vmatpush.bf16.msra.mxu0 0
        %1959 = vmatpush.bf16.msra.mxu0 %v1035
        %1960 = vmatmul.bf16.gmra.mxu0 %v1950
        %v1961 = vpop.f32.mrf.mxu0
        %v1962 = vadd.f32 %v1029, %v1961
        %v1963 = vpop.f32.mrf.mxu0
        %1964 = vdwg.mxu0
        %vm1965 = vcmp.ge.f32.partialorder %v1962, 0.0
        %v1966 = vmul.f32 %v1962, 0.01
        %v1967 = vsel %vm1965, %v1962, %v1966
        %v1968 = vpack.c.bf16 %v1967, %v1967
        %v1970 = vsel %vm832, %v1968, 0
        %1972 = vmatpush.bf16.msra.mxu0 0
        %1973 = vmatpush.bf16.msra.mxu0 0
        %1974 = vmatpush.bf16.msra.mxu0 0
        %1975 = vmatpush.bf16.msra.mxu0 0
        %1976 = vmatpush.bf16.msra.mxu0 0
        %1977 = vmatpush.bf16.msra.mxu0 0
        %1978 = vmatpush.bf16.msra.mxu0 0
        %1979 = vmatpush.bf16.msra.mxu0 %v1061
        %1980 = vmatmul.bf16.gmra.mxu0 %v1970
        %v1981 = vpop.f32.mrf.mxu0
        %v1982 = vadd.f32 %v1055, %v1981
        %v1983 = vpop.f32.mrf.mxu0
        %1984 = vdwg.mxu0
        %s1985 = scalar_lea.vmem %s767, 40 [#allocation5]
        %1986 = vst.msk [vmem:[%s1985] sm:$0xff] %vm832, %v1903
        %s1987 = sadd.s32 %s1077, 5
        %p1988 = scmp.lt.s32.totalorder %s1987, 8
        %s1989 = scalar_select %p1988, 1, 0
        %v1990 = vstv %s1989
        %vm1991 = vcmp.eq.s32.totalorder %v1990, 1
        %v1992 = vsel %vm1991, %v1903, %v1810
        %v1993 = vsel %vm1991, %v1982, %v1811
        %s1994 = scalar_lea.vmem %s708, 24 [#allocation4]
        %v1995 = vld [vmem:[%s1994] sm:$0xf]
        %v1996 = vpack.c.bf16 %v1992, %v1992
        %v1998 = vsel %vm832, %v1996, 0
        %2000 = vmatpush.bf16.msra.mxu0 0
        %2001 = vmatpush.bf16.msra.mxu0 0
        %2002 = vmatpush.bf16.msra.mxu0 0
        %2003 = vmatpush.bf16.msra.mxu0 0
        %2004 = vmatpush.bf16.msra.mxu0 0
        %2005 = vmatpush.bf16.msra.mxu0 0
        %2006 = vmatpush.bf16.msra.mxu0 0
        %2007 = vmatpush.bf16.msra.mxu0 %v841
        %2008 = vmatmul.bf16.gmra.mxu0 %v1998
        %v2009 = vpop.f32.mrf.mxu0
        %v2010 = vadd.f32 0.0, %v2009
        %v2011 = vpop.f32.mrf.mxu0
        %2012 = vdwg.mxu0
        %v2014 = vsel %vm856, %v1995, 0
        %2016 = vmatpush.bf16.msra.mxu0 0
        %2017 = vmatpush.bf16.msra.mxu0 0
        %2018 = vmatpush.bf16.msra.mxu0 0
        %2019 = vmatpush.bf16.msra.mxu0 0
        %2020 = vmatpush.bf16.msra.mxu0 0
        %2021 = vmatpush.bf16.msra.mxu0 0
        %2022 = vmatpush.bf16.msra.mxu0 0
        %2023 = vmatpush.bf16.msra.mxu0 %v861
        %2024 = vmatmul.bf16.gmra.mxu0 %v2014
        %v2025 = vpop.f32.mrf.mxu0
        %v2026 = vadd.f32 %v2010, %v2025
        %v2027 = vpop.f32.mrf.mxu0
        %2028 = vdwg.mxu0
        %v2029 = vpack.c.bf16 %v1993, %v1993
        %v2031 = vsel %vm877, %v2029, 0
        %2033 = vmatpush.bf16.msra.mxu0 0
        %2034 = vmatpush.bf16.msra.mxu0 0
        %2035 = vmatpush.bf16.msra.mxu0 0
        %2036 = vmatpush.bf16.msra.mxu0 0
        %2037 = vmatpush.bf16.msra.mxu0 0
        %2038 = vmatpush.bf16.msra.mxu0 0
        %2039 = vmatpush.bf16.msra.mxu0 0
        %2040 = vmatpush.bf16.msra.mxu0 %v885
        %2041 = vmatmul.bf16.gmra.mxu0 %v2031
        %v2042 = vpop.f32.mrf.mxu0
        %v2043 = vadd.f32 0.0, %v2042
        %v2044 = vpop.f32.mrf.mxu0
        %2045 = vdwg.mxu0
        %v2046 = vadd.f32 %v2026, %v2043
        %v2047 = vadd.f32 %v2046, %v902
        %vm2048 = vcmp.ge.f32.partialorder %v2047, 0.0
        %v2049 = vmul.f32 %v2047, 0.01
        %v2050 = vsel %vm2048, %v2047, %v2049
        %v2051 = vpack.c.bf16 %v2050, %v2050
        %v2053 = vsel %vm918, %v2051, 0
        %2055 = vmatpush.bf16.msra.mxu0 0
        %2056 = vmatpush.bf16.msra.mxu0 0
        %2057 = vmatpush.bf16.msra.mxu0 0
        %2058 = vmatpush.bf16.msra.mxu0 0
        %2059 = vmatpush.bf16.msra.mxu0 0
        %2060 = vmatpush.bf16.msra.mxu0 0
        %2061 = vmatpush.bf16.msra.mxu0 0
        %2062 = vmatpush.bf16.msra.mxu0 %v916
        %2063 = vmatmul.bf16.gmra.mxu0 %v2053
        %v2064 = vpop.f32.mrf.mxu0
        %v2065 = vadd.f32 %v910, %v2064
        %v2066 = vpop.f32.mrf.mxu0
        %2067 = vdwg.mxu0
        %vm2068 = vcmp.ge.f32.partialorder %v2065, 0.0
        %v2069 = vmul.f32 %v2065, 0.01
        %v2070 = vsel %vm2068, %v2065, %v2069
        %v2071 = vpack.c.bf16 %v2070, %v2070
        %v2073 = vsel %vm942, %v2071, 0
        %2075 = vmatpush.bf16.msra.mxu0 0
        %2076 = vmatpush.bf16.msra.mxu0 0
        %2077 = vmatpush.bf16.msra.mxu0 0
        %2078 = vmatpush.bf16.msra.mxu0 0
        %2079 = vmatpush.bf16.msra.mxu0 0
        %2080 = vmatpush.bf16.msra.mxu0 0
        %2081 = vmatpush.bf16.msra.mxu0 0
        %2082 = vmatpush.bf16.msra.mxu0 %v948
        %2083 = vmatmul.bf16.gmra.mxu0 %v2073
        %v2084 = vpop.f32.mrf.mxu0
        %v2085 = vadd.f32 %v940, %v2084
        %v2086 = vpop.f32.mrf.mxu0
        %2087 = vdwg.mxu0
        %2089 = vrot.lane.b32.xlu0 %v2051, 112
        %v2090 = vpop.permute.xlu0 %2089
        %v2092 = vsel %vm974, %v2090, 0
        %2094 = vmatpush.bf16.msra.mxu0 0
        %2095 = vmatpush.bf16.msra.mxu0 0
        %2096 = vmatpush.bf16.msra.mxu0 0
        %2097 = vmatpush.bf16.msra.mxu0 0
        %2098 = vmatpush.bf16.msra.mxu0 0
        %2099 = vmatpush.bf16.msra.mxu0 0
        %2100 = vmatpush.bf16.msra.mxu0 0
        %2101 = vmatpush.bf16.msra.mxu0 %v980
        %2102 = vmatmul.bf16.gmra.mxu0 %v2092
        %v2103 = vpop.f32.mrf.mxu0
        %v2104 = vadd.f32 %v964, %v2103
        %v2105 = vpop.f32.mrf.mxu0
        %2106 = vdwg.mxu0
        %vm2107 = vcmp.ge.f32.partialorder %v2104, 0.0
        %v2108 = vmul.f32 %v2104, 0.01
        %v2109 = vsel %vm2107, %v2104, %v2108
        %v2110 = vpack.c.bf16 %v2109, %v2109
        %v2112 = vsel %vm918, %v2110, 0
        %2114 = vmatpush.bf16.msra.mxu0 0
        %2115 = vmatpush.bf16.msra.mxu0 0
        %2116 = vmatpush.bf16.msra.mxu0 0
        %2117 = vmatpush.bf16.msra.mxu0 0
        %2118 = vmatpush.bf16.msra.mxu0 0
        %2119 = vmatpush.bf16.msra.mxu0 0
        %2120 = vmatpush.bf16.msra.mxu0 0
        %2121 = vmatpush.bf16.msra.mxu0 %v1006
        %2122 = vmatmul.bf16.gmra.mxu0 %v2112
        %v2123 = vpop.f32.mrf.mxu0
        %v2124 = vadd.f32 %v1000, %v2123
        %v2125 = vpop.f32.mrf.mxu0
        %2126 = vdwg.mxu0
        %vm2127 = vcmp.ge.f32.partialorder %v2124, 0.0
        %v2128 = vmul.f32 %v2124, 0.01
        %v2129 = vsel %vm2127, %v2124, %v2128
        %v2130 = vpack.c.bf16 %v2129, %v2129
        %v2132 = vsel %vm942, %v2130, 0
        %2134 = vmatpush.bf16.msra.mxu0 0
        %2135 = vmatpush.bf16.msra.mxu0 0
        %2136 = vmatpush.bf16.msra.mxu0 0
        %2137 = vmatpush.bf16.msra.mxu0 0
        %2138 = vmatpush.bf16.msra.mxu0 0
        %2139 = vmatpush.bf16.msra.mxu0 0
        %2140 = vmatpush.bf16.msra.mxu0 0
        %2141 = vmatpush.bf16.msra.mxu0 %v1035
        %2142 = vmatmul.bf16.gmra.mxu0 %v2132
        %v2143 = vpop.f32.mrf.mxu0
        %v2144 = vadd.f32 %v1029, %v2143
        %v2145 = vpop.f32.mrf.mxu0
        %2146 = vdwg.mxu0
        %vm2147 = vcmp.ge.f32.partialorder %v2144, 0.0
        %v2148 = vmul.f32 %v2144, 0.01
        %v2149 = vsel %vm2147, %v2144, %v2148
        %v2150 = vpack.c.bf16 %v2149, %v2149
        %v2152 = vsel %vm832, %v2150, 0
        %2154 = vmatpush.bf16.msra.mxu0 0
        %2155 = vmatpush.bf16.msra.mxu0 0
        %2156 = vmatpush.bf16.msra.mxu0 0
        %2157 = vmatpush.bf16.msra.mxu0 0
        %2158 = vmatpush.bf16.msra.mxu0 0
        %2159 = vmatpush.bf16.msra.mxu0 0
        %2160 = vmatpush.bf16.msra.mxu0 0
        %2161 = vmatpush.bf16.msra.mxu0 %v1061
        %2162 = vmatmul.bf16.gmra.mxu0 %v2152
        %v2163 = vpop.f32.mrf.mxu0
        %v2164 = vadd.f32 %v1055, %v2163
        %v2165 = vpop.f32.mrf.mxu0
        %2166 = vdwg.mxu0
        %s2167 = scalar_lea.vmem %s767, 48 [#allocation5]
        %2168 = vst.msk [vmem:[%s2167] sm:$0xff] %vm832, %v2085
        %s2169 = sadd.s32 %s1077, 6
        %p2170 = scmp.lt.s32.totalorder %s2169, 8
        %s2171 = scalar_select %p2170, 1, 0
        %v2172 = vstv %s2171
        %vm2173 = vcmp.eq.s32.totalorder %v2172, 1
        %v2174 = vsel %vm2173, %v2085, %v1992
        %v2175 = vsel %vm2173, %v2164, %v1993
        %s2176 = scalar_lea.vmem %s708, 28 [#allocation4]
        %v2177 = vld [vmem:[%s2176] sm:$0xf]
        %v2178 = vpack.c.bf16 %v2174, %v2174
        %v2180 = vsel %vm832, %v2178, 0
        %2182 = vmatpush.bf16.msra.mxu0 0
        %2183 = vmatpush.bf16.msra.mxu0 0
        %2184 = vmatpush.bf16.msra.mxu0 0
        %2185 = vmatpush.bf16.msra.mxu0 0
        %2186 = vmatpush.bf16.msra.mxu0 0
        %2187 = vmatpush.bf16.msra.mxu0 0
        %2188 = vmatpush.bf16.msra.mxu0 0
        %2189 = vmatpush.bf16.msra.mxu0 %v841
        %2190 = vmatmul.bf16.gmra.mxu0 %v2180
        %v2191 = vpop.f32.mrf.mxu0
        %v2192 = vadd.f32 0.0, %v2191
        %v2193 = vpop.f32.mrf.mxu0
        %2194 = vdwg.mxu0
        %v2196 = vsel %vm856, %v2177, 0
        %2198 = vmatpush.bf16.msra.mxu0 0
        %2199 = vmatpush.bf16.msra.mxu0 0
        %2200 = vmatpush.bf16.msra.mxu0 0
        %2201 = vmatpush.bf16.msra.mxu0 0
        %2202 = vmatpush.bf16.msra.mxu0 0
        %2203 = vmatpush.bf16.msra.mxu0 0
        %2204 = vmatpush.bf16.msra.mxu0 0
        %2205 = vmatpush.bf16.msra.mxu0 %v861
        %2206 = vmatmul.bf16.gmra.mxu0 %v2196
        %v2207 = vpop.f32.mrf.mxu0
        %v2208 = vadd.f32 %v2192, %v2207
        %v2209 = vpop.f32.mrf.mxu0
        %2210 = vdwg.mxu0
        %v2211 = vpack.c.bf16 %v2175, %v2175
        %v2213 = vsel %vm877, %v2211, 0
        %2215 = vmatpush.bf16.msra.mxu0 0
        %2216 = vmatpush.bf16.msra.mxu0 0
        %2217 = vmatpush.bf16.msra.mxu0 0
        %2218 = vmatpush.bf16.msra.mxu0 0
        %2219 = vmatpush.bf16.msra.mxu0 0
        %2220 = vmatpush.bf16.msra.mxu0 0
        %2221 = vmatpush.bf16.msra.mxu0 0
        %2222 = vmatpush.bf16.msra.mxu0 %v885
        %2223 = vmatmul.bf16.gmra.mxu0 %v2213
        %v2224 = vpop.f32.mrf.mxu0
        %v2225 = vadd.f32 0.0, %v2224
        %v2226 = vpop.f32.mrf.mxu0
        %2227 = vdwg.mxu0
        %v2228 = vadd.f32 %v2208, %v2225
        %v2229 = vadd.f32 %v2228, %v902
        %vm2230 = vcmp.ge.f32.partialorder %v2229, 0.0
        %v2231 = vmul.f32 %v2229, 0.01
        %v2232 = vsel %vm2230, %v2229, %v2231
        %v2233 = vpack.c.bf16 %v2232, %v2232
        %v2235 = vsel %vm918, %v2233, 0
        %2237 = vmatpush.bf16.msra.mxu0 0
        %2238 = vmatpush.bf16.msra.mxu0 0
        %2239 = vmatpush.bf16.msra.mxu0 0
        %2240 = vmatpush.bf16.msra.mxu0 0
        %2241 = vmatpush.bf16.msra.mxu0 0
        %2242 = vmatpush.bf16.msra.mxu0 0
        %2243 = vmatpush.bf16.msra.mxu0 0
        %2244 = vmatpush.bf16.msra.mxu0 %v916
        %2245 = vmatmul.bf16.gmra.mxu0 %v2235
        %v2246 = vpop.f32.mrf.mxu0
        %v2247 = vadd.f32 %v910, %v2246
        %v2248 = vpop.f32.mrf.mxu0
        %2249 = vdwg.mxu0
        %vm2250 = vcmp.ge.f32.partialorder %v2247, 0.0
        %v2251 = vmul.f32 %v2247, 0.01
        %v2252 = vsel %vm2250, %v2247, %v2251
        %v2253 = vpack.c.bf16 %v2252, %v2252
        %v2255 = vsel %vm942, %v2253, 0
        %2257 = vmatpush.bf16.msra.mxu0 0
        %2258 = vmatpush.bf16.msra.mxu0 0
        %2259 = vmatpush.bf16.msra.mxu0 0
        %2260 = vmatpush.bf16.msra.mxu0 0
        %2261 = vmatpush.bf16.msra.mxu0 0
        %2262 = vmatpush.bf16.msra.mxu0 0
        %2263 = vmatpush.bf16.msra.mxu0 0
        %2264 = vmatpush.bf16.msra.mxu0 %v948
        %2265 = vmatmul.bf16.gmra.mxu0 %v2255
        %v2266 = vpop.f32.mrf.mxu0
        %v2267 = vadd.f32 %v940, %v2266
        %v2268 = vpop.f32.mrf.mxu0
        %2269 = vdwg.mxu0
        %2271 = vrot.lane.b32.xlu0 %v2233, 112
        %v2272 = vpop.permute.xlu0 %2271
        %v2274 = vsel %vm974, %v2272, 0
        %2276 = vmatpush.bf16.msra.mxu0 0
        %2277 = vmatpush.bf16.msra.mxu0 0
        %2278 = vmatpush.bf16.msra.mxu0 0
        %2279 = vmatpush.bf16.msra.mxu0 0
        %2280 = vmatpush.bf16.msra.mxu0 0
        %2281 = vmatpush.bf16.msra.mxu0 0
        %2282 = vmatpush.bf16.msra.mxu0 0
        %2283 = vmatpush.bf16.msra.mxu0 %v980
        %2284 = vmatmul.bf16.gmra.mxu0 %v2274
        %v2285 = vpop.f32.mrf.mxu0
        %v2286 = vadd.f32 %v964, %v2285
        %v2287 = vpop.f32.mrf.mxu0
        %2288 = vdwg.mxu0
        %vm2289 = vcmp.ge.f32.partialorder %v2286, 0.0
        %v2290 = vmul.f32 %v2286, 0.01
        %v2291 = vsel %vm2289, %v2286, %v2290
        %v2292 = vpack.c.bf16 %v2291, %v2291
        %v2294 = vsel %vm918, %v2292, 0
        %2296 = vmatpush.bf16.msra.mxu0 0
        %2297 = vmatpush.bf16.msra.mxu0 0
        %2298 = vmatpush.bf16.msra.mxu0 0
        %2299 = vmatpush.bf16.msra.mxu0 0
        %2300 = vmatpush.bf16.msra.mxu0 0
        %2301 = vmatpush.bf16.msra.mxu0 0
        %2302 = vmatpush.bf16.msra.mxu0 0
        %2303 = vmatpush.bf16.msra.mxu0 %v1006
        %2304 = vmatmul.bf16.gmra.mxu0 %v2294
        %v2305 = vpop.f32.mrf.mxu0
        %v2306 = vadd.f32 %v1000, %v2305
        %v2307 = vpop.f32.mrf.mxu0
        %2308 = vdwg.mxu0
        %vm2309 = vcmp.ge.f32.partialorder %v2306, 0.0
        %v2310 = vmul.f32 %v2306, 0.01
        %v2311 = vsel %vm2309, %v2306, %v2310
        %v2312 = vpack.c.bf16 %v2311, %v2311
        %v2314 = vsel %vm942, %v2312, 0
        %2316 = vmatpush.bf16.msra.mxu0 0
        %2317 = vmatpush.bf16.msra.mxu0 0
        %2318 = vmatpush.bf16.msra.mxu0 0
        %2319 = vmatpush.bf16.msra.mxu0 0
        %2320 = vmatpush.bf16.msra.mxu0 0
        %2321 = vmatpush.bf16.msra.mxu0 0
        %2322 = vmatpush.bf16.msra.mxu0 0
        %2323 = vmatpush.bf16.msra.mxu0 %v1035
        %2324 = vmatmul.bf16.gmra.mxu0 %v2314
        %v2325 = vpop.f32.mrf.mxu0
        %v2326 = vadd.f32 %v1029, %v2325
        %v2327 = vpop.f32.mrf.mxu0
        %2328 = vdwg.mxu0
        %vm2329 = vcmp.ge.f32.partialorder %v2326, 0.0
        %v2330 = vmul.f32 %v2326, 0.01
        %v2331 = vsel %vm2329, %v2326, %v2330
        %v2332 = vpack.c.bf16 %v2331, %v2331
        %v2334 = vsel %vm832, %v2332, 0
        %2336 = vmatpush.bf16.msra.mxu0 0
        %2337 = vmatpush.bf16.msra.mxu0 0
        %2338 = vmatpush.bf16.msra.mxu0 0
        %2339 = vmatpush.bf16.msra.mxu0 0
        %2340 = vmatpush.bf16.msra.mxu0 0
        %2341 = vmatpush.bf16.msra.mxu0 0
        %2342 = vmatpush.bf16.msra.mxu0 0
        %2343 = vmatpush.bf16.msra.mxu0 %v1061
        %2344 = vmatmul.bf16.gmra.mxu0 %v2334
        %v2345 = vpop.f32.mrf.mxu0
        %v2346 = vadd.f32 %v1055, %v2345
        %v2347 = vpop.f32.mrf.mxu0
        %2348 = vdwg.mxu0
        %s2349 = scalar_lea.vmem %s767, 56 [#allocation5]
        %2350 = vst.msk [vmem:[%s2349] sm:$0xff] %vm832, %v2267
        %s2351 = sadd.s32 %s1077, 7
        %p2352 = scmp.lt.s32.totalorder %s2351, 8
        %s2353 = scalar_select %p2352, 1, 0
        %v2354 = vstv %s2353
        %vm2355 = vcmp.eq.s32.totalorder %v2354, 1
        %v2356 = vsel %vm2355, %v2267, %v2174
        %v2357 = vsel %vm2355, %v2346, %v2175
        %2358 = vst.msk [vmem:[#allocation2] sm:$0xff] %vm832, %v2356
        %2359 = vst.msk [vmem:[#allocation3] sm:$0xff] %vm877, %v2357
        // Predicated region
        $region142: #{rnn_forward_sequence.1} parent=132 // pred_check
          %p2360 = pneg %p799
        $region143: #{rnn_forward_sequence.1} parent=132 // pred_check_branch
          %2362 = sbr.rel (%p2360) target = $region145
        $region144: #{rnn_forward_sequence.1} parent=132 // pred_region
          %2363 = vst.msk [vmem:[%s793] sm:$0xff] %vm832, %v2356
          %2364 = vst.msk [vmem:[%s797] sm:$0xff] %vm877, %v2357
        $region145: #{rnn_forward_sequence.1} parent=132 // pred_fallthru
          _
        %s2365 = sand.u32 %s471, 1
        %s2366 = sand.u32 %s471, 1
        %s2367 = smul.addr %s2366, 64
        %s2368 = scalar_lea.vmem [#allocation5], %s2367
        %p2369 = scmp.lt.s32.totalorder %s37, 1
        %s2370 = scalar_select %p2369, %s37, 1
        %s2371 = smul.addr %s2370, 8
        %s2372 = scalar_lea.vmem %s20, %s2371
        %p2373 = scmp.lt.s32.totalorder %s37, 1
        %s2374 = scalar_select %p2373, %s37, 1
        %s2375 = smul.addr %s2374, 8
        %s2376 = scalar_lea.vmem %s21, %s2375
        // Predicated region
        $region146: #{rnn_forward_sequence.1} parent=132 // pred_check
          %p2377 = pneg %p481
        $region147: #{rnn_forward_sequence.1} parent=132 // pred_check_branch
          %2379 = sbr.rel (%p2377) target = $region149
        $region148: #{rnn_forward_sequence.1} parent=132 // pred_region
          %s2380 = smul.u32 8, %s38
          %s2381 = smul.addr %s2380, 2
          %s2382 = sadd.s32 %s37, %s2381
          %s2383 = smul.addr %s2382, 8
          %s2384 = scalar_lea.vmem %s19, %s2383
          // Predicated region
          $region150: #{rnn_forward_sequence.1} parent=148 // pred_check
            _
          $region151: #{rnn_forward_sequence.1} parent=148 // pred_check_branch
            %2386 = sbr.rel (0) target = $region153
          $region152: #{rnn_forward_sequence.1} parent=148 // pred_region
            // Predicated region
            $region154: #{rnn_forward_sequence.1} parent=152 // pred_check
              _
            $region155: #{rnn_forward_sequence.1} parent=152 // pred_check_branch
              %2388 = sbr.rel (0) target = $region157
            $region156: #{rnn_forward_sequence.1} parent=152 // pred_region
              // Predicated region
              $region169: #{rnn_forward_sequence.1} parent=156 // pred_check
                _
              $region170: #{rnn_forward_sequence.1} parent=156 // pred_check_branch
                %2418 = sbr.rel (0) target = $region172
              $region171: #{rnn_forward_sequence.1} parent=156 // pred_region
                loop: start=0, step=1, limit=1
                $region173: #{rnn_forward_sequence.1} parent=171 // loop_pre_header
                  _
                $region174: #{rnn_forward_sequence.1} parent=171 // loop_header
                  %s2420 = sphi 0, %s2424
                  %p2421 = scmp.ge.s32.totalorder %s2420, 1
                  %s2425 = sphi %s2368, %s2368
                  %s2426 = sphi %s2384, %s2384
                $region175: #{rnn_forward_sequence.1} parent=171 // loop_header_branch
                  %2423 = sbr.rel (%p2421) target = $region179
                $region176: #{rnn_forward_sequence.1} parent=171 // loop_body
                  %v2427 = vld [vmem:[%s2425] sm:$0xff]
                  %2428 = vst [vmem:[%s2426] sm:$0xff] %v2427
                  %v2429 = vld [vmem:[%s2425 + $0x8] sm:$0xff]
                  %2430 = vst [vmem:[%s2426 + $0x10] sm:$0xff] %v2429
                  %v2431 = vld [vmem:[%s2425 + $0x10] sm:$0xff]
                  %2432 = vst [vmem:[%s2426 + $0x20] sm:$0xff] %v2431
                  %v2433 = vld [vmem:[%s2425 + $0x18] sm:$0xff]
                  %2434 = vst [vmem:[%s2426 + $0x30] sm:$0xff] %v2433
                  %v2435 = vld [vmem:[%s2425 + $0x20] sm:$0xff]
                  %2436 = vst [vmem:[%s2426 + $0x40] sm:$0xff] %v2435
                  %v2437 = vld [vmem:[%s2425 + $0x28] sm:$0xff]
                  %2438 = vst [vmem:[%s2426 + $0x50] sm:$0xff] %v2437
                  %v2439 = vld [vmem:[%s2425 + $0x30] sm:$0xff]
                  %2440 = vst [vmem:[%s2426 + $0x60] sm:$0xff] %v2439
                  %v2441 = vld [vmem:[%s2425 + $0x38] sm:$0xff]
                  %2442 = vst [vmem:[%s2426 + $0x70] sm:$0xff] %v2441
                $region177: #{rnn_forward_sequence.1} parent=171 // loop_footer
                  %s2424 = sadd.s32 1, %s2420
                $region178: #{rnn_forward_sequence.1} parent=171 // loop_footer_branch
                  %2419 = sbr.rel target = $region174
                $region179: #{rnn_forward_sequence.1} parent=171 // loop_exit
                  _
              $region172: #{rnn_forward_sequence.1} parent=156 // pred_fallthru
                _
              // Predicated region
              $region180: #{rnn_forward_sequence.1} parent=156 // pred_check
                _
              $region181: #{rnn_forward_sequence.1} parent=156 // pred_check_branch
                %2444 = sbr.rel target = $region183
              $region182: #{rnn_forward_sequence.1} parent=156 // pred_region
                _
              $region183: #{rnn_forward_sequence.1} parent=156 // pred_fallthru
                _
            $region157: #{rnn_forward_sequence.1} parent=152 // pred_fallthru
              _
            // Predicated region
            $region158: #{rnn_forward_sequence.1} parent=152 // pred_check
              _
            $region159: #{rnn_forward_sequence.1} parent=152 // pred_check_branch
              %2390 = sbr.rel target = $region161
            $region160: #{rnn_forward_sequence.1} parent=152 // pred_region
              %s2392 = ssub.s32 256, 1
              loop: start=0, step=1, limit=1
              $region162: #{rnn_forward_sequence.1} parent=160 // loop_pre_header
                _
              $region163: #{rnn_forward_sequence.1} parent=160 // loop_header
                %s2394 = sphi 0, %s2398
                %p2395 = scmp.ge.s32.totalorder %s2394, 1
                %s2399 = sphi %s2368, %s2368
                %s2400 = sphi %s2384, %s2384
              $region164: #{rnn_forward_sequence.1} parent=160 // loop_header_branch
                %2397 = sbr.rel (%p2395) target = $region168
              $region165: #{rnn_forward_sequence.1} parent=160 // loop_body
                %v2401 = vld [vmem:[%s2399] sm:%s2392]
                %2402 = vst [vmem:[%s2400] sm:%s2392] %v2401
                %v2403 = vld [vmem:[%s2399 + $0x8] sm:%s2392]
                %2404 = vst [vmem:[%s2400 + $0x10] sm:%s2392] %v2403
                %v2405 = vld [vmem:[%s2399 + $0x10] sm:%s2392]
                %2406 = vst [vmem:[%s2400 + $0x20] sm:%s2392] %v2405
                %v2407 = vld [vmem:[%s2399 + $0x18] sm:%s2392]
                %2408 = vst [vmem:[%s2400 + $0x30] sm:%s2392] %v2407
                %v2409 = vld [vmem:[%s2399 + $0x20] sm:%s2392]
                %2410 = vst [vmem:[%s2400 + $0x40] sm:%s2392] %v2409
                %v2411 = vld [vmem:[%s2399 + $0x28] sm:%s2392]
                %2412 = vst [vmem:[%s2400 + $0x50] sm:%s2392] %v2411
                %v2413 = vld [vmem:[%s2399 + $0x30] sm:%s2392]
                %2414 = vst [vmem:[%s2400 + $0x60] sm:%s2392] %v2413
                %v2415 = vld [vmem:[%s2399 + $0x38] sm:%s2392]
                %2416 = vst [vmem:[%s2400 + $0x70] sm:%s2392] %v2415
              $region166: #{rnn_forward_sequence.1} parent=160 // loop_footer
                %s2398 = sadd.s32 1, %s2394
              $region167: #{rnn_forward_sequence.1} parent=160 // loop_footer_branch
                %2393 = sbr.rel target = $region163
              $region168: #{rnn_forward_sequence.1} parent=160 // loop_exit
                _
            $region161: #{rnn_forward_sequence.1} parent=152 // pred_fallthru
              _
          $region153: #{rnn_forward_sequence.1} parent=148 // pred_fallthru
            _
          %2445 = vnop
        $region149: #{rnn_forward_sequence.1} parent=132 // pred_fallthru
          _
        // Predicated region
        $region184: #{rnn_forward_sequence.1} parent=132 // pred_check
          %p2446 = pneg %p507
        $region185: #{rnn_forward_sequence.1} parent=132 // pred_check_branch
          %2448 = sbr.rel (%p2446) target = $region187
        $region186: #{rnn_forward_sequence.1} parent=132 // pred_region
          _
        $region187: #{rnn_forward_sequence.1} parent=132 // pred_fallthru
          _
        // Predicated region
        $region188: #{rnn_forward_sequence.1} parent=132 // pred_check
          %p2449 = pneg %p533
        $region189: #{rnn_forward_sequence.1} parent=132 // pred_check_branch
          %2451 = sbr.rel (%p2449) target = $region191
        $region190: #{rnn_forward_sequence.1} parent=132 // pred_region
          _
        $region191: #{rnn_forward_sequence.1} parent=132 // pred_fallthru
          _
      $region133: #{rnn_forward_sequence.1} parent=5 // pred_fallthru
        _
      %p2452 = scmp.le.s32.totalorder 2, %s28
      // Predicated region
      $region192: #{rnn_forward_sequence.1} parent=5 // pred_check
        %p2453 = pneg %p2452
      $region193: #{rnn_forward_sequence.1} parent=5 // pred_check_branch
        %2455 = sbr.rel (%p2453) target = $region195
      $region194: #{rnn_forward_sequence.1} parent=5 // pred_region
        %s2456 = ssub.s32 %s28, 2
        // Predicated region
        $region196: #{rnn_forward_sequence.1} parent=194 // pred_check
          %p2457 = pneg %p487
        $region197: #{rnn_forward_sequence.1} parent=194 // pred_check_branch
          %2459 = sbr.rel (%p2457) target = $region199
        $region198: #{rnn_forward_sequence.1} parent=194 // pred_region
          %s2460 = sand.u32 %s472, 1
          %s2461 = sand.u32 %s472, 1
          %s2462 = smul.addr %s2461, 64
          %s2463 = scalar_lea.vmem [#allocation5], %s2462
        $region199: #{rnn_forward_sequence.1} parent=194 // pred_fallthru
          _
        // Predicated region
        $region200: #{rnn_forward_sequence.1} parent=194 // pred_check
          %p2464 = pneg %p513
        $region201: #{rnn_forward_sequence.1} parent=194 // pred_check_branch
          %2466 = sbr.rel (%p2464) target = $region203
        $region202: #{rnn_forward_sequence.1} parent=194 // pred_region
          %p2467 = scmp.lt.s32.totalorder %s39, 1
          %s2468 = scalar_select %p2467, %s39, 1
          %s2469 = smul.addr %s2468, 8
          %s2470 = scalar_lea.vmem %s20, %s2469
        $region203: #{rnn_forward_sequence.1} parent=194 // pred_fallthru
          _
        // Predicated region
        $region204: #{rnn_forward_sequence.1} parent=194 // pred_check
          %p2471 = pneg %p539
        $region205: #{rnn_forward_sequence.1} parent=194 // pred_check_branch
          %2473 = sbr.rel (%p2471) target = $region207
        $region206: #{rnn_forward_sequence.1} parent=194 // pred_region
          %p2474 = scmp.lt.s32.totalorder %s39, 1
          %s2475 = scalar_select %p2474, %s39, 1
          %s2476 = smul.addr %s2475, 8
          %s2477 = scalar_lea.vmem %s21, %s2476
        $region207: #{rnn_forward_sequence.1} parent=194 // pred_fallthru
          _
      $region195: #{rnn_forward_sequence.1} parent=5 // pred_fallthru
        _
    $region6: #{rnn_forward_sequence.1} parent=1 // loop_footer
      %s32 = sadd.s32 1, %s28
    $region7: #{rnn_forward_sequence.1} parent=1 // loop_footer_branch
      %27 = sbr.rel target = $region3
    $region8: #{rnn_forward_sequence.1} parent=1 // loop_exit
      _

</llo_original>
